<compile_context>
chip_gen: v6e
topology: v6e:2x2x1
jax: 0.10.0
libtpu: 0.0.40
codegen_flags: <defaults>
</compile_context>

<pallas_src>
import math
import jax
import jax.numpy as jnp
from jax import lax
from jax.experimental import pallas as pl
from jax.experimental.pallas import tpu as pltpu

# ---- mini-BERT config (stands in for bert-base-uncased) ----
VOCAB = 100
HIDDEN = 32
N_LAYERS = 2
N_HEADS = 2
HEAD_DIM = HIDDEN // N_HEADS
INTERMEDIATE = 64
MAX_POS = 16
N_CLASSES = 4
LN_EPS = 1e-12


def _gelu(x):
    # tanh approximation of GELU (lowers cleanly on TPU VPU/EUP)
    c = math.sqrt(2.0 / math.pi)
    return 0.5 * x * (1.0 + jnp.tanh(c * (x + 0.044715 * x * x * x)))


# -------------------- parameter init (stacked per-layer weights) --------------------

def init_params(key):
    std = 0.02
    ks = iter(jax.random.split(key, 16))

    def nrm(shape):
        return std * jax.random.normal(next(ks), shape, dtype=jnp.float32)

    L, H, I = N_LAYERS, HIDDEN, INTERMEDIATE
    params = {
        "word_emb": nrm((VOCAB, H)),
        "pos_emb": nrm((MAX_POS, H)),
        "type_emb": nrm((2, H)),
        "emb_ln_g": jnp.ones((1, H), jnp.float32),
        "emb_ln_b": jnp.zeros((1, H), jnp.float32),
        # per-layer weights stacked along a leading layer axis (indexed statically in-kernel)
        "wqkv": nrm((L, H, 3 * H)),          # concatenated [Wq | Wk | Wv]
        "bqkv": jnp.zeros((L, 1, 3 * H), jnp.float32),
        "wo": nrm((L, H, H)),
        "bo": jnp.zeros((L, 1, H), jnp.float32),
        "ln1_g": jnp.ones((L, 1, H), jnp.float32),
        "ln1_b": jnp.zeros((L, 1, H), jnp.float32),
        "w1": nrm((L, H, I)),
        "b1": jnp.zeros((L, 1, I), jnp.float32),
        "w2": nrm((L, I, H)),
        "b2": jnp.zeros((L, 1, H), jnp.float32),
        "ln2_g": jnp.ones((L, 1, H), jnp.float32),
        "ln2_b": jnp.zeros((L, 1, H), jnp.float32),
        "pool_w": nrm((H, H)),
        "pool_b": jnp.zeros((1, H), jnp.float32),
        "cls_w": nrm((H, N_CLASSES)),
        "cls_b": jnp.zeros((1, N_CLASSES), jnp.float32),
    }
    return params


# -------------------- fused forward (single pallas_call) --------------------

def emotion_classifier_forward(params, input_ids, attention_mask):
    B, S = input_ids.shape
    BS = B * S
    scale = 1.0 / math.sqrt(HEAD_DIM)

    # Embedding-table gather stays as XLA glue (data-dependent lookup); everything else fuses.
    tok = params["word_emb"][input_ids].reshape(BS, HIDDEN)

    # HF-BERT style extended attention mask: (1 - mask) * -10000, replicated per head in
    # (head-major, batch-minor) order to match the in-kernel head split below.
    bias = (1.0 - attention_mask.astype(jnp.float32)) * -10000.0                 # [B, S]
    attn_bias = jnp.tile(bias[None, :, None, :], (N_HEADS, 1, 1, 1)).reshape(
        N_HEADS * B, 1, S)                                                        # [nH*B, 1, S]

    def kernel(tok_ref, pos_ref, type_ref, bias_ref,
               eg_ref, eb_ref,
               wqkv_ref, bqkv_ref, wo_ref, bo_ref,
               l1g_ref, l1b_ref, w1_ref, b1_ref, w2_ref, b2_ref,
               l2g_ref, l2b_ref,
               pw_ref, pb_ref, cw_ref, cb_ref,
               o_ref):

        def ln(x, g, b):
            # residual-folded LayerNorm: caller passes (x + residual)
            mu = jnp.mean(x, axis=-1, keepdims=True)
            var = jnp.mean((x - mu) * (x - mu), axis=-1, keepdims=True)
            return (x - mu) * lax.rsqrt(var + LN_EPS) * g + b

        def split_heads(x2d, col0):
            # [BS, 3H] (column window col0) -> [nH*B, S, Dh], index = head*B + batch
            parts = []
            for hh in range(N_HEADS):
                for bb in range(B):
                    parts.append(
                        x2d[bb * S:(bb + 1) * S,
                            col0 + hh * HEAD_DIM: col0 + (hh + 1) * HEAD_DIM])
            return jnp.stack(parts, axis=0)

        def merge_heads(x3d):
            # [nH*B, S, Dh] -> [BS, H]  (inverse of split_heads)
            rows = []
            for bb in range(B):
                heads = [x3d[hh * B + bb] for hh in range(N_HEADS)]
                rows.append(jnp.concatenate(heads, axis=-1))     # [S, H]
            return jnp.concatenate(rows, axis=0)                 # [BS, H]

        # ---- embeddings: word + position + token_type(=0), then LayerNorm ----
        pos = jnp.concatenate([pos_ref[...]] * B, axis=0)        # [BS, H]
        h = tok_ref[...] + pos + type_ref[...]                   # [BS, H]
        h = ln(h, eg_ref[...], eb_ref[...])

        mask_bias = bias_ref[...]                                # [nH*B, 1, S]

        # ---- encoder layers (unrolled; weights indexed statically on the layer axis) ----
        for l in range(N_LAYERS):
            qkv = jnp.dot(h, wqkv_ref[l],
                          preferred_element_type=jnp.float32) + bqkv_ref[l]   # [BS, 3H]
            q4 = split_heads(qkv, 0 * HIDDEN)                    # [nH*B, S, Dh]
            k4 = split_heads(qkv, 1 * HIDDEN)
            v4 = split_heads(qkv, 2 * HIDDEN)

            s = jnp.einsum("bqd,bkd->bqk", q4, k4,
                           preferred_element_type=jnp.float32) * scale + mask_bias
            m = jnp.max(s, axis=-1, keepdims=True)
            p = jnp.exp(s - m)
            denom = jnp.sum(p, axis=-1, keepdims=True)
            p = p * pl.reciprocal(denom, approx=True)            # EUP reciprocal
            ctx = jnp.einsum("bqk,bkd->bqd", p, v4,
                             preferred_element_type=jnp.float32)  # [nH*B, S, Dh]

            attn = jnp.dot(merge_heads(ctx), wo_ref[l],
                           preferred_element_type=jnp.float32) + bo_ref[l]
            h = ln(h + attn, l1g_ref[l], l1b_ref[l])

            inter = _gelu(jnp.dot(h, w1_ref[l],
                                  preferred_element_type=jnp.float32) + b1_ref[l])
            ffn = jnp.dot(inter, w2_ref[l],
                          preferred_element_type=jnp.float32) + b2_ref[l]
            h = ln(h + ffn, l2g_ref[l], l2b_ref[l])

        # ---- BERT pooler on the [CLS] token + classifier head ----
        cls_rows = jnp.concatenate([h[bb * S: bb * S + 1, :] for bb in range(B)], axis=0)
        pooled = jnp.tanh(jnp.dot(cls_rows, pw_ref[...],
                                  preferred_element_type=jnp.float32) + pb_ref[...])
        # nn.Dropout(p=0.3) is identity at inference (module eval semantics).
        # TODO(synk): train-mode stochastic dropout would use pltpu.prng_seed + stateful_bernoulli.
        logits = jnp.dot(pooled, cw_ref[...],
                         preferred_element_type=jnp.float32) + cb_ref[...]
        o_ref[...] = logits.astype(o_ref.dtype)

    args = (tok, params["pos_emb"][:S], params["type_emb"][0:1], attn_bias,
            params["emb_ln_g"], params["emb_ln_b"],
            params["wqkv"], params["bqkv"], params["wo"], params["bo"],
            params["ln1_g"], params["ln1_b"], params["w1"], params["b1"],
            params["w2"], params["b2"], params["ln2_g"], params["ln2_b"],
            params["pool_w"], params["pool_b"], params["cls_w"], params["cls_b"])

    def _full_spec(a):
        zeros = (0,) * a.ndim
        return pl.BlockSpec(a.shape, lambda i, _z=zeros: _z)

    return pl.pallas_call(
        kernel,
        out_shape=jax.ShapeDtypeStruct((B, N_CLASSES), jnp.float32),
        grid=(1,),
        in_specs=[_full_spec(a) for a in args],
        out_specs=pl.BlockSpec((B, N_CLASSES), lambda i: (0, 0)),
        compiler_params=pltpu.CompilerParams(dimension_semantics=("arbitrary",)),
    )(*args)


if __name__ == "__main__":
    key = jax.random.PRNGKey(0)
    pkey, ikey = jax.random.split(key)
    params = init_params(pkey)

    B, S = 2, 8
    input_ids = jax.random.randint(ikey, (B, S), 0, VOCAB, dtype=jnp.int32)
    attention_mask = jnp.ones((B, S), dtype=jnp.int32)
    attention_mask = attention_mask.at[1, 6:].set(0)  # exercise the mask bias

    fwd = jax.jit(emotion_classifier_forward)
    logits = fwd(params, input_ids, attention_mask)
    jax.block_until_ready(logits)
    assert logits.shape == (B, N_CLASSES) and logits.dtype == jnp.float32
    assert bool(jnp.all(jnp.isfinite(logits)))
    print("KERNEL_OK")
</pallas_src>

<mosaic_0001>
module attributes {stable_mosaic.version = 11 : i64} {
  func.func @kernel(%arg0: i32, %arg1: memref<16x32xf32, #tpu.memory_space<vmem>>, %arg2: memref<8x32xf32, #tpu.memory_space<vmem>>, %arg3: memref<1x32xf32, #tpu.memory_space<vmem>>, %arg4: memref<4x1x8xf32, #tpu.memory_space<vmem>>, %arg5: memref<1x32xf32, #tpu.memory_space<vmem>>, %arg6: memref<1x32xf32, #tpu.memory_space<vmem>>, %arg7: memref<2x32x96xf32, #tpu.memory_space<vmem>>, %arg8: memref<2x1x96xf32, #tpu.memory_space<vmem>>, %arg9: memref<2x32x32xf32, #tpu.memory_space<vmem>>, %arg10: memref<2x1x32xf32, #tpu.memory_space<vmem>>, %arg11: memref<2x1x32xf32, #tpu.memory_space<vmem>>, %arg12: memref<2x1x32xf32, #tpu.memory_space<vmem>>, %arg13: memref<2x32x64xf32, #tpu.memory_space<vmem>>, %arg14: memref<2x1x64xf32, #tpu.memory_space<vmem>>, %arg15: memref<2x64x32xf32, #tpu.memory_space<vmem>>, %arg16: memref<2x1x32xf32, #tpu.memory_space<vmem>>, %arg17: memref<2x1x32xf32, #tpu.memory_space<vmem>>, %arg18: memref<2x1x32xf32, #tpu.memory_space<vmem>>, %arg19: memref<32x32xf32, #tpu.memory_space<vmem>>, %arg20: memref<1x32xf32, #tpu.memory_space<vmem>>, %arg21: memref<32x4xf32, #tpu.memory_space<vmem>>, %arg22: memref<1x4xf32, #tpu.memory_space<vmem>>, %arg23: memref<2x4xf32, #tpu.memory_space<vmem>>) attributes {dimension_semantics = [#tpu.dimension_semantics<arbitrary>], iteration_bounds = array<i64: 1>, scalar_prefetch = 0 : i64, scratch_operands = 0 : i64, tpu.core_type = #tpu.core_type<tc>, window_params = [{pipeline_mode = #tpu.pipeline_mode<synchronous>, transform_indices = @transform_0, window_bounds = array<i64: 16, 32>}, {pipeline_mode = #tpu.pipeline_mode<synchronous>, transform_indices = @transform_1, window_bounds = array<i64: 8, 32>}, {pipeline_mode = #tpu.pipeline_mode<synchronous>, transform_indices = @transform_2, window_bounds = array<i64: 1, 32>}, {pipeline_mode = #tpu.pipeline_mode<synchronous>, transform_indices = @transform_3, window_bounds = array<i64: 4, 1, 8>}, {pipeline_mode = #tpu.pipeline_mode<synchronous>, transform_indices = @transform_4, window_bounds = array<i64: 1, 32>}, {pipeline_mode = #tpu.pipeline_mode<synchronous>, transform_indices = @transform_5, window_bounds = array<i64: 1, 32>}, {pipeline_mode = #tpu.pipeline_mode<synchronous>, transform_indices = @transform_6, window_bounds = array<i64: 2, 32, 96>}, {pipeline_mode = #tpu.pipeline_mode<synchronous>, transform_indices = @transform_7, window_bounds = array<i64: 2, 1, 96>}, {pipeline_mode = #tpu.pipeline_mode<synchronous>, transform_indices = @transform_8, window_bounds = array<i64: 2, 32, 32>}, {pipeline_mode = #tpu.pipeline_mode<synchronous>, transform_indices = @transform_9, window_bounds = array<i64: 2, 1, 32>}, {pipeline_mode = #tpu.pipeline_mode<synchronous>, transform_indices = @transform_10, window_bounds = array<i64: 2, 1, 32>}, {pipeline_mode = #tpu.pipeline_mode<synchronous>, transform_indices = @transform_11, window_bounds = array<i64: 2, 1, 32>}, {pipeline_mode = #tpu.pipeline_mode<synchronous>, transform_indices = @transform_12, window_bounds = array<i64: 2, 32, 64>}, {pipeline_mode = #tpu.pipeline_mode<synchronous>, transform_indices = @transform_13, window_bounds = array<i64: 2, 1, 64>}, {pipeline_mode = #tpu.pipeline_mode<synchronous>, transform_indices = @transform_14, window_bounds = array<i64: 2, 64, 32>}, {pipeline_mode = #tpu.pipeline_mode<synchronous>, transform_indices = @transform_15, window_bounds = array<i64: 2, 1, 32>}, {pipeline_mode = #tpu.pipeline_mode<synchronous>, transform_indices = @transform_16, window_bounds = array<i64: 2, 1, 32>}, {pipeline_mode = #tpu.pipeline_mode<synchronous>, transform_indices = @transform_17, window_bounds = array<i64: 2, 1, 32>}, {pipeline_mode = #tpu.pipeline_mode<synchronous>, transform_indices = @transform_18, window_bounds = array<i64: 32, 32>}, {pipeline_mode = #tpu.pipeline_mode<synchronous>, transform_indices = @transform_19, window_bounds = array<i64: 1, 32>}, {pipeline_mode = #tpu.pipeline_mode<synchronous>, transform_indices = @transform_20, window_bounds = array<i64: 32, 4>}, {pipeline_mode = #tpu.pipeline_mode<synchronous>, transform_indices = @transform_21, window_bounds = array<i64: 1, 4>}, {pipeline_mode = #tpu.pipeline_mode<synchronous>, transform_indices = @transform_22, window_bounds = array<i64: 2, 4>}]} {
    %c0 = arith.constant 0 : index
    %c0_0 = arith.constant 0 : index
    %0 = vector.load %arg2[%c0, %c0_0] : memref<8x32xf32, #tpu.memory_space<vmem>>, vector<8x32xf32>
    %1 = tpu.concatenate %0, %0 in 0 : vector<8x32xf32>, vector<8x32xf32> -> vector<16x32xf32>
    %c0_1 = arith.constant 0 : index
    %c0_2 = arith.constant 0 : index
    %2 = vector.load %arg1[%c0_1, %c0_2] : memref<16x32xf32, #tpu.memory_space<vmem>>, vector<16x32xf32>
    %3 = arith.addf %2, %1 : vector<16x32xf32>
    %c0_3 = arith.constant 0 : index
    %c0_4 = arith.constant 0 : index
    %4 = vector.load %arg3[%c0_3, %c0_4] : memref<1x32xf32, #tpu.memory_space<vmem>>, vector<1x32xf32>
    %5 = vector.broadcast %4 : vector<1x32xf32> to vector<16x32xf32>
    %6 = arith.addf %3, %5 : vector<16x32xf32>
    %c0_5 = arith.constant 0 : index
    %c0_6 = arith.constant 0 : index
    %7 = vector.load %arg5[%c0_5, %c0_6] : memref<1x32xf32, #tpu.memory_space<vmem>>, vector<1x32xf32>
    %c0_7 = arith.constant 0 : index
    %c0_8 = arith.constant 0 : index
    %8 = vector.load %arg6[%c0_7, %c0_8] : memref<1x32xf32, #tpu.memory_space<vmem>>, vector<1x32xf32>
    %cst = arith.constant dense<0.000000e+00> : vector<16xf32>
    %9 = vector.multi_reduction <add>, %6, %cst [1] : vector<16x32xf32> to vector<16xf32>
    %10 = vector.shape_cast %9 : vector<16xf32> to vector<16x1xf32>
    %cst_9 = arith.constant 3.200000e+01 : f32
    %11 = vector.broadcast %cst_9 : f32 to vector<16x1xf32>
    %12 = arith.divf %10, %11 : vector<16x1xf32>
    %13 = vector.broadcast %12 : vector<16x1xf32> to vector<16x32xf32>
    %14 = arith.subf %6, %13 : vector<16x32xf32>
    %15 = vector.broadcast %12 : vector<16x1xf32> to vector<16x32xf32>
    %16 = arith.subf %6, %15 : vector<16x32xf32>
    %17 = arith.mulf %14, %16 : vector<16x32xf32>
    %cst_10 = arith.constant dense<0.000000e+00> : vector<16xf32>
    %18 = vector.multi_reduction <add>, %17, %cst_10 [1] : vector<16x32xf32> to vector<16xf32>
    %19 = vector.shape_cast %18 : vector<16xf32> to vector<16x1xf32>
    %cst_11 = arith.constant 3.200000e+01 : f32
    %20 = vector.broadcast %cst_11 : f32 to vector<16x1xf32>
    %21 = arith.divf %19, %20 : vector<16x1xf32>
    %22 = vector.broadcast %12 : vector<16x1xf32> to vector<16x32xf32>
    %23 = arith.subf %6, %22 : vector<16x32xf32>
    %cst_12 = arith.constant 9.99999996E-13 : f32
    %24 = vector.broadcast %cst_12 : f32 to vector<16x1xf32>
    %25 = arith.addf %21, %24 : vector<16x1xf32>
    %26 = math.rsqrt %25 : vector<16x1xf32>
    %27 = vector.broadcast %26 : vector<16x1xf32> to vector<16x32xf32>
    %28 = arith.mulf %23, %27 : vector<16x32xf32>
    %29 = vector.broadcast %7 : vector<1x32xf32> to vector<16x32xf32>
    %30 = arith.mulf %28, %29 : vector<16x32xf32>
    %31 = vector.broadcast %8 : vector<1x32xf32> to vector<16x32xf32>
    %32 = arith.addf %30, %31 : vector<16x32xf32>
    %c0_13 = arith.constant 0 : index
    %c0_14 = arith.constant 0 : index
    %c0_15 = arith.constant 0 : index
    %33 = vector.load %arg4[%c0_13, %c0_14, %c0_15] : memref<4x1x8xf32, #tpu.memory_space<vmem>>, vector<4x1x8xf32>
    %c0_16 = arith.constant 0 : index
    %c0_17 = arith.constant 0 : index
    %c0_18 = arith.constant 0 : index
    %34 = vector.load %arg7[%c0_16, %c0_17, %c0_18] : memref<2x32x96xf32, #tpu.memory_space<vmem>>, vector<1x32x96xf32>
    %35 = vector.shape_cast %34 : vector<1x32x96xf32> to vector<32x96xf32>
    %cst_19 = arith.constant dense<0.000000e+00> : vector<16x96xf32>
    %36 = tpu.matmul %32, %35, %cst_19 {dimension_numbers = #tpu.dot_dimension_numbers<[1], [0], [0], [1], [0, 0, 1, 1], [], []>} : vector<16x32xf32>, vector<32x96xf32>, vector<16x96xf32> -> vector<16x96xf32>
    %c0_20 = arith.constant 0 : index
    %c0_21 = arith.constant 0 : index
    %c0_22 = arith.constant 0 : index
    %37 = vector.load %arg8[%c0_20, %c0_21, %c0_22] : memref<2x1x96xf32, #tpu.memory_space<vmem>>, vector<1x1x96xf32>
    %38 = vector.shape_cast %37 : vector<1x1x96xf32> to vector<1x96xf32>
    %39 = vector.broadcast %38 : vector<1x96xf32> to vector<16x96xf32>
    %40 = arith.addf %36, %39 : vector<16x96xf32>
    %41 = vector.extract_strided_slice %40 {offsets = [0, 0], sizes = [8, 16], strides = [1, 1]} : vector<16x96xf32> to vector<8x16xf32>
    %42 = vector.extract_strided_slice %40 {offsets = [8, 0], sizes = [8, 16], strides = [1, 1]} : vector<16x96xf32> to vector<8x16xf32>
    %43 = vector.extract_strided_slice %40 {offsets = [0, 16], sizes = [8, 16], strides = [1, 1]} : vector<16x96xf32> to vector<8x16xf32>
    %44 = vector.extract_strided_slice %40 {offsets = [8, 16], sizes = [8, 16], strides = [1, 1]} : vector<16x96xf32> to vector<8x16xf32>
    %45 = vector.shape_cast %41 : vector<8x16xf32> to vector<1x8x16xf32>
    %46 = vector.shape_cast %42 : vector<8x16xf32> to vector<1x8x16xf32>
    %47 = vector.shape_cast %43 : vector<8x16xf32> to vector<1x8x16xf32>
    %48 = vector.shape_cast %44 : vector<8x16xf32> to vector<1x8x16xf32>
    %49 = tpu.concatenate %45, %46, %47, %48 in 0 : vector<1x8x16xf32>, vector<1x8x16xf32>, vector<1x8x16xf32>, vector<1x8x16xf32> -> vector<4x8x16xf32>
    %50 = vector.extract_strided_slice %40 {offsets = [0, 32], sizes = [8, 16], strides = [1, 1]} : vector<16x96xf32> to vector<8x16xf32>
    %51 = vector.extract_strided_slice %40 {offsets = [8, 32], sizes = [8, 16], strides = [1, 1]} : vector<16x96xf32> to vector<8x16xf32>
    %52 = vector.extract_strided_slice %40 {offsets = [0, 48], sizes = [8, 16], strides = [1, 1]} : vector<16x96xf32> to vector<8x16xf32>
    %53 = vector.extract_strided_slice %40 {offsets = [8, 48], sizes = [8, 16], strides = [1, 1]} : vector<16x96xf32> to vector<8x16xf32>
    %54 = vector.shape_cast %50 : vector<8x16xf32> to vector<1x8x16xf32>
    %55 = vector.shape_cast %51 : vector<8x16xf32> to vector<1x8x16xf32>
    %56 = vector.shape_cast %52 : vector<8x16xf32> to vector<1x8x16xf32>
    %57 = vector.shape_cast %53 : vector<8x16xf32> to vector<1x8x16xf32>
    %58 = tpu.concatenate %54, %55, %56, %57 in 0 : vector<1x8x16xf32>, vector<1x8x16xf32>, vector<1x8x16xf32>, vector<1x8x16xf32> -> vector<4x8x16xf32>
    %59 = vector.extract_strided_slice %40 {offsets = [0, 64], sizes = [8, 16], strides = [1, 1]} : vector<16x96xf32> to vector<8x16xf32>
    %60 = vector.extract_strided_slice %40 {offsets = [8, 64], sizes = [8, 16], strides = [1, 1]} : vector<16x96xf32> to vector<8x16xf32>
    %61 = vector.extract_strided_slice %40 {offsets = [0, 80], sizes = [8, 16], strides = [1, 1]} : vector<16x96xf32> to vector<8x16xf32>
    %62 = vector.extract_strided_slice %40 {offsets = [8, 80], sizes = [8, 16], strides = [1, 1]} : vector<16x96xf32> to vector<8x16xf32>
    %63 = vector.shape_cast %59 : vector<8x16xf32> to vector<1x8x16xf32>
    %64 = vector.shape_cast %60 : vector<8x16xf32> to vector<1x8x16xf32>
    %65 = vector.shape_cast %61 : vector<8x16xf32> to vector<1x8x16xf32>
    %66 = vector.shape_cast %62 : vector<8x16xf32> to vector<1x8x16xf32>
    %67 = tpu.concatenate %63, %64, %65, %66 in 0 : vector<1x8x16xf32>, vector<1x8x16xf32>, vector<1x8x16xf32>, vector<1x8x16xf32> -> vector<4x8x16xf32>
    "tpu.trace_start"() <{level = 10 : i32, message = "bqd,bkd->bqk"}> : () -> ()
    %cst_23 = arith.constant dense<0.000000e+00> : vector<4x8x8xf32>
    %68 = tpu.matmul %49, %58, %cst_23 {dimension_numbers = #tpu.dot_dimension_numbers<[2], [2], [1], [1], [0, 0, 0, 1, 1, 1], [0], [0]>} : vector<4x8x16xf32>, vector<4x8x16xf32>, vector<4x8x8xf32> -> vector<4x8x8xf32>
    "tpu.trace_stop"() : () -> ()
    %cst_24 = arith.constant 2.500000e-01 : f32
    %69 = vector.broadcast %cst_24 : f32 to vector<4x8x8xf32>
    %70 = arith.mulf %68, %69 : vector<4x8x8xf32>
    %71 = vector.broadcast %33 : vector<4x1x8xf32> to vector<4x8x8xf32>
    %72 = arith.addf %70, %71 : vector<4x8x8xf32>
    %cst_25 = arith.constant dense<0xFF800000> : vector<4x8xf32>
    %73 = vector.multi_reduction <maximumf>, %72, %cst_25 [2] : vector<4x8x8xf32> to vector<4x8xf32>
    %74 = vector.shape_cast %73 : vector<4x8xf32> to vector<4x8x1xf32>
    %75 = vector.broadcast %74 : vector<4x8x1xf32> to vector<4x8x8xf32>
    %76 = arith.subf %72, %75 : vector<4x8x8xf32>
    %77 = math.exp %76 : vector<4x8x8xf32>
    %cst_26 = arith.constant dense<0.000000e+00> : vector<4x8xf32>
    %78 = vector.multi_reduction <add>, %77, %cst_26 [2] : vector<4x8x8xf32> to vector<4x8xf32>
    %79 = vector.shape_cast %78 : vector<4x8xf32> to vector<4x8x1xf32>
    %80 = tpu.reciprocal %79 {approx = true} : vector<4x8x1xf32> -> vector<4x8x1xf32>
    %81 = vector.broadcast %80 : vector<4x8x1xf32> to vector<4x8x8xf32>
    %82 = arith.mulf %77, %81 : vector<4x8x8xf32>
    "tpu.trace_start"() <{level = 10 : i32, message = "bqk,bkd->bqd"}> : () -> ()
    %cst_27 = arith.constant dense<0.000000e+00> : vector<4x8x16xf32>
    %83 = tpu.matmul %82, %67, %cst_27 {dimension_numbers = #tpu.dot_dimension_numbers<[2], [1], [1], [2], [0, 0, 0, 1, 1, 2], [0], [0]>} : vector<4x8x8xf32>, vector<4x8x16xf32>, vector<4x8x16xf32> -> vector<4x8x16xf32>
    "tpu.trace_stop"() : () -> ()
    %84 = vector.extract_strided_slice %83 {offsets = [0, 0, 0], sizes = [1, 8, 16], strides = [1, 1, 1]} : vector<4x8x16xf32> to vector<1x8x16xf32>
    %85 = vector.shape_cast %84 : vector<1x8x16xf32> to vector<8x16xf32>
    %86 = vector.extract_strided_slice %83 {offsets = [2, 0, 0], sizes = [1, 8, 16], strides = [1, 1, 1]} : vector<4x8x16xf32> to vector<1x8x16xf32>
    %87 = vector.shape_cast %86 : vector<1x8x16xf32> to vector<8x16xf32>
    %88 = tpu.concatenate %85, %87 in 1 : vector<8x16xf32>, vector<8x16xf32> -> vector<8x32xf32>
    %89 = vector.extract_strided_slice %83 {offsets = [1, 0, 0], sizes = [1, 8, 16], strides = [1, 1, 1]} : vector<4x8x16xf32> to vector<1x8x16xf32>
    %90 = vector.shape_cast %89 : vector<1x8x16xf32> to vector<8x16xf32>
    %91 = vector.extract_strided_slice %83 {offsets = [3, 0, 0], sizes = [1, 8, 16], strides = [1, 1, 1]} : vector<4x8x16xf32> to vector<1x8x16xf32>
    %92 = vector.shape_cast %91 : vector<1x8x16xf32> to vector<8x16xf32>
    %93 = tpu.concatenate %90, %92 in 1 : vector<8x16xf32>, vector<8x16xf32> -> vector<8x32xf32>
    %94 = tpu.concatenate %88, %93 in 0 : vector<8x32xf32>, vector<8x32xf32> -> vector<16x32xf32>
    %c0_28 = arith.constant 0 : index
    %c0_29 = arith.constant 0 : index
    %c0_30 = arith.constant 0 : index
    %95 = vector.load %arg9[%c0_28, %c0_29, %c0_30] : memref<2x32x32xf32, #tpu.memory_space<vmem>>, vector<1x32x32xf32>
    %96 = vector.shape_cast %95 : vector<1x32x32xf32> to vector<32x32xf32>
    %cst_31 = arith.constant dense<0.000000e+00> : vector<16x32xf32>
    %97 = tpu.matmul %94, %96, %cst_31 {dimension_numbers = #tpu.dot_dimension_numbers<[1], [0], [0], [1], [0, 0, 1, 1], [], []>} : vector<16x32xf32>, vector<32x32xf32>, vector<16x32xf32> -> vector<16x32xf32>
    %c0_32 = arith.constant 0 : index
    %c0_33 = arith.constant 0 : index
    %c0_34 = arith.constant 0 : index
    %98 = vector.load %arg10[%c0_32, %c0_33, %c0_34] : memref<2x1x32xf32, #tpu.memory_space<vmem>>, vector<1x1x32xf32>
    %99 = vector.shape_cast %98 : vector<1x1x32xf32> to vector<1x32xf32>
    %100 = vector.broadcast %99 : vector<1x32xf32> to vector<16x32xf32>
    %101 = arith.addf %97, %100 : vector<16x32xf32>
    %102 = arith.addf %32, %101 : vector<16x32xf32>
    %c0_35 = arith.constant 0 : index
    %c0_36 = arith.constant 0 : index
    %c0_37 = arith.constant 0 : index
    %103 = vector.load %arg11[%c0_35, %c0_36, %c0_37] : memref<2x1x32xf32, #tpu.memory_space<vmem>>, vector<1x1x32xf32>
    %104 = vector.shape_cast %103 : vector<1x1x32xf32> to vector<1x32xf32>
    %c0_38 = arith.constant 0 : index
    %c0_39 = arith.constant 0 : index
    %c0_40 = arith.constant 0 : index
    %105 = vector.load %arg12[%c0_38, %c0_39, %c0_40] : memref<2x1x32xf32, #tpu.memory_space<vmem>>, vector<1x1x32xf32>
    %106 = vector.shape_cast %105 : vector<1x1x32xf32> to vector<1x32xf32>
    %cst_41 = arith.constant dense<0.000000e+00> : vector<16xf32>
    %107 = vector.multi_reduction <add>, %102, %cst_41 [1] : vector<16x32xf32> to vector<16xf32>
    %108 = vector.shape_cast %107 : vector<16xf32> to vector<16x1xf32>
    %cst_42 = arith.constant 3.200000e+01 : f32
    %109 = vector.broadcast %cst_42 : f32 to vector<16x1xf32>
    %110 = arith.divf %108, %109 : vector<16x1xf32>
    %111 = vector.broadcast %110 : vector<16x1xf32> to vector<16x32xf32>
    %112 = arith.subf %102, %111 : vector<16x32xf32>
    %113 = vector.broadcast %110 : vector<16x1xf32> to vector<16x32xf32>
    %114 = arith.subf %102, %113 : vector<16x32xf32>
    %115 = arith.mulf %112, %114 : vector<16x32xf32>
    %cst_43 = arith.constant dense<0.000000e+00> : vector<16xf32>
    %116 = vector.multi_reduction <add>, %115, %cst_43 [1] : vector<16x32xf32> to vector<16xf32>
    %117 = vector.shape_cast %116 : vector<16xf32> to vector<16x1xf32>
    %cst_44 = arith.constant 3.200000e+01 : f32
    %118 = vector.broadcast %cst_44 : f32 to vector<16x1xf32>
    %119 = arith.divf %117, %118 : vector<16x1xf32>
    %120 = vector.broadcast %110 : vector<16x1xf32> to vector<16x32xf32>
    %121 = arith.subf %102, %120 : vector<16x32xf32>
    %cst_45 = arith.constant 9.99999996E-13 : f32
    %122 = vector.broadcast %cst_45 : f32 to vector<16x1xf32>
    %123 = arith.addf %119, %122 : vector<16x1xf32>
    %124 = math.rsqrt %123 : vector<16x1xf32>
    %125 = vector.broadcast %124 : vector<16x1xf32> to vector<16x32xf32>
    %126 = arith.mulf %121, %125 : vector<16x32xf32>
    %127 = vector.broadcast %104 : vector<1x32xf32> to vector<16x32xf32>
    %128 = arith.mulf %126, %127 : vector<16x32xf32>
    %129 = vector.broadcast %106 : vector<1x32xf32> to vector<16x32xf32>
    %130 = arith.addf %128, %129 : vector<16x32xf32>
    %c0_46 = arith.constant 0 : index
    %c0_47 = arith.constant 0 : index
    %c0_48 = arith.constant 0 : index
    %131 = vector.load %arg13[%c0_46, %c0_47, %c0_48] : memref<2x32x64xf32, #tpu.memory_space<vmem>>, vector<1x32x64xf32>
    %132 = vector.shape_cast %131 : vector<1x32x64xf32> to vector<32x64xf32>
    %cst_49 = arith.constant dense<0.000000e+00> : vector<16x64xf32>
    %133 = tpu.matmul %130, %132, %cst_49 {dimension_numbers = #tpu.dot_dimension_numbers<[1], [0], [0], [1], [0, 0, 1, 1], [], []>} : vector<16x32xf32>, vector<32x64xf32>, vector<16x64xf32> -> vector<16x64xf32>
    %c0_50 = arith.constant 0 : index
    %c0_51 = arith.constant 0 : index
    %c0_52 = arith.constant 0 : index
    %134 = vector.load %arg14[%c0_50, %c0_51, %c0_52] : memref<2x1x64xf32, #tpu.memory_space<vmem>>, vector<1x1x64xf32>
    %135 = vector.shape_cast %134 : vector<1x1x64xf32> to vector<1x64xf32>
    %136 = vector.broadcast %135 : vector<1x64xf32> to vector<16x64xf32>
    %137 = arith.addf %133, %136 : vector<16x64xf32>
    %cst_53 = arith.constant 5.000000e-01 : f32
    %138 = vector.broadcast %cst_53 : f32 to vector<16x64xf32>
    %139 = arith.mulf %138, %137 : vector<16x64xf32>
    %cst_54 = arith.constant 4.471500e-02 : f32
    %140 = vector.broadcast %cst_54 : f32 to vector<16x64xf32>
    %141 = arith.mulf %140, %137 : vector<16x64xf32>
    %142 = arith.mulf %141, %137 : vector<16x64xf32>
    %143 = arith.mulf %142, %137 : vector<16x64xf32>
    %144 = arith.addf %137, %143 : vector<16x64xf32>
    %cst_55 = arith.constant 0.797884583 : f32
    %145 = vector.broadcast %cst_55 : f32 to vector<16x64xf32>
    %146 = arith.mulf %145, %144 : vector<16x64xf32>
    %147 = math.tanh %146 : vector<16x64xf32>
    %cst_56 = arith.constant 1.000000e+00 : f32
    %148 = vector.broadcast %cst_56 : f32 to vector<16x64xf32>
    %149 = arith.addf %148, %147 : vector<16x64xf32>
    %150 = arith.mulf %139, %149 : vector<16x64xf32>
    %c0_57 = arith.constant 0 : index
    %c0_58 = arith.constant 0 : index
    %c0_59 = arith.constant 0 : index
    %151 = vector.load %arg15[%c0_57, %c0_58, %c0_59] : memref<2x64x32xf32, #tpu.memory_space<vmem>>, vector<1x64x32xf32>
    %152 = vector.shape_cast %151 : vector<1x64x32xf32> to vector<64x32xf32>
    %cst_60 = arith.constant dense<0.000000e+00> : vector<16x32xf32>
    %153 = tpu.matmul %150, %152, %cst_60 {dimension_numbers = #tpu.dot_dimension_numbers<[1], [0], [0], [1], [0, 0, 1, 1], [], []>} : vector<16x64xf32>, vector<64x32xf32>, vector<16x32xf32> -> vector<16x32xf32>
    %c0_61 = arith.constant 0 : index
    %c0_62 = arith.constant 0 : index
    %c0_63 = arith.constant 0 : index
    %154 = vector.load %arg16[%c0_61, %c0_62, %c0_63] : memref<2x1x32xf32, #tpu.memory_space<vmem>>, vector<1x1x32xf32>
    %155 = vector.shape_cast %154 : vector<1x1x32xf32> to vector<1x32xf32>
    %156 = vector.broadcast %155 : vector<1x32xf32> to vector<16x32xf32>
    %157 = arith.addf %153, %156 : vector<16x32xf32>
    %158 = arith.addf %130, %157 : vector<16x32xf32>
    %c0_64 = arith.constant 0 : index
    %c0_65 = arith.constant 0 : index
    %c0_66 = arith.constant 0 : index
    %159 = vector.load %arg17[%c0_64, %c0_65, %c0_66] : memref<2x1x32xf32, #tpu.memory_space<vmem>>, vector<1x1x32xf32>
    %160 = vector.shape_cast %159 : vector<1x1x32xf32> to vector<1x32xf32>
    %c0_67 = arith.constant 0 : index
    %c0_68 = arith.constant 0 : index
    %c0_69 = arith.constant 0 : index
    %161 = vector.load %arg18[%c0_67, %c0_68, %c0_69] : memref<2x1x32xf32, #tpu.memory_space<vmem>>, vector<1x1x32xf32>
    %162 = vector.shape_cast %161 : vector<1x1x32xf32> to vector<1x32xf32>
    %cst_70 = arith.constant dense<0.000000e+00> : vector<16xf32>
    %163 = vector.multi_reduction <add>, %158, %cst_70 [1] : vector<16x32xf32> to vector<16xf32>
    %164 = vector.shape_cast %163 : vector<16xf32> to vector<16x1xf32>
    %cst_71 = arith.constant 3.200000e+01 : f32
    %165 = vector.broadcast %cst_71 : f32 to vector<16x1xf32>
    %166 = arith.divf %164, %165 : vector<16x1xf32>
    %167 = vector.broadcast %166 : vector<16x1xf32> to vector<16x32xf32>
    %168 = arith.subf %158, %167 : vector<16x32xf32>
    %169 = vector.broadcast %166 : vector<16x1xf32> to vector<16x32xf32>
    %170 = arith.subf %158, %169 : vector<16x32xf32>
    %171 = arith.mulf %168, %170 : vector<16x32xf32>
    %cst_72 = arith.constant dense<0.000000e+00> : vector<16xf32>
    %172 = vector.multi_reduction <add>, %171, %cst_72 [1] : vector<16x32xf32> to vector<16xf32>
    %173 = vector.shape_cast %172 : vector<16xf32> to vector<16x1xf32>
    %cst_73 = arith.constant 3.200000e+01 : f32
    %174 = vector.broadcast %cst_73 : f32 to vector<16x1xf32>
    %175 = arith.divf %173, %174 : vector<16x1xf32>
    %176 = vector.broadcast %166 : vector<16x1xf32> to vector<16x32xf32>
    %177 = arith.subf %158, %176 : vector<16x32xf32>
    %cst_74 = arith.constant 9.99999996E-13 : f32
    %178 = vector.broadcast %cst_74 : f32 to vector<16x1xf32>
    %179 = arith.addf %175, %178 : vector<16x1xf32>
    %180 = math.rsqrt %179 : vector<16x1xf32>
    %181 = vector.broadcast %180 : vector<16x1xf32> to vector<16x32xf32>
    %182 = arith.mulf %177, %181 : vector<16x32xf32>
    %183 = vector.broadcast %160 : vector<1x32xf32> to vector<16x32xf32>
    %184 = arith.mulf %182, %183 : vector<16x32xf32>
    %185 = vector.broadcast %162 : vector<1x32xf32> to vector<16x32xf32>
    %186 = arith.addf %184, %185 : vector<16x32xf32>
    %c1 = arith.constant 1 : index
    %c0_75 = arith.constant 0 : index
    %c0_76 = arith.constant 0 : index
    %187 = vector.load %arg7[%c1, %c0_75, %c0_76] : memref<2x32x96xf32, #tpu.memory_space<vmem>>, vector<1x32x96xf32>
    %188 = vector.shape_cast %187 : vector<1x32x96xf32> to vector<32x96xf32>
    %cst_77 = arith.constant dense<0.000000e+00> : vector<16x96xf32>
    %189 = tpu.matmul %186, %188, %cst_77 {dimension_numbers = #tpu.dot_dimension_numbers<[1], [0], [0], [1], [0, 0, 1, 1], [], []>} : vector<16x32xf32>, vector<32x96xf32>, vector<16x96xf32> -> vector<16x96xf32>
    %c1_78 = arith.constant 1 : index
    %c0_79 = arith.constant 0 : index
    %c0_80 = arith.constant 0 : index
    %190 = vector.load %arg8[%c1_78, %c0_79, %c0_80] : memref<2x1x96xf32, #tpu.memory_space<vmem>>, vector<1x1x96xf32>
    %191 = vector.shape_cast %190 : vector<1x1x96xf32> to vector<1x96xf32>
    %192 = vector.broadcast %191 : vector<1x96xf32> to vector<16x96xf32>
    %193 = arith.addf %189, %192 : vector<16x96xf32>
    %194 = vector.extract_strided_slice %193 {offsets = [0, 0], sizes = [8, 16], strides = [1, 1]} : vector<16x96xf32> to vector<8x16xf32>
    %195 = vector.extract_strided_slice %193 {offsets = [8, 0], sizes = [8, 16], strides = [1, 1]} : vector<16x96xf32> to vector<8x16xf32>
    %196 = vector.extract_strided_slice %193 {offsets = [0, 16], sizes = [8, 16], strides = [1, 1]} : vector<16x96xf32> to vector<8x16xf32>
    %197 = vector.extract_strided_slice %193 {offsets = [8, 16], sizes = [8, 16], strides = [1, 1]} : vector<16x96xf32> to vector<8x16xf32>
    %198 = vector.shape_cast %194 : vector<8x16xf32> to vector<1x8x16xf32>
    %199 = vector.shape_cast %195 : vector<8x16xf32> to vector<1x8x16xf32>
    %200 = vector.shape_cast %196 : vector<8x16xf32> to vector<1x8x16xf32>
    %201 = vector.shape_cast %197 : vector<8x16xf32> to vector<1x8x16xf32>
    %202 = tpu.concatenate %198, %199, %200, %201 in 0 : vector<1x8x16xf32>, vector<1x8x16xf32>, vector<1x8x16xf32>, vector<1x8x16xf32> -> vector<4x8x16xf32>
    %203 = vector.extract_strided_slice %193 {offsets = [0, 32], sizes = [8, 16], strides = [1, 1]} : vector<16x96xf32> to vector<8x16xf32>
    %204 = vector.extract_strided_slice %193 {offsets = [8, 32], sizes = [8, 16], strides = [1, 1]} : vector<16x96xf32> to vector<8x16xf32>
    %205 = vector.extract_strided_slice %193 {offsets = [0, 48], sizes = [8, 16], strides = [1, 1]} : vector<16x96xf32> to vector<8x16xf32>
    %206 = vector.extract_strided_slice %193 {offsets = [8, 48], sizes = [8, 16], strides = [1, 1]} : vector<16x96xf32> to vector<8x16xf32>
    %207 = vector.shape_cast %203 : vector<8x16xf32> to vector<1x8x16xf32>
    %208 = vector.shape_cast %204 : vector<8x16xf32> to vector<1x8x16xf32>
    %209 = vector.shape_cast %205 : vector<8x16xf32> to vector<1x8x16xf32>
    %210 = vector.shape_cast %206 : vector<8x16xf32> to vector<1x8x16xf32>
    %211 = tpu.concatenate %207, %208, %209, %210 in 0 : vector<1x8x16xf32>, vector<1x8x16xf32>, vector<1x8x16xf32>, vector<1x8x16xf32> -> vector<4x8x16xf32>
    %212 = vector.extract_strided_slice %193 {offsets = [0, 64], sizes = [8, 16], strides = [1, 1]} : vector<16x96xf32> to vector<8x16xf32>
    %213 = vector.extract_strided_slice %193 {offsets = [8, 64], sizes = [8, 16], strides = [1, 1]} : vector<16x96xf32> to vector<8x16xf32>
    %214 = vector.extract_strided_slice %193 {offsets = [0, 80], sizes = [8, 16], strides = [1, 1]} : vector<16x96xf32> to vector<8x16xf32>
    %215 = vector.extract_strided_slice %193 {offsets = [8, 80], sizes = [8, 16], strides = [1, 1]} : vector<16x96xf32> to vector<8x16xf32>
    %216 = vector.shape_cast %212 : vector<8x16xf32> to vector<1x8x16xf32>
    %217 = vector.shape_cast %213 : vector<8x16xf32> to vector<1x8x16xf32>
    %218 = vector.shape_cast %214 : vector<8x16xf32> to vector<1x8x16xf32>
    %219 = vector.shape_cast %215 : vector<8x16xf32> to vector<1x8x16xf32>
    %220 = tpu.concatenate %216, %217, %218, %219 in 0 : vector<1x8x16xf32>, vector<1x8x16xf32>, vector<1x8x16xf32>, vector<1x8x16xf32> -> vector<4x8x16xf32>
    "tpu.trace_start"() <{level = 10 : i32, message = "bqd,bkd->bqk"}> : () -> ()
    %cst_81 = arith.constant dense<0.000000e+00> : vector<4x8x8xf32>
    %221 = tpu.matmul %202, %211, %cst_81 {dimension_numbers = #tpu.dot_dimension_numbers<[2], [2], [1], [1], [0, 0, 0, 1, 1, 1], [0], [0]>} : vector<4x8x16xf32>, vector<4x8x16xf32>, vector<4x8x8xf32> -> vector<4x8x8xf32>
    "tpu.trace_stop"() : () -> ()
    %cst_82 = arith.constant 2.500000e-01 : f32
    %222 = vector.broadcast %cst_82 : f32 to vector<4x8x8xf32>
    %223 = arith.mulf %221, %222 : vector<4x8x8xf32>
    %224 = vector.broadcast %33 : vector<4x1x8xf32> to vector<4x8x8xf32>
    %225 = arith.addf %223, %224 : vector<4x8x8xf32>
    %cst_83 = arith.constant dense<0xFF800000> : vector<4x8xf32>
    %226 = vector.multi_reduction <maximumf>, %225, %cst_83 [2] : vector<4x8x8xf32> to vector<4x8xf32>
    %227 = vector.shape_cast %226 : vector<4x8xf32> to vector<4x8x1xf32>
    %228 = vector.broadcast %227 : vector<4x8x1xf32> to vector<4x8x8xf32>
    %229 = arith.subf %225, %228 : vector<4x8x8xf32>
    %230 = math.exp %229 : vector<4x8x8xf32>
    %cst_84 = arith.constant dense<0.000000e+00> : vector<4x8xf32>
    %231 = vector.multi_reduction <add>, %230, %cst_84 [2] : vector<4x8x8xf32> to vector<4x8xf32>
    %232 = vector.shape_cast %231 : vector<4x8xf32> to vector<4x8x1xf32>
    %233 = tpu.reciprocal %232 {approx = true} : vector<4x8x1xf32> -> vector<4x8x1xf32>
    %234 = vector.broadcast %233 : vector<4x8x1xf32> to vector<4x8x8xf32>
    %235 = arith.mulf %230, %234 : vector<4x8x8xf32>
    "tpu.trace_start"() <{level = 10 : i32, message = "bqk,bkd->bqd"}> : () -> ()
    %cst_85 = arith.constant dense<0.000000e+00> : vector<4x8x16xf32>
    %236 = tpu.matmul %235, %220, %cst_85 {dimension_numbers = #tpu.dot_dimension_numbers<[2], [1], [1], [2], [0, 0, 0, 1, 1, 2], [0], [0]>} : vector<4x8x8xf32>, vector<4x8x16xf32>, vector<4x8x16xf32> -> vector<4x8x16xf32>
    "tpu.trace_stop"() : () -> ()
    %237 = vector.extract_strided_slice %236 {offsets = [0, 0, 0], sizes = [1, 8, 16], strides = [1, 1, 1]} : vector<4x8x16xf32> to vector<1x8x16xf32>
    %238 = vector.shape_cast %237 : vector<1x8x16xf32> to vector<8x16xf32>
    %239 = vector.extract_strided_slice %236 {offsets = [2, 0, 0], sizes = [1, 8, 16], strides = [1, 1, 1]} : vector<4x8x16xf32> to vector<1x8x16xf32>
    %240 = vector.shape_cast %239 : vector<1x8x16xf32> to vector<8x16xf32>
    %241 = tpu.concatenate %238, %240 in 1 : vector<8x16xf32>, vector<8x16xf32> -> vector<8x32xf32>
    %242 = vector.extract_strided_slice %236 {offsets = [1, 0, 0], sizes = [1, 8, 16], strides = [1, 1, 1]} : vector<4x8x16xf32> to vector<1x8x16xf32>
    %243 = vector.shape_cast %242 : vector<1x8x16xf32> to vector<8x16xf32>
    %244 = vector.extract_strided_slice %236 {offsets = [3, 0, 0], sizes = [1, 8, 16], strides = [1, 1, 1]} : vector<4x8x16xf32> to vector<1x8x16xf32>
    %245 = vector.shape_cast %244 : vector<1x8x16xf32> to vector<8x16xf32>
    %246 = tpu.concatenate %243, %245 in 1 : vector<8x16xf32>, vector<8x16xf32> -> vector<8x32xf32>
    %247 = tpu.concatenate %241, %246 in 0 : vector<8x32xf32>, vector<8x32xf32> -> vector<16x32xf32>
    %c1_86 = arith.constant 1 : index
    %c0_87 = arith.constant 0 : index
    %c0_88 = arith.constant 0 : index
    %248 = vector.load %arg9[%c1_86, %c0_87, %c0_88] : memref<2x32x32xf32, #tpu.memory_space<vmem>>, vector<1x32x32xf32>
    %249 = vector.shape_cast %248 : vector<1x32x32xf32> to vector<32x32xf32>
    %cst_89 = arith.constant dense<0.000000e+00> : vector<16x32xf32>
    %250 = tpu.matmul %247, %249, %cst_89 {dimension_numbers = #tpu.dot_dimension_numbers<[1], [0], [0], [1], [0, 0, 1, 1], [], []>} : vector<16x32xf32>, vector<32x32xf32>, vector<16x32xf32> -> vector<16x32xf32>
    %c1_90 = arith.constant 1 : index
    %c0_91 = arith.constant 0 : index
    %c0_92 = arith.constant 0 : index
    %251 = vector.load %arg10[%c1_90, %c0_91, %c0_92] : memref<2x1x32xf32, #tpu.memory_space<vmem>>, vector<1x1x32xf32>
    %252 = vector.shape_cast %251 : vector<1x1x32xf32> to vector<1x32xf32>
    %253 = vector.broadcast %252 : vector<1x32xf32> to vector<16x32xf32>
    %254 = arith.addf %250, %253 : vector<16x32xf32>
    %255 = arith.addf %186, %254 : vector<16x32xf32>
    %c1_93 = arith.constant 1 : index
    %c0_94 = arith.constant 0 : index
    %c0_95 = arith.constant 0 : index
    %256 = vector.load %arg11[%c1_93, %c0_94, %c0_95] : memref<2x1x32xf32, #tpu.memory_space<vmem>>, vector<1x1x32xf32>
    %257 = vector.shape_cast %256 : vector<1x1x32xf32> to vector<1x32xf32>
    %c1_96 = arith.constant 1 : index
    %c0_97 = arith.constant 0 : index
    %c0_98 = arith.constant 0 : index
    %258 = vector.load %arg12[%c1_96, %c0_97, %c0_98] : memref<2x1x32xf32, #tpu.memory_space<vmem>>, vector<1x1x32xf32>
    %259 = vector.shape_cast %258 : vector<1x1x32xf32> to vector<1x32xf32>
    %cst_99 = arith.constant dense<0.000000e+00> : vector<16xf32>
    %260 = vector.multi_reduction <add>, %255, %cst_99 [1] : vector<16x32xf32> to vector<16xf32>
    %261 = vector.shape_cast %260 : vector<16xf32> to vector<16x1xf32>
    %cst_100 = arith.constant 3.200000e+01 : f32
    %262 = vector.broadcast %cst_100 : f32 to vector<16x1xf32>
    %263 = arith.divf %261, %262 : vector<16x1xf32>
    %264 = vector.broadcast %263 : vector<16x1xf32> to vector<16x32xf32>
    %265 = arith.subf %255, %264 : vector<16x32xf32>
    %266 = vector.broadcast %263 : vector<16x1xf32> to vector<16x32xf32>
    %267 = arith.subf %255, %266 : vector<16x32xf32>
    %268 = arith.mulf %265, %267 : vector<16x32xf32>
    %cst_101 = arith.constant dense<0.000000e+00> : vector<16xf32>
    %269 = vector.multi_reduction <add>, %268, %cst_101 [1] : vector<16x32xf32> to vector<16xf32>
    %270 = vector.shape_cast %269 : vector<16xf32> to vector<16x1xf32>
    %cst_102 = arith.constant 3.200000e+01 : f32
    %271 = vector.broadcast %cst_102 : f32 to vector<16x1xf32>
    %272 = arith.divf %270, %271 : vector<16x1xf32>
    %273 = vector.broadcast %263 : vector<16x1xf32> to vector<16x32xf32>
    %274 = arith.subf %255, %273 : vector<16x32xf32>
    %cst_103 = arith.constant 9.99999996E-13 : f32
    %275 = vector.broadcast %cst_103 : f32 to vector<16x1xf32>
    %276 = arith.addf %272, %275 : vector<16x1xf32>
    %277 = math.rsqrt %276 : vector<16x1xf32>
    %278 = vector.broadcast %277 : vector<16x1xf32> to vector<16x32xf32>
    %279 = arith.mulf %274, %278 : vector<16x32xf32>
    %280 = vector.broadcast %257 : vector<1x32xf32> to vector<16x32xf32>
    %281 = arith.mulf %279, %280 : vector<16x32xf32>
    %282 = vector.broadcast %259 : vector<1x32xf32> to vector<16x32xf32>
    %283 = arith.addf %281, %282 : vector<16x32xf32>
    %c1_104 = arith.constant 1 : index
    %c0_105 = arith.constant 0 : index
    %c0_106 = arith.constant 0 : index
    %284 = vector.load %arg13[%c1_104, %c0_105, %c0_106] : memref<2x32x64xf32, #tpu.memory_space<vmem>>, vector<1x32x64xf32>
    %285 = vector.shape_cast %284 : vector<1x32x64xf32> to vector<32x64xf32>
    %cst_107 = arith.constant dense<0.000000e+00> : vector<16x64xf32>
    %286 = tpu.matmul %283, %285, %cst_107 {dimension_numbers = #tpu.dot_dimension_numbers<[1], [0], [0], [1], [0, 0, 1, 1], [], []>} : vector<16x32xf32>, vector<32x64xf32>, vector<16x64xf32> -> vector<16x64xf32>
    %c1_108 = arith.constant 1 : index
    %c0_109 = arith.constant 0 : index
    %c0_110 = arith.constant 0 : index
    %287 = vector.load %arg14[%c1_108, %c0_109, %c0_110] : memref<2x1x64xf32, #tpu.memory_space<vmem>>, vector<1x1x64xf32>
    %288 = vector.shape_cast %287 : vector<1x1x64xf32> to vector<1x64xf32>
    %289 = vector.broadcast %288 : vector<1x64xf32> to vector<16x64xf32>
    %290 = arith.addf %286, %289 : vector<16x64xf32>
    %cst_111 = arith.constant 5.000000e-01 : f32
    %291 = vector.broadcast %cst_111 : f32 to vector<16x64xf32>
    %292 = arith.mulf %291, %290 : vector<16x64xf32>
    %cst_112 = arith.constant 4.471500e-02 : f32
    %293 = vector.broadcast %cst_112 : f32 to vector<16x64xf32>
    %294 = arith.mulf %293, %290 : vector<16x64xf32>
    %295 = arith.mulf %294, %290 : vector<16x64xf32>
    %296 = arith.mulf %295, %290 : vector<16x64xf32>
    %297 = arith.addf %290, %296 : vector<16x64xf32>
    %cst_113 = arith.constant 0.797884583 : f32
    %298 = vector.broadcast %cst_113 : f32 to vector<16x64xf32>
    %299 = arith.mulf %298, %297 : vector<16x64xf32>
    %300 = math.tanh %299 : vector<16x64xf32>
    %cst_114 = arith.constant 1.000000e+00 : f32
    %301 = vector.broadcast %cst_114 : f32 to vector<16x64xf32>
    %302 = arith.addf %301, %300 : vector<16x64xf32>
    %303 = arith.mulf %292, %302 : vector<16x64xf32>
    %c1_115 = arith.constant 1 : index
    %c0_116 = arith.constant 0 : index
    %c0_117 = arith.constant 0 : index
    %304 = vector.load %arg15[%c1_115, %c0_116, %c0_117] : memref<2x64x32xf32, #tpu.memory_space<vmem>>, vector<1x64x32xf32>
    %305 = vector.shape_cast %304 : vector<1x64x32xf32> to vector<64x32xf32>
    %cst_118 = arith.constant dense<0.000000e+00> : vector<16x32xf32>
    %306 = tpu.matmul %303, %305, %cst_118 {dimension_numbers = #tpu.dot_dimension_numbers<[1], [0], [0], [1], [0, 0, 1, 1], [], []>} : vector<16x64xf32>, vector<64x32xf32>, vector<16x32xf32> -> vector<16x32xf32>
    %c1_119 = arith.constant 1 : index
    %c0_120 = arith.constant 0 : index
    %c0_121 = arith.constant 0 : index
    %307 = vector.load %arg16[%c1_119, %c0_120, %c0_121] : memref<2x1x32xf32, #tpu.memory_space<vmem>>, vector<1x1x32xf32>
    %308 = vector.shape_cast %307 : vector<1x1x32xf32> to vector<1x32xf32>
    %309 = vector.broadcast %308 : vector<1x32xf32> to vector<16x32xf32>
    %310 = arith.addf %306, %309 : vector<16x32xf32>
    %311 = arith.addf %283, %310 : vector<16x32xf32>
    %c1_122 = arith.constant 1 : index
    %c0_123 = arith.constant 0 : index
    %c0_124 = arith.constant 0 : index
    %312 = vector.load %arg17[%c1_122, %c0_123, %c0_124] : memref<2x1x32xf32, #tpu.memory_space<vmem>>, vector<1x1x32xf32>
    %313 = vector.shape_cast %312 : vector<1x1x32xf32> to vector<1x32xf32>
    %c1_125 = arith.constant 1 : index
    %c0_126 = arith.constant 0 : index
    %c0_127 = arith.constant 0 : index
    %314 = vector.load %arg18[%c1_125, %c0_126, %c0_127] : memref<2x1x32xf32, #tpu.memory_space<vmem>>, vector<1x1x32xf32>
    %315 = vector.shape_cast %314 : vector<1x1x32xf32> to vector<1x32xf32>
    %cst_128 = arith.constant dense<0.000000e+00> : vector<16xf32>
    %316 = vector.multi_reduction <add>, %311, %cst_128 [1] : vector<16x32xf32> to vector<16xf32>
    %317 = vector.shape_cast %316 : vector<16xf32> to vector<16x1xf32>
    %cst_129 = arith.constant 3.200000e+01 : f32
    %318 = vector.broadcast %cst_129 : f32 to vector<16x1xf32>
    %319 = arith.divf %317, %318 : vector<16x1xf32>
    %320 = vector.broadcast %319 : vector<16x1xf32> to vector<16x32xf32>
    %321 = arith.subf %311, %320 : vector<16x32xf32>
    %322 = vector.broadcast %319 : vector<16x1xf32> to vector<16x32xf32>
    %323 = arith.subf %311, %322 : vector<16x32xf32>
    %324 = arith.mulf %321, %323 : vector<16x32xf32>
    %cst_130 = arith.constant dense<0.000000e+00> : vector<16xf32>
    %325 = vector.multi_reduction <add>, %324, %cst_130 [1] : vector<16x32xf32> to vector<16xf32>
    %326 = vector.shape_cast %325 : vector<16xf32> to vector<16x1xf32>
    %cst_131 = arith.constant 3.200000e+01 : f32
    %327 = vector.broadcast %cst_131 : f32 to vector<16x1xf32>
    %328 = arith.divf %326, %327 : vector<16x1xf32>
    %329 = vector.broadcast %319 : vector<16x1xf32> to vector<16x32xf32>
    %330 = arith.subf %311, %329 : vector<16x32xf32>
    %cst_132 = arith.constant 9.99999996E-13 : f32
    %331 = vector.broadcast %cst_132 : f32 to vector<16x1xf32>
    %332 = arith.addf %328, %331 : vector<16x1xf32>
    %333 = math.rsqrt %332 : vector<16x1xf32>
    %334 = vector.broadcast %333 : vector<16x1xf32> to vector<16x32xf32>
    %335 = arith.mulf %330, %334 : vector<16x32xf32>
    %336 = vector.broadcast %313 : vector<1x32xf32> to vector<16x32xf32>
    %337 = arith.mulf %335, %336 : vector<16x32xf32>
    %338 = vector.broadcast %315 : vector<1x32xf32> to vector<16x32xf32>
    %339 = arith.addf %337, %338 : vector<16x32xf32>
    %340 = vector.extract_strided_slice %339 {offsets = [0, 0], sizes = [1, 32], strides = [1, 1]} : vector<16x32xf32> to vector<1x32xf32>
    %341 = vector.extract_strided_slice %339 {offsets = [8, 0], sizes = [1, 32], strides = [1, 1]} : vector<16x32xf32> to vector<1x32xf32>
    %342 = tpu.concatenate %340, %341 in 0 : vector<1x32xf32>, vector<1x32xf32> -> vector<2x32xf32>
    %c0_133 = arith.constant 0 : index
    %c0_134 = arith.constant 0 : index
    %343 = vector.load %arg19[%c0_133, %c0_134] : memref<32x32xf32, #tpu.memory_space<vmem>>, vector<32x32xf32>
    %cst_135 = arith.constant dense<0.000000e+00> : vector<2x32xf32>
    %344 = tpu.matmul %342, %343, %cst_135 {dimension_numbers = #tpu.dot_dimension_numbers<[1], [0], [0], [1], [0, 0, 1, 1], [], []>} : vector<2x32xf32>, vector<32x32xf32>, vector<2x32xf32> -> vector<2x32xf32>
    %c0_136 = arith.constant 0 : index
    %c0_137 = arith.constant 0 : index
    %345 = vector.load %arg20[%c0_136, %c0_137] : memref<1x32xf32, #tpu.memory_space<vmem>>, vector<1x32xf32>
    %346 = vector.broadcast %345 : vector<1x32xf32> to vector<2x32xf32>
    %347 = arith.addf %344, %346 : vector<2x32xf32>
    %348 = math.tanh %347 : vector<2x32xf32>
    %c0_138 = arith.constant 0 : index
    %c0_139 = arith.constant 0 : index
    %349 = vector.load %arg21[%c0_138, %c0_139] : memref<32x4xf32, #tpu.memory_space<vmem>>, vector<32x4xf32>
    %cst_140 = arith.constant dense<0.000000e+00> : vector<2x4xf32>
    %350 = tpu.matmul %348, %349, %cst_140 {dimension_numbers = #tpu.dot_dimension_numbers<[1], [0], [0], [1], [0, 0, 1, 1], [], []>} : vector<2x32xf32>, vector<32x4xf32>, vector<2x4xf32> -> vector<2x4xf32>
    %c0_141 = arith.constant 0 : index
    %c0_142 = arith.constant 0 : index
    %351 = vector.load %arg22[%c0_141, %c0_142] : memref<1x4xf32, #tpu.memory_space<vmem>>, vector<1x4xf32>
    %352 = vector.broadcast %351 : vector<1x4xf32> to vector<2x4xf32>
    %353 = arith.addf %350, %352 : vector<2x4xf32>
    %c0_143 = arith.constant 0 : index
    %c0_144 = arith.constant 0 : index
    %354 = vector.load %arg23[%c0_143, %c0_144] : memref<2x4xf32, #tpu.memory_space<vmem>>, vector<2x4xf32>
    tpu.vector_store %arg23[%c0_143, %c0_144], %353 {strides = array<i32>} : memref<2x4xf32, #tpu.memory_space<vmem>>, vector<2x4xf32>,
    return
  }
  func.func @transform_0(%arg0: i32) -> (i32, i32) {
    %c0_i32 = arith.constant 0 : i32
    %c0_i32_0 = arith.constant 0 : i32
    %c0_i32_1 = arith.constant 0 : i32
    return %c0_i32, %c0_i32_0 : i32, i32
  }
  func.func @transform_1(%arg0: i32) -> (i32, i32) {
    %c0_i32 = arith.constant 0 : i32
    %c0_i32_0 = arith.constant 0 : i32
    %c0_i32_1 = arith.constant 0 : i32
    return %c0_i32, %c0_i32_0 : i32, i32
  }
  func.func @transform_2(%arg0: i32) -> (i32, i32) {
    %c0_i32 = arith.constant 0 : i32
    %c0_i32_0 = arith.constant 0 : i32
    %c0_i32_1 = arith.constant 0 : i32
    return %c0_i32, %c0_i32_0 : i32, i32
  }
  func.func @transform_3(%arg0: i32) -> (i32, i32, i32) {
    %c0_i32 = arith.constant 0 : i32
    %c0_i32_0 = arith.constant 0 : i32
    %c0_i32_1 = arith.constant 0 : i32
    %c0_i32_2 = arith.constant 0 : i32
    return %c0_i32, %c0_i32_0, %c0_i32_1 : i32, i32, i32
  }
  func.func @transform_4(%arg0: i32) -> (i32, i32) {
    %c0_i32 = arith.constant 0 : i32
    %c0_i32_0 = arith.constant 0 : i32
    %c0_i32_1 = arith.constant 0 : i32
    return %c0_i32, %c0_i32_0 : i32, i32
  }
  func.func @transform_5(%arg0: i32) -> (i32, i32) {
    %c0_i32 = arith.constant 0 : i32
    %c0_i32_0 = arith.constant 0 : i32
    %c0_i32_1 = arith.constant 0 : i32
    return %c0_i32, %c0_i32_0 : i32, i32
  }
  func.func @transform_6(%arg0: i32) -> (i32, i32, i32) {
    %c0_i32 = arith.constant 0 : i32
    %c0_i32_0 = arith.constant 0 : i32
    %c0_i32_1 = arith.constant 0 : i32
    %c0_i32_2 = arith.constant 0 : i32
    return %c0_i32, %c0_i32_0, %c0_i32_1 : i32, i32, i32
  }
  func.func @transform_7(%arg0: i32) -> (i32, i32, i32) {
    %c0_i32 = arith.constant 0 : i32
    %c0_i32_0 = arith.constant 0 : i32
    %c0_i32_1 = arith.constant 0 : i32
    %c0_i32_2 = arith.constant 0 : i32
    return %c0_i32, %c0_i32_0, %c0_i32_1 : i32, i32, i32
  }
  func.func @transform_8(%arg0: i32) -> (i32, i32, i32) {
    %c0_i32 = arith.constant 0 : i32
    %c0_i32_0 = arith.constant 0 : i32
    %c0_i32_1 = arith.constant 0 : i32
    %c0_i32_2 = arith.constant 0 : i32
    return %c0_i32, %c0_i32_0, %c0_i32_1 : i32, i32, i32
  }
  func.func @transform_9(%arg0: i32) -> (i32, i32, i32) {
    %c0_i32 = arith.constant 0 : i32
    %c0_i32_0 = arith.constant 0 : i32
    %c0_i32_1 = arith.constant 0 : i32
    %c0_i32_2 = arith.constant 0 : i32
    return %c0_i32, %c0_i32_0, %c0_i32_1 : i32, i32, i32
  }
  func.func @transform_10(%arg0: i32) -> (i32, i32, i32) {
    %c0_i32 = arith.constant 0 : i32
    %c0_i32_0 = arith.constant 0 : i32
    %c0_i32_1 = arith.constant 0 : i32
    %c0_i32_2 = arith.constant 0 : i32
    return %c0_i32, %c0_i32_0, %c0_i32_1 : i32, i32, i32
  }
  func.func @transform_11(%arg0: i32) -> (i32, i32, i32) {
    %c0_i32 = arith.constant 0 : i32
    %c0_i32_0 = arith.constant 0 : i32
    %c0_i32_1 = arith.constant 0 : i32
    %c0_i32_2 = arith.constant 0 : i32
    return %c0_i32, %c0_i32_0, %c0_i32_1 : i32, i32, i32
  }
  func.func @transform_12(%arg0: i32) -> (i32, i32, i32) {
    %c0_i32 = arith.constant 0 : i32
    %c0_i32_0 = arith.constant 0 : i32
    %c0_i32_1 = arith.constant 0 : i32
    %c0_i32_2 = arith.constant 0 : i32
    return %c0_i32, %c0_i32_0, %c0_i32_1 : i32, i32, i32
  }
  func.func @transform_13(%arg0: i32) -> (i32, i32, i32) {
    %c0_i32 = arith.constant 0 : i32
    %c0_i32_0 = arith.constant 0 : i32
    %c0_i32_1 = arith.constant 0 : i32
    %c0_i32_2 = arith.constant 0 : i32
    return %c0_i32, %c0_i32_0, %c0_i32_1 : i32, i32, i32
  }
  func.func @transform_14(%arg0: i32) -> (i32, i32, i32) {
    %c0_i32 = arith.constant 0 : i32
    %c0_i32_0 = arith.constant 0 : i32
    %c0_i32_1 = arith.constant 0 : i32
    %c0_i32_2 = arith.constant 0 : i32
    return %c0_i32, %c0_i32_0, %c0_i32_1 : i32, i32, i32
  }
  func.func @transform_15(%arg0: i32) -> (i32, i32, i32) {
    %c0_i32 = arith.constant 0 : i32
    %c0_i32_0 = arith.constant 0 : i32
    %c0_i32_1 = arith.constant 0 : i32
    %c0_i32_2 = arith.constant 0 : i32
    return %c0_i32, %c0_i32_0, %c0_i32_1 : i32, i32, i32
  }
  func.func @transform_16(%arg0: i32) -> (i32, i32, i32) {
    %c0_i32 = arith.constant 0 : i32
    %c0_i32_0 = arith.constant 0 : i32
    %c0_i32_1 = arith.constant 0 : i32
    %c0_i32_2 = arith.constant 0 : i32
    return %c0_i32, %c0_i32_0, %c0_i32_1 : i32, i32, i32
  }
  func.func @transform_17(%arg0: i32) -> (i32, i32, i32) {
    %c0_i32 = arith.constant 0 : i32
    %c0_i32_0 = arith.constant 0 : i32
    %c0_i32_1 = arith.constant 0 : i32
    %c0_i32_2 = arith.constant 0 : i32
    return %c0_i32, %c0_i32_0, %c0_i32_1 : i32, i32, i32
  }
  func.func @transform_18(%arg0: i32) -> (i32, i32) {
    %c0_i32 = arith.constant 0 : i32
    %c0_i32_0 = arith.constant 0 : i32
    %c0_i32_1 = arith.constant 0 : i32
    return %c0_i32, %c0_i32_0 : i32, i32
  }
  func.func @transform_19(%arg0: i32) -> (i32, i32) {
    %c0_i32 = arith.constant 0 : i32
    %c0_i32_0 = arith.constant 0 : i32
    %c0_i32_1 = arith.constant 0 : i32
    return %c0_i32, %c0_i32_0 : i32, i32
  }
  func.func @transform_20(%arg0: i32) -> (i32, i32) {
    %c0_i32 = arith.constant 0 : i32
    %c0_i32_0 = arith.constant 0 : i32
    %c0_i32_1 = arith.constant 0 : i32
    return %c0_i32, %c0_i32_0 : i32, i32
  }
  func.func @transform_21(%arg0: i32) -> (i32, i32) {
    %c0_i32 = arith.constant 0 : i32
    %c0_i32_0 = arith.constant 0 : i32
    %c0_i32_1 = arith.constant 0 : i32
    return %c0_i32, %c0_i32_0 : i32, i32
  }
  func.func @transform_22(%arg0: i32) -> (i32, i32) {
    %c0_i32 = arith.constant 0 : i32
    %c0_i32_0 = arith.constant 0 : i32
    %c0_i32_1 = arith.constant 0 : i32
    return %c0_i32, %c0_i32_0 : i32, i32
  }
}

</mosaic_0001>

<llo_original>
// kernel: emotion_classifier_forward.1
$region0: #{emotion_classifier_forward.1}
  #allocation0 [shape = 'u32[]', space=smem, size = 0x4, offset = 0x4, fixed_abs, tag = 'smem constant byte address 0x4 - core index']
  #allocation1 [shape = 'u32[144,128]{1,0:T(1,128)}', space=vmem, size = 0x12000, scoped, tag = 'internal scratch']
  %s0 = inlined_call_operand.vmem [shape: f32[16,32], index: 0, kind: input, shape index: {}]
  %s1 = inlined_call_operand.vmem [shape: f32[8,32], index: 1, kind: input, shape index: {}]
  %s2 = inlined_call_operand.vmem [shape: f32[1,32], index: 2, kind: input, shape index: {}]
  %s3 = inlined_call_operand.vmem [shape: f32[4,1,8], index: 3, kind: input, shape index: {}]
  %s4 = inlined_call_operand.vmem [shape: f32[1,32], index: 4, kind: input, shape index: {}]
  %s5 = inlined_call_operand.vmem [shape: f32[1,32], index: 5, kind: input, shape index: {}]
  %s6 = inlined_call_operand.vmem [shape: f32[2,32,96], index: 6, kind: input, shape index: {}]
  %s7 = inlined_call_operand.vmem [shape: f32[2,1,96], index: 7, kind: input, shape index: {}]
  %s8 = inlined_call_operand.vmem [shape: f32[2,32,32], index: 8, kind: input, shape index: {}]
  %s9 = inlined_call_operand.vmem [shape: f32[2,1,32], index: 9, kind: input, shape index: {}]
  %s10 = inlined_call_operand.vmem [shape: f32[2,1,32], index: 10, kind: input, shape index: {}]
  %s11 = inlined_call_operand.vmem [shape: f32[2,1,32], index: 11, kind: input, shape index: {}]
  %s12 = inlined_call_operand.vmem [shape: f32[2,32,64], index: 12, kind: input, shape index: {}]
  %s13 = inlined_call_operand.vmem [shape: f32[2,1,64], index: 13, kind: input, shape index: {}]
  %s14 = inlined_call_operand.vmem [shape: f32[2,64,32], index: 14, kind: input, shape index: {}]
  %s15 = inlined_call_operand.vmem [shape: f32[2,1,32], index: 15, kind: input, shape index: {}]
  %s16 = inlined_call_operand.vmem [shape: f32[2,1,32], index: 16, kind: input, shape index: {}]
  %s17 = inlined_call_operand.vmem [shape: f32[2,1,32], index: 17, kind: input, shape index: {}]
  %s18 = inlined_call_operand.vmem [shape: f32[32,32], index: 18, kind: input, shape index: {}]
  %s19 = inlined_call_operand.vmem [shape: f32[1,32], index: 19, kind: input, shape index: {}]
  %s20 = inlined_call_operand.vmem [shape: f32[32,4], index: 20, kind: input, shape index: {}]
  %s21 = inlined_call_operand.vmem [shape: f32[1,4], index: 21, kind: input, shape index: {}]
  %s22 = inlined_call_operand.hbm [shape: f32[2,4], index: 22, kind: output, shape index: {}]
  %s23 = sld [smem:[#allocation0]]
  $region98: #{emotion_classifier_forward.1} parent=0
    _
  %s25 = ssub.s32 1, %s23
  %s26 = scalar_select 0, %s25, %s23
  $region1: #{emotion_classifier_forward.1} parent=0
    #allocation2 [shape = 'u8[1024]{0}', space=vmem, size = 0x400, scoped, tag = 'output window, operand 0, single buffered']
    #allocation3 [shape = 's32[1]{0}', space=sflag, size = 0x4, scoped, tag = 'scoped memory for emotion_classifier_forward.1']
    %27 = vsyncpa [#allocation3], 0
    // Predicated region
    $region2: #{emotion_classifier_forward.1} parent=1 // pred_check
      _
    $region3: #{emotion_classifier_forward.1} parent=1 // pred_check_branch
      %29 = sbr.rel (0) target = $region5
    $region4: #{emotion_classifier_forward.1} parent=1 // pred_region
      _
    $region5: #{emotion_classifier_forward.1} parent=1 // pred_fallthru
      _
    // Predicated region
    $region6: #{emotion_classifier_forward.1} parent=1 // pred_check
      _
    $region7: #{emotion_classifier_forward.1} parent=1 // pred_check_branch
      %31 = sbr.rel (0) target = $region9
    $region8: #{emotion_classifier_forward.1} parent=1 // pred_region
      _
    $region9: #{emotion_classifier_forward.1} parent=1 // pred_fallthru
      _
    // Predicated region
    $region10: #{emotion_classifier_forward.1} parent=1 // pred_check
      _
    $region11: #{emotion_classifier_forward.1} parent=1 // pred_check_branch
      %33 = sbr.rel (0) target = $region13
    $region12: #{emotion_classifier_forward.1} parent=1 // pred_region
      _
    $region13: #{emotion_classifier_forward.1} parent=1 // pred_fallthru
      _
    // Predicated region
    $region14: #{emotion_classifier_forward.1} parent=1 // pred_check
      _
    $region15: #{emotion_classifier_forward.1} parent=1 // pred_check_branch
      %35 = sbr.rel (0) target = $region17
    $region16: #{emotion_classifier_forward.1} parent=1 // pred_region
      _
    $region17: #{emotion_classifier_forward.1} parent=1 // pred_fallthru
      _
    // Predicated region
    $region18: #{emotion_classifier_forward.1} parent=1 // pred_check
      _
    $region19: #{emotion_classifier_forward.1} parent=1 // pred_check_branch
      %37 = sbr.rel (0) target = $region21
    $region20: #{emotion_classifier_forward.1} parent=1 // pred_region
      _
    $region21: #{emotion_classifier_forward.1} parent=1 // pred_fallthru
      _
    // Predicated region
    $region22: #{emotion_classifier_forward.1} parent=1 // pred_check
      _
    $region23: #{emotion_classifier_forward.1} parent=1 // pred_check_branch
      %39 = sbr.rel (0) target = $region25
    $region24: #{emotion_classifier_forward.1} parent=1 // pred_region
      _
    $region25: #{emotion_classifier_forward.1} parent=1 // pred_fallthru
      _
    // Predicated region
    $region26: #{emotion_classifier_forward.1} parent=1 // pred_check
      _
    $region27: #{emotion_classifier_forward.1} parent=1 // pred_check_branch
      %41 = sbr.rel (0) target = $region29
    $region28: #{emotion_classifier_forward.1} parent=1 // pred_region
      _
    $region29: #{emotion_classifier_forward.1} parent=1 // pred_fallthru
      _
    // Predicated region
    $region30: #{emotion_classifier_forward.1} parent=1 // pred_check
      _
    $region31: #{emotion_classifier_forward.1} parent=1 // pred_check_branch
      %43 = sbr.rel (0) target = $region33
    $region32: #{emotion_classifier_forward.1} parent=1 // pred_region
      _
    $region33: #{emotion_classifier_forward.1} parent=1 // pred_fallthru
      _
    // Predicated region
    $region34: #{emotion_classifier_forward.1} parent=1 // pred_check
      _
    $region35: #{emotion_classifier_forward.1} parent=1 // pred_check_branch
      %45 = sbr.rel (0) target = $region37
    $region36: #{emotion_classifier_forward.1} parent=1 // pred_region
      _
    $region37: #{emotion_classifier_forward.1} parent=1 // pred_fallthru
      _
    // Predicated region
    $region38: #{emotion_classifier_forward.1} parent=1 // pred_check
      _
    $region39: #{emotion_classifier_forward.1} parent=1 // pred_check_branch
      %47 = sbr.rel (0) target = $region41
    $region40: #{emotion_classifier_forward.1} parent=1 // pred_region
      _
    $region41: #{emotion_classifier_forward.1} parent=1 // pred_fallthru
      _
    // Predicated region
    $region42: #{emotion_classifier_forward.1} parent=1 // pred_check
      _
    $region43: #{emotion_classifier_forward.1} parent=1 // pred_check_branch
      %49 = sbr.rel (0) target = $region45
    $region44: #{emotion_classifier_forward.1} parent=1 // pred_region
      _
    $region45: #{emotion_classifier_forward.1} parent=1 // pred_fallthru
      _
    // Predicated region
    $region46: #{emotion_classifier_forward.1} parent=1 // pred_check
      _
    $region47: #{emotion_classifier_forward.1} parent=1 // pred_check_branch
      %51 = sbr.rel (0) target = $region49
    $region48: #{emotion_classifier_forward.1} parent=1 // pred_region
      _
    $region49: #{emotion_classifier_forward.1} parent=1 // pred_fallthru
      _
    // Predicated region
    $region50: #{emotion_classifier_forward.1} parent=1 // pred_check
      _
    $region51: #{emotion_classifier_forward.1} parent=1 // pred_check_branch
      %53 = sbr.rel (0) target = $region53
    $region52: #{emotion_classifier_forward.1} parent=1 // pred_region
      _
    $region53: #{emotion_classifier_forward.1} parent=1 // pred_fallthru
      _
    // Predicated region
    $region54: #{emotion_classifier_forward.1} parent=1 // pred_check
      _
    $region55: #{emotion_classifier_forward.1} parent=1 // pred_check_branch
      %55 = sbr.rel (0) target = $region57
    $region56: #{emotion_classifier_forward.1} parent=1 // pred_region
      _
    $region57: #{emotion_classifier_forward.1} parent=1 // pred_fallthru
      _
    // Predicated region
    $region58: #{emotion_classifier_forward.1} parent=1 // pred_check
      _
    $region59: #{emotion_classifier_forward.1} parent=1 // pred_check_branch
      %57 = sbr.rel (0) target = $region61
    $region60: #{emotion_classifier_forward.1} parent=1 // pred_region
      _
    $region61: #{emotion_classifier_forward.1} parent=1 // pred_fallthru
      _
    // Predicated region
    $region62: #{emotion_classifier_forward.1} parent=1 // pred_check
      _
    $region63: #{emotion_classifier_forward.1} parent=1 // pred_check_branch
      %59 = sbr.rel (0) target = $region65
    $region64: #{emotion_classifier_forward.1} parent=1 // pred_region
      _
    $region65: #{emotion_classifier_forward.1} parent=1 // pred_fallthru
      _
    // Predicated region
    $region66: #{emotion_classifier_forward.1} parent=1 // pred_check
      _
    $region67: #{emotion_classifier_forward.1} parent=1 // pred_check_branch
      %61 = sbr.rel (0) target = $region69
    $region68: #{emotion_classifier_forward.1} parent=1 // pred_region
      _
    $region69: #{emotion_classifier_forward.1} parent=1 // pred_fallthru
      _
    // Predicated region
    $region70: #{emotion_classifier_forward.1} parent=1 // pred_check
      _
    $region71: #{emotion_classifier_forward.1} parent=1 // pred_check_branch
      %63 = sbr.rel (0) target = $region73
    $region72: #{emotion_classifier_forward.1} parent=1 // pred_region
      _
    $region73: #{emotion_classifier_forward.1} parent=1 // pred_fallthru
      _
    // Predicated region
    $region74: #{emotion_classifier_forward.1} parent=1 // pred_check
      _
    $region75: #{emotion_classifier_forward.1} parent=1 // pred_check_branch
      %65 = sbr.rel (0) target = $region77
    $region76: #{emotion_classifier_forward.1} parent=1 // pred_region
      _
    $region77: #{emotion_classifier_forward.1} parent=1 // pred_fallthru
      _
    // Predicated region
    $region78: #{emotion_classifier_forward.1} parent=1 // pred_check
      _
    $region79: #{emotion_classifier_forward.1} parent=1 // pred_check_branch
      %67 = sbr.rel (0) target = $region81
    $region80: #{emotion_classifier_forward.1} parent=1 // pred_region
      _
    $region81: #{emotion_classifier_forward.1} parent=1 // pred_fallthru
      _
    // Predicated region
    $region82: #{emotion_classifier_forward.1} parent=1 // pred_check
      _
    $region83: #{emotion_classifier_forward.1} parent=1 // pred_check_branch
      %69 = sbr.rel (0) target = $region85
    $region84: #{emotion_classifier_forward.1} parent=1 // pred_region
      _
    $region85: #{emotion_classifier_forward.1} parent=1 // pred_fallthru
      _
    // Predicated region
    $region86: #{emotion_classifier_forward.1} parent=1 // pred_check
      _
    $region87: #{emotion_classifier_forward.1} parent=1 // pred_check_branch
      %71 = sbr.rel (0) target = $region89
    $region88: #{emotion_classifier_forward.1} parent=1 // pred_region
      _
    $region89: #{emotion_classifier_forward.1} parent=1 // pred_fallthru
      _
    %v72 = vld [vmem:[%s1] sm:$0xff]
    %v73 = vld [vmem:[%s0] sm:$0xff]
    %v74 = vld [vmem:[%s0 + $0x8] sm:$0xff]
    %v75 = vadd.f32 %v73, %v72
    %v76 = vadd.f32 %v74, %v72
    %v77 = vld [vmem:[%s2] sm:$0x1]
    %v79 = vlaneseq
    %v80 = vshrl.u32 %v79, 7
    %v81 = vsub.s32 0, %v80
    %v82 = vrot.slane %v77, %v81
    %v84 = vadd.f32 %v75, %v82
    %v85 = vadd.f32 %v76, %v82
    %v86 = vld [vmem:[%s4] sm:$0x1]
    %v87 = vld [vmem:[%s5] sm:$0x1]
    %vm88 = vcmask 261120
    %v89 = vsel %vm88, %v84, 0.0
    %90 = vadd.xlane.f32.xlu0 %v89
    %v91 = vpop.xlane.xlu0 %90
    %v92 = vsel %vm88, %v85, 0.0
    %93 = vadd.xlane.f32.xlu0 %v92
    %v94 = vpop.xlane.xlu0 %93
    %v95 = vrcp.pop 32.0
    %v96 = vmul.f32 %v91, %v95
    %v97 = vmul.f32 %v94, %v95
    %v98 = vsub.f32 %v84, %v96
    %v99 = vsub.f32 %v85, %v97
    %v100 = vmul.f32 %v98, %v98
    %v101 = vmul.f32 %v99, %v99
    %v102 = vsel %vm88, %v100, 0.0
    %103 = vadd.xlane.f32.xlu0 %v102
    %v104 = vpop.xlane.xlu0 %103
    %v105 = vsel %vm88, %v101, 0.0
    %106 = vadd.xlane.f32.xlu0 %v105
    %v107 = vpop.xlane.xlu0 %106
    %v108 = vmul.f32 %v104, %v95
    %v109 = vmul.f32 %v107, %v95
    %v110 = vadd.f32 %v108, 1e-12
    %v111 = vadd.f32 %v109, 1e-12
    %v112 = vrsqrt.pop %v110
    %v113 = vrsqrt.pop %v111
    %v114 = vmul.f32 %v98, %v112
    %v115 = vmul.f32 %v99, %v113
    %v117 = vlaneseq
    %v118 = vshrl.u32 %v117, 7
    %v119 = vsub.s32 0, %v118
    %v120 = vrot.slane %v86, %v119
    %v122 = vmul.f32 %v114, %v120
    %v123 = vmul.f32 %v115, %v120
    %v125 = vlaneseq
    %v126 = vshrl.u32 %v125, 7
    %v127 = vsub.s32 0, %v126
    %v128 = vrot.slane %v87, %v127
    %v130 = vadd.f32 %v122, %v128
    %v131 = vadd.f32 %v123, %v128
    %v132 = vld [vmem:[%s3] sm:$0x1]
    %v133 = vld [vmem:[%s3 + $0x1] sm:$0x1]
    %v134 = vld [vmem:[%s3 + $0x2] sm:$0x1]
    %v135 = vld [vmem:[%s3 + $0x3] sm:$0x1]
    %v136 = vld [vmem:[%s6] sm:$0xff]
    %v137 = vld [vmem:[%s6 + $0x8] sm:$0xff]
    %v138 = vld [vmem:[%s6 + $0x10] sm:$0xff]
    %v139 = vld [vmem:[%s6 + $0x18] sm:$0xff]
    %v140 = vld [vmem:[%s7] sm:$0x1]
    %v142 = vlaneseq
    %v143 = vshrl.u32 %v142, 7
    %v144 = vsub.s32 0, %v143
    %v145 = vrot.slane %v140, %v144
    %v148 = vsel %vm88, %v130, 0
    %v151 = vsel %vm88, %v131, 0
    %153 = vmatprep.subr.mxu0 0.0
    %154 = vmatpush1.msra.mxu0 0.0
    %155 = vmatprep.subr.mxu0 0.0
    %156 = vmatpush1.msra.mxu0 0.0
    %157 = vmatprep.subr.mxu0 0.0
    %158 = vmatpush1.msra.mxu0 0.0
    %159 = vmatprep.subr.mxu0 0.0
    %160 = vmatpush1.msra.mxu0 0.0
    %161 = vmatprep.subr.mxu0 0.0
    %162 = vmatpush1.msra.mxu0 0.0
    %163 = vmatprep.subr.mxu0 0.0
    %164 = vmatpush1.msra.mxu0 0.0
    %165 = vmatprep.subr.mxu0 0.0
    %166 = vmatpush1.msra.mxu0 0.0
    %167 = vmatprep.subr.mxu0 0.0
    %168 = vmatpush1.msra.mxu0 0.0
    %169 = vmatprep.subr.mxu0 0.0
    %170 = vmatpush1.msra.mxu0 0.0
    %171 = vmatprep.subr.mxu0 0.0
    %172 = vmatpush1.msra.mxu0 0.0
    %173 = vmatprep.subr.mxu0 0.0
    %174 = vmatpush1.msra.mxu0 0.0
    %175 = vmatprep.subr.mxu0 0.0
    %176 = vmatpush1.msra.mxu0 0.0
    %177 = vmatprep.subr.mxu0 0.0
    %178 = vmatpush1.msra.mxu0 %v139
    %179 = vmatprep.subr.mxu0 0.0
    %180 = vmatpush1.msra.mxu0 %v138
    %181 = vmatprep.subr.mxu0 0.0
    %182 = vmatpush1.msra.mxu0 %v137
    %183 = vmatprep.subr.mxu0 0.0
    %184 = vmatpush1.msra.mxu0 %v136
    %185 = vmatprep.subr.mxu0 0.0
    %186 = vmatpush2.msra.mxu0 0.0
    %187 = vmatprep.subr.mxu0 0.0
    %188 = vmatpush2.msra.mxu0 0.0
    %189 = vmatprep.subr.mxu0 0.0
    %190 = vmatpush2.msra.mxu0 0.0
    %191 = vmatprep.subr.mxu0 0.0
    %192 = vmatpush2.msra.mxu0 0.0
    %193 = vmatprep.subr.mxu0 0.0
    %194 = vmatpush2.msra.mxu0 0.0
    %195 = vmatprep.subr.mxu0 0.0
    %196 = vmatpush2.msra.mxu0 0.0
    %197 = vmatprep.subr.mxu0 0.0
    %198 = vmatpush2.msra.mxu0 0.0
    %199 = vmatprep.subr.mxu0 0.0
    %200 = vmatpush2.msra.mxu0 0.0
    %201 = vmatprep.subr.mxu0 0.0
    %202 = vmatpush2.msra.mxu0 0.0
    %203 = vmatprep.subr.mxu0 0.0
    %204 = vmatpush2.msra.mxu0 0.0
    %205 = vmatprep.subr.mxu0 0.0
    %206 = vmatpush2.msra.mxu0 0.0
    %207 = vmatprep.subr.mxu0 0.0
    %208 = vmatpush2.msra.mxu0 0.0
    %209 = vmatprep.subr.mxu0 0.0
    %210 = vmatpush2.msra.mxu0 0.0
    %211 = vmatprep.subr.mxu0 0.0
    %212 = vmatpush2.msra.mxu0 0.0
    %213 = vmatprep.subr.mxu0 0.0
    %214 = vmatpush2.msra.mxu0 0.0
    %215 = vmatprep.subr.mxu0 0.0
    %216 = vmatpush2.msra.mxu0 0.0
    %217 = vmatprep.mubr.f32.mxu0 0.0
    %218 = vmatmul.mubr.f32.gmra.mxu0 %v148
    %v219 = vpop.f32.mrf.mxu0
    %v220 = vadd.f32 %v145, %v219
    %v221 = vpop.f32.mrf.mxu0
    %222 = vmatprep.mubr.f32.mxu0 0.0
    %223 = vmatmul.mubr.f32.gmra.mxu0 %v151
    %v224 = vpop.f32.mrf.mxu0
    %v225 = vadd.f32 %v145, %v224
    %v226 = vpop.f32.mrf.mxu0
    %227 = vdwg.mxu0
    %229 = vrot.lane.b32.xlu0 %v220, 112
    %v230 = vpop.permute.xlu0 %229
    %232 = vrot.lane.b32.xlu0 %v225, 112
    %v233 = vpop.permute.xlu0 %232
    %234 = vrot.lane.b32.xlu0 %v220, 96
    %v235 = vpop.permute.xlu0 %234
    %vm236 = vcmask 130048
    %v237 = vsel %vm236, %v220, 0
    %v239 = vsel %vm236, %v235, 0
    %241 = vmatprep.subr.mxu0 0.0
    %242 = vmatpush1.xpose.msra.mxu0 0.0
    %243 = vmatprep.subr.mxu0 0.0
    %244 = vmatpush1.xpose.msra.mxu0 0.0
    %245 = vmatprep.subr.mxu0 0.0
    %246 = vmatpush1.xpose.msra.mxu0 0.0
    %247 = vmatprep.subr.mxu0 0.0
    %248 = vmatpush1.xpose.msra.mxu0 0.0
    %249 = vmatprep.subr.mxu0 0.0
    %250 = vmatpush1.xpose.msra.mxu0 0.0
    %251 = vmatprep.subr.mxu0 0.0
    %252 = vmatpush1.xpose.msra.mxu0 0.0
    %253 = vmatprep.subr.mxu0 0.0
    %254 = vmatpush1.xpose.msra.mxu0 0.0
    %255 = vmatprep.subr.mxu0 0.0
    %256 = vmatpush1.xpose.msra.mxu0 0.0
    %257 = vmatprep.subr.mxu0 0.0
    %258 = vmatpush1.xpose.msra.mxu0 0.0
    %259 = vmatprep.subr.mxu0 0.0
    %260 = vmatpush1.xpose.msra.mxu0 0.0
    %261 = vmatprep.subr.mxu0 0.0
    %262 = vmatpush1.xpose.msra.mxu0 0.0
    %263 = vmatprep.subr.mxu0 0.0
    %264 = vmatpush1.xpose.msra.mxu0 0.0
    %265 = vmatprep.subr.mxu0 0.0
    %266 = vmatpush1.xpose.msra.mxu0 0.0
    %267 = vmatprep.subr.mxu0 0.0
    %268 = vmatpush1.xpose.msra.mxu0 0.0
    %269 = vmatprep.subr.mxu0 0.0
    %270 = vmatpush1.xpose.msra.mxu0 0.0
    %271 = vmatprep.subr.mxu0 0.0
    %272 = vmatpush1.xpose.msra.mxu0 %v239
    %273 = vmatprep.subr.mxu0 0.0
    %274 = vmatpush2.xpose.msra.mxu0 0.0
    %275 = vmatprep.subr.mxu0 0.0
    %276 = vmatpush2.xpose.msra.mxu0 0.0
    %277 = vmatprep.subr.mxu0 0.0
    %278 = vmatpush2.xpose.msra.mxu0 0.0
    %279 = vmatprep.subr.mxu0 0.0
    %280 = vmatpush2.xpose.msra.mxu0 0.0
    %281 = vmatprep.subr.mxu0 0.0
    %282 = vmatpush2.xpose.msra.mxu0 0.0
    %283 = vmatprep.subr.mxu0 0.0
    %284 = vmatpush2.xpose.msra.mxu0 0.0
    %285 = vmatprep.subr.mxu0 0.0
    %286 = vmatpush2.xpose.msra.mxu0 0.0
    %287 = vmatprep.subr.mxu0 0.0
    %288 = vmatpush2.xpose.msra.mxu0 0.0
    %289 = vmatprep.subr.mxu0 0.0
    %290 = vmatpush2.xpose.msra.mxu0 0.0
    %291 = vmatprep.subr.mxu0 0.0
    %292 = vmatpush2.xpose.msra.mxu0 0.0
    %293 = vmatprep.subr.mxu0 0.0
    %294 = vmatpush2.xpose.msra.mxu0 0.0
    %295 = vmatprep.subr.mxu0 0.0
    %296 = vmatpush2.xpose.msra.mxu0 0.0
    %297 = vmatprep.subr.mxu0 0.0
    %298 = vmatpush2.xpose.msra.mxu0 0.0
    %299 = vmatprep.subr.mxu0 0.0
    %300 = vmatpush2.xpose.msra.mxu0 0.0
    %301 = vmatprep.subr.mxu0 0.0
    %302 = vmatpush2.xpose.msra.mxu0 0.0
    %303 = vmatprep.subr.mxu0 0.0
    %304 = vmatpush2.xpose.msra.mxu0 0.0
    %305 = vmatprep.mubr.f32.mxu0 0.0
    %306 = vmatmul.mubr.f32.gmra.mxu0 %v237
    %v307 = vpop.f32.mrf.mxu0
    %v308 = vadd.f32 0.0, %v307
    %v309 = vpop.f32.mrf.mxu0
    %310 = vdwg.mxu0
    %311 = vrot.lane.b32.xlu0 %v225, 96
    %v312 = vpop.permute.xlu0 %311
    %v313 = vsel %vm236, %v225, 0
    %v315 = vsel %vm236, %v312, 0
    %317 = vmatprep.subr.mxu0 0.0
    %318 = vmatpush1.xpose.msra.mxu0 0.0
    %319 = vmatprep.subr.mxu0 0.0
    %320 = vmatpush1.xpose.msra.mxu0 0.0
    %321 = vmatprep.subr.mxu0 0.0
    %322 = vmatpush1.xpose.msra.mxu0 0.0
    %323 = vmatprep.subr.mxu0 0.0
    %324 = vmatpush1.xpose.msra.mxu0 0.0
    %325 = vmatprep.subr.mxu0 0.0
    %326 = vmatpush1.xpose.msra.mxu0 0.0
    %327 = vmatprep.subr.mxu0 0.0
    %328 = vmatpush1.xpose.msra.mxu0 0.0
    %329 = vmatprep.subr.mxu0 0.0
    %330 = vmatpush1.xpose.msra.mxu0 0.0
    %331 = vmatprep.subr.mxu0 0.0
    %332 = vmatpush1.xpose.msra.mxu0 0.0
    %333 = vmatprep.subr.mxu0 0.0
    %334 = vmatpush1.xpose.msra.mxu0 0.0
    %335 = vmatprep.subr.mxu0 0.0
    %336 = vmatpush1.xpose.msra.mxu0 0.0
    %337 = vmatprep.subr.mxu0 0.0
    %338 = vmatpush1.xpose.msra.mxu0 0.0
    %339 = vmatprep.subr.mxu0 0.0
    %340 = vmatpush1.xpose.msra.mxu0 0.0
    %341 = vmatprep.subr.mxu0 0.0
    %342 = vmatpush1.xpose.msra.mxu0 0.0
    %343 = vmatprep.subr.mxu0 0.0
    %344 = vmatpush1.xpose.msra.mxu0 0.0
    %345 = vmatprep.subr.mxu0 0.0
    %346 = vmatpush1.xpose.msra.mxu0 0.0
    %347 = vmatprep.subr.mxu0 0.0
    %348 = vmatpush1.xpose.msra.mxu0 %v315
    %349 = vmatprep.subr.mxu0 0.0
    %350 = vmatpush2.xpose.msra.mxu0 0.0
    %351 = vmatprep.subr.mxu0 0.0
    %352 = vmatpush2.xpose.msra.mxu0 0.0
    %353 = vmatprep.subr.mxu0 0.0
    %354 = vmatpush2.xpose.msra.mxu0 0.0
    %355 = vmatprep.subr.mxu0 0.0
    %356 = vmatpush2.xpose.msra.mxu0 0.0
    %357 = vmatprep.subr.mxu0 0.0
    %358 = vmatpush2.xpose.msra.mxu0 0.0
    %359 = vmatprep.subr.mxu0 0.0
    %360 = vmatpush2.xpose.msra.mxu0 0.0
    %361 = vmatprep.subr.mxu0 0.0
    %362 = vmatpush2.xpose.msra.mxu0 0.0
    %363 = vmatprep.subr.mxu0 0.0
    %364 = vmatpush2.xpose.msra.mxu0 0.0
    %365 = vmatprep.subr.mxu0 0.0
    %366 = vmatpush2.xpose.msra.mxu0 0.0
    %367 = vmatprep.subr.mxu0 0.0
    %368 = vmatpush2.xpose.msra.mxu0 0.0
    %369 = vmatprep.subr.mxu0 0.0
    %370 = vmatpush2.xpose.msra.mxu0 0.0
    %371 = vmatprep.subr.mxu0 0.0
    %372 = vmatpush2.xpose.msra.mxu0 0.0
    %373 = vmatprep.subr.mxu0 0.0
    %374 = vmatpush2.xpose.msra.mxu0 0.0
    %375 = vmatprep.subr.mxu0 0.0
    %376 = vmatpush2.xpose.msra.mxu0 0.0
    %377 = vmatprep.subr.mxu0 0.0
    %378 = vmatpush2.xpose.msra.mxu0 0.0
    %379 = vmatprep.subr.mxu0 0.0
    %380 = vmatpush2.xpose.msra.mxu0 0.0
    %381 = vmatprep.mubr.f32.mxu0 0.0
    %382 = vmatmul.mubr.f32.gmra.mxu0 %v313
    %v383 = vpop.f32.mrf.mxu0
    %v384 = vadd.f32 0.0, %v383
    %v385 = vpop.f32.mrf.mxu0
    %386 = vdwg.mxu0
    %387 = vrot.lane.b32.xlu0 %v230, 96
    %v388 = vpop.permute.xlu0 %387
    %v389 = vsel %vm236, %v230, 0
    %v391 = vsel %vm236, %v388, 0
    %393 = vmatprep.subr.mxu0 0.0
    %394 = vmatpush1.xpose.msra.mxu0 0.0
    %395 = vmatprep.subr.mxu0 0.0
    %396 = vmatpush1.xpose.msra.mxu0 0.0
    %397 = vmatprep.subr.mxu0 0.0
    %398 = vmatpush1.xpose.msra.mxu0 0.0
    %399 = vmatprep.subr.mxu0 0.0
    %400 = vmatpush1.xpose.msra.mxu0 0.0
    %401 = vmatprep.subr.mxu0 0.0
    %402 = vmatpush1.xpose.msra.mxu0 0.0
    %403 = vmatprep.subr.mxu0 0.0
    %404 = vmatpush1.xpose.msra.mxu0 0.0
    %405 = vmatprep.subr.mxu0 0.0
    %406 = vmatpush1.xpose.msra.mxu0 0.0
    %407 = vmatprep.subr.mxu0 0.0
    %408 = vmatpush1.xpose.msra.mxu0 0.0
    %409 = vmatprep.subr.mxu0 0.0
    %410 = vmatpush1.xpose.msra.mxu0 0.0
    %411 = vmatprep.subr.mxu0 0.0
    %412 = vmatpush1.xpose.msra.mxu0 0.0
    %413 = vmatprep.subr.mxu0 0.0
    %414 = vmatpush1.xpose.msra.mxu0 0.0
    %415 = vmatprep.subr.mxu0 0.0
    %416 = vmatpush1.xpose.msra.mxu0 0.0
    %417 = vmatprep.subr.mxu0 0.0
    %418 = vmatpush1.xpose.msra.mxu0 0.0
    %419 = vmatprep.subr.mxu0 0.0
    %420 = vmatpush1.xpose.msra.mxu0 0.0
    %421 = vmatprep.subr.mxu0 0.0
    %422 = vmatpush1.xpose.msra.mxu0 0.0
    %423 = vmatprep.subr.mxu0 0.0
    %424 = vmatpush1.xpose.msra.mxu0 %v391
    %425 = vmatprep.subr.mxu0 0.0
    %426 = vmatpush2.xpose.msra.mxu0 0.0
    %427 = vmatprep.subr.mxu0 0.0
    %428 = vmatpush2.xpose.msra.mxu0 0.0
    %429 = vmatprep.subr.mxu0 0.0
    %430 = vmatpush2.xpose.msra.mxu0 0.0
    %431 = vmatprep.subr.mxu0 0.0
    %432 = vmatpush2.xpose.msra.mxu0 0.0
    %433 = vmatprep.subr.mxu0 0.0
    %434 = vmatpush2.xpose.msra.mxu0 0.0
    %435 = vmatprep.subr.mxu0 0.0
    %436 = vmatpush2.xpose.msra.mxu0 0.0
    %437 = vmatprep.subr.mxu0 0.0
    %438 = vmatpush2.xpose.msra.mxu0 0.0
    %439 = vmatprep.subr.mxu0 0.0
    %440 = vmatpush2.xpose.msra.mxu0 0.0
    %441 = vmatprep.subr.mxu0 0.0
    %442 = vmatpush2.xpose.msra.mxu0 0.0
    %443 = vmatprep.subr.mxu0 0.0
    %444 = vmatpush2.xpose.msra.mxu0 0.0
    %445 = vmatprep.subr.mxu0 0.0
    %446 = vmatpush2.xpose.msra.mxu0 0.0
    %447 = vmatprep.subr.mxu0 0.0
    %448 = vmatpush2.xpose.msra.mxu0 0.0
    %449 = vmatprep.subr.mxu0 0.0
    %450 = vmatpush2.xpose.msra.mxu0 0.0
    %451 = vmatprep.subr.mxu0 0.0
    %452 = vmatpush2.xpose.msra.mxu0 0.0
    %453 = vmatprep.subr.mxu0 0.0
    %454 = vmatpush2.xpose.msra.mxu0 0.0
    %455 = vmatprep.subr.mxu0 0.0
    %456 = vmatpush2.xpose.msra.mxu0 0.0
    %457 = vmatprep.mubr.f32.mxu0 0.0
    %458 = vmatmul.mubr.f32.gmra.mxu0 %v389
    %v459 = vpop.f32.mrf.mxu0
    %v460 = vadd.f32 0.0, %v459
    %v461 = vpop.f32.mrf.mxu0
    %462 = vdwg.mxu0
    %463 = vrot.lane.b32.xlu0 %v233, 96
    %v464 = vpop.permute.xlu0 %463
    %v465 = vsel %vm236, %v233, 0
    %v467 = vsel %vm236, %v464, 0
    %469 = vmatprep.subr.mxu0 0.0
    %470 = vmatpush1.xpose.msra.mxu0 0.0
    %471 = vmatprep.subr.mxu0 0.0
    %472 = vmatpush1.xpose.msra.mxu0 0.0
    %473 = vmatprep.subr.mxu0 0.0
    %474 = vmatpush1.xpose.msra.mxu0 0.0
    %475 = vmatprep.subr.mxu0 0.0
    %476 = vmatpush1.xpose.msra.mxu0 0.0
    %477 = vmatprep.subr.mxu0 0.0
    %478 = vmatpush1.xpose.msra.mxu0 0.0
    %479 = vmatprep.subr.mxu0 0.0
    %480 = vmatpush1.xpose.msra.mxu0 0.0
    %481 = vmatprep.subr.mxu0 0.0
    %482 = vmatpush1.xpose.msra.mxu0 0.0
    %483 = vmatprep.subr.mxu0 0.0
    %484 = vmatpush1.xpose.msra.mxu0 0.0
    %485 = vmatprep.subr.mxu0 0.0
    %486 = vmatpush1.xpose.msra.mxu0 0.0
    %487 = vmatprep.subr.mxu0 0.0
    %488 = vmatpush1.xpose.msra.mxu0 0.0
    %489 = vmatprep.subr.mxu0 0.0
    %490 = vmatpush1.xpose.msra.mxu0 0.0
    %491 = vmatprep.subr.mxu0 0.0
    %492 = vmatpush1.xpose.msra.mxu0 0.0
    %493 = vmatprep.subr.mxu0 0.0
    %494 = vmatpush1.xpose.msra.mxu0 0.0
    %495 = vmatprep.subr.mxu0 0.0
    %496 = vmatpush1.xpose.msra.mxu0 0.0
    %497 = vmatprep.subr.mxu0 0.0
    %498 = vmatpush1.xpose.msra.mxu0 0.0
    %499 = vmatprep.subr.mxu0 0.0
    %500 = vmatpush1.xpose.msra.mxu0 %v467
    %501 = vmatprep.subr.mxu0 0.0
    %502 = vmatpush2.xpose.msra.mxu0 0.0
    %503 = vmatprep.subr.mxu0 0.0
    %504 = vmatpush2.xpose.msra.mxu0 0.0
    %505 = vmatprep.subr.mxu0 0.0
    %506 = vmatpush2.xpose.msra.mxu0 0.0
    %507 = vmatprep.subr.mxu0 0.0
    %508 = vmatpush2.xpose.msra.mxu0 0.0
    %509 = vmatprep.subr.mxu0 0.0
    %510 = vmatpush2.xpose.msra.mxu0 0.0
    %511 = vmatprep.subr.mxu0 0.0
    %512 = vmatpush2.xpose.msra.mxu0 0.0
    %513 = vmatprep.subr.mxu0 0.0
    %514 = vmatpush2.xpose.msra.mxu0 0.0
    %515 = vmatprep.subr.mxu0 0.0
    %516 = vmatpush2.xpose.msra.mxu0 0.0
    %517 = vmatprep.subr.mxu0 0.0
    %518 = vmatpush2.xpose.msra.mxu0 0.0
    %519 = vmatprep.subr.mxu0 0.0
    %520 = vmatpush2.xpose.msra.mxu0 0.0
    %521 = vmatprep.subr.mxu0 0.0
    %522 = vmatpush2.xpose.msra.mxu0 0.0
    %523 = vmatprep.subr.mxu0 0.0
    %524 = vmatpush2.xpose.msra.mxu0 0.0
    %525 = vmatprep.subr.mxu0 0.0
    %526 = vmatpush2.xpose.msra.mxu0 0.0
    %527 = vmatprep.subr.mxu0 0.0
    %528 = vmatpush2.xpose.msra.mxu0 0.0
    %529 = vmatprep.subr.mxu0 0.0
    %530 = vmatpush2.xpose.msra.mxu0 0.0
    %531 = vmatprep.subr.mxu0 0.0
    %532 = vmatpush2.xpose.msra.mxu0 0.0
    %533 = vmatprep.mubr.f32.mxu0 0.0
    %534 = vmatmul.mubr.f32.gmra.mxu0 %v465
    %v535 = vpop.f32.mrf.mxu0
    %v536 = vadd.f32 0.0, %v535
    %v537 = vpop.f32.mrf.mxu0
    %538 = vdwg.mxu0
    %v539 = vmul.f32 %v308, 0.25
    %v540 = vmul.f32 %v384, 0.25
    %v541 = vmul.f32 %v460, 0.25
    %v542 = vmul.f32 %v536, 0.25
    %v547 = vlaneseq
    %v548 = vshrl.u32 %v547, 7
    %v549 = vsub.s32 0, %v548
    %v550 = vrot.slane %v132, %v549
    %v551 = vlaneseq
    %v552 = vshrl.u32 %v551, 7
    %v553 = vsub.s32 0, %v552
    %v554 = vrot.slane %v133, %v553
    %v555 = vlaneseq
    %v556 = vshrl.u32 %v555, 7
    %v557 = vsub.s32 0, %v556
    %v558 = vrot.slane %v134, %v557
    %v559 = vlaneseq
    %v560 = vshrl.u32 %v559, 7
    %v561 = vsub.s32 0, %v560
    %v562 = vrot.slane %v135, %v561
    %v567 = vadd.f32 %v539, %v550
    %v568 = vadd.f32 %v540, %v554
    %v569 = vadd.f32 %v541, %v558
    %v570 = vadd.f32 %v542, %v562
    %vm571 = vcmask 64512
    %v572 = vsel %vm571, %v567, -inf
    %573 = vmax.xlane.f32.xlu0 %v572
    %v574 = vpop.xlane.xlu0 %573
    %v575 = vsel %vm571, %v568, -inf
    %576 = vmax.xlane.f32.xlu0 %v575
    %v577 = vpop.xlane.xlu0 %576
    %v578 = vsel %vm571, %v569, -inf
    %579 = vmax.xlane.f32.xlu0 %v578
    %v580 = vpop.xlane.xlu0 %579
    %v581 = vsel %vm571, %v570, -inf
    %582 = vmax.xlane.f32.xlu0 %v581
    %v583 = vpop.xlane.xlu0 %582
    %v584 = vsub.f32 %v567, %v574
    %v585 = vsub.f32 %v568, %v577
    %v586 = vsub.f32 %v569, %v580
    %v587 = vsub.f32 %v570, %v583
    %v588 = vmul.f32 %v584, 1.442695
    %v589 = vpow.pop %v588
    %v590 = vmul.f32 %v585, 1.442695
    %v591 = vpow.pop %v590
    %v592 = vmul.f32 %v586, 1.442695
    %v593 = vpow.pop %v592
    %v594 = vmul.f32 %v587, 1.442695
    %v595 = vpow.pop %v594
    %v596 = vsel %vm571, %v589, 0.0
    %597 = vadd.xlane.f32.xlu0 %v596
    %v598 = vpop.xlane.xlu0 %597
    %v599 = vsel %vm571, %v591, 0.0
    %600 = vadd.xlane.f32.xlu0 %v599
    %v601 = vpop.xlane.xlu0 %600
    %v602 = vsel %vm571, %v593, 0.0
    %603 = vadd.xlane.f32.xlu0 %v602
    %v604 = vpop.xlane.xlu0 %603
    %v605 = vsel %vm571, %v595, 0.0
    %606 = vadd.xlane.f32.xlu0 %v605
    %v607 = vpop.xlane.xlu0 %606
    %v608 = vrcp.pop %v598
    %v609 = vrcp.pop %v601
    %v610 = vrcp.pop %v604
    %v611 = vrcp.pop %v607
    %v612 = vmul.f32 %v589, %v608
    %v613 = vmul.f32 %v591, %v609
    %v614 = vmul.f32 %v593, %v610
    %v615 = vmul.f32 %v595, %v611
    %616 = vrot.lane.b32.xlu0 %v220, 64
    %v617 = vpop.permute.xlu0 %616
    %v620 = vsel %vm571, %v612, 0
    %622 = vmatprep.subr.mxu0 0.0
    %623 = vmatpush1.msra.mxu0 0.0
    %624 = vmatprep.subr.mxu0 0.0
    %625 = vmatpush1.msra.mxu0 0.0
    %626 = vmatprep.subr.mxu0 0.0
    %627 = vmatpush1.msra.mxu0 0.0
    %628 = vmatprep.subr.mxu0 0.0
    %629 = vmatpush1.msra.mxu0 0.0
    %630 = vmatprep.subr.mxu0 0.0
    %631 = vmatpush1.msra.mxu0 0.0
    %632 = vmatprep.subr.mxu0 0.0
    %633 = vmatpush1.msra.mxu0 0.0
    %634 = vmatprep.subr.mxu0 0.0
    %635 = vmatpush1.msra.mxu0 0.0
    %636 = vmatprep.subr.mxu0 0.0
    %637 = vmatpush1.msra.mxu0 0.0
    %638 = vmatprep.subr.mxu0 0.0
    %639 = vmatpush1.msra.mxu0 0.0
    %640 = vmatprep.subr.mxu0 0.0
    %641 = vmatpush1.msra.mxu0 0.0
    %642 = vmatprep.subr.mxu0 0.0
    %643 = vmatpush1.msra.mxu0 0.0
    %644 = vmatprep.subr.mxu0 0.0
    %645 = vmatpush1.msra.mxu0 0.0
    %646 = vmatprep.subr.mxu0 0.0
    %647 = vmatpush1.msra.mxu0 0.0
    %648 = vmatprep.subr.mxu0 0.0
    %649 = vmatpush1.msra.mxu0 0.0
    %650 = vmatprep.subr.mxu0 0.0
    %651 = vmatpush1.msra.mxu0 0.0
    %652 = vmatprep.subr.mxu0 0.0
    %653 = vmatpush1.msra.mxu0 %v617
    %654 = vmatprep.subr.mxu0 0.0
    %655 = vmatpush2.msra.mxu0 0.0
    %656 = vmatprep.subr.mxu0 0.0
    %657 = vmatpush2.msra.mxu0 0.0
    %658 = vmatprep.subr.mxu0 0.0
    %659 = vmatpush2.msra.mxu0 0.0
    %660 = vmatprep.subr.mxu0 0.0
    %661 = vmatpush2.msra.mxu0 0.0
    %662 = vmatprep.subr.mxu0 0.0
    %663 = vmatpush2.msra.mxu0 0.0
    %664 = vmatprep.subr.mxu0 0.0
    %665 = vmatpush2.msra.mxu0 0.0
    %666 = vmatprep.subr.mxu0 0.0
    %667 = vmatpush2.msra.mxu0 0.0
    %668 = vmatprep.subr.mxu0 0.0
    %669 = vmatpush2.msra.mxu0 0.0
    %670 = vmatprep.subr.mxu0 0.0
    %671 = vmatpush2.msra.mxu0 0.0
    %672 = vmatprep.subr.mxu0 0.0
    %673 = vmatpush2.msra.mxu0 0.0
    %674 = vmatprep.subr.mxu0 0.0
    %675 = vmatpush2.msra.mxu0 0.0
    %676 = vmatprep.subr.mxu0 0.0
    %677 = vmatpush2.msra.mxu0 0.0
    %678 = vmatprep.subr.mxu0 0.0
    %679 = vmatpush2.msra.mxu0 0.0
    %680 = vmatprep.subr.mxu0 0.0
    %681 = vmatpush2.msra.mxu0 0.0
    %682 = vmatprep.subr.mxu0 0.0
    %683 = vmatpush2.msra.mxu0 0.0
    %684 = vmatprep.subr.mxu0 0.0
    %685 = vmatpush2.msra.mxu0 0.0
    %686 = vmatprep.mubr.f32.mxu0 0.0
    %687 = vmatmul.mubr.f32.gmra.mxu0 %v620
    %v688 = vpop.f32.mrf.mxu0
    %v689 = vadd.f32 0.0, %v688
    %v690 = vpop.f32.mrf.mxu0
    %691 = vdwg.mxu0
    %692 = vrot.lane.b32.xlu0 %v225, 64
    %v693 = vpop.permute.xlu0 %692
    %v696 = vsel %vm571, %v613, 0
    %698 = vmatprep.subr.mxu0 0.0
    %699 = vmatpush1.msra.mxu0 0.0
    %700 = vmatprep.subr.mxu0 0.0
    %701 = vmatpush1.msra.mxu0 0.0
    %702 = vmatprep.subr.mxu0 0.0
    %703 = vmatpush1.msra.mxu0 0.0
    %704 = vmatprep.subr.mxu0 0.0
    %705 = vmatpush1.msra.mxu0 0.0
    %706 = vmatprep.subr.mxu0 0.0
    %707 = vmatpush1.msra.mxu0 0.0
    %708 = vmatprep.subr.mxu0 0.0
    %709 = vmatpush1.msra.mxu0 0.0
    %710 = vmatprep.subr.mxu0 0.0
    %711 = vmatpush1.msra.mxu0 0.0
    %712 = vmatprep.subr.mxu0 0.0
    %713 = vmatpush1.msra.mxu0 0.0
    %714 = vmatprep.subr.mxu0 0.0
    %715 = vmatpush1.msra.mxu0 0.0
    %716 = vmatprep.subr.mxu0 0.0
    %717 = vmatpush1.msra.mxu0 0.0
    %718 = vmatprep.subr.mxu0 0.0
    %719 = vmatpush1.msra.mxu0 0.0
    %720 = vmatprep.subr.mxu0 0.0
    %721 = vmatpush1.msra.mxu0 0.0
    %722 = vmatprep.subr.mxu0 0.0
    %723 = vmatpush1.msra.mxu0 0.0
    %724 = vmatprep.subr.mxu0 0.0
    %725 = vmatpush1.msra.mxu0 0.0
    %726 = vmatprep.subr.mxu0 0.0
    %727 = vmatpush1.msra.mxu0 0.0
    %728 = vmatprep.subr.mxu0 0.0
    %729 = vmatpush1.msra.mxu0 %v693
    %730 = vmatprep.subr.mxu0 0.0
    %731 = vmatpush2.msra.mxu0 0.0
    %732 = vmatprep.subr.mxu0 0.0
    %733 = vmatpush2.msra.mxu0 0.0
    %734 = vmatprep.subr.mxu0 0.0
    %735 = vmatpush2.msra.mxu0 0.0
    %736 = vmatprep.subr.mxu0 0.0
    %737 = vmatpush2.msra.mxu0 0.0
    %738 = vmatprep.subr.mxu0 0.0
    %739 = vmatpush2.msra.mxu0 0.0
    %740 = vmatprep.subr.mxu0 0.0
    %741 = vmatpush2.msra.mxu0 0.0
    %742 = vmatprep.subr.mxu0 0.0
    %743 = vmatpush2.msra.mxu0 0.0
    %744 = vmatprep.subr.mxu0 0.0
    %745 = vmatpush2.msra.mxu0 0.0
    %746 = vmatprep.subr.mxu0 0.0
    %747 = vmatpush2.msra.mxu0 0.0
    %748 = vmatprep.subr.mxu0 0.0
    %749 = vmatpush2.msra.mxu0 0.0
    %750 = vmatprep.subr.mxu0 0.0
    %751 = vmatpush2.msra.mxu0 0.0
    %752 = vmatprep.subr.mxu0 0.0
    %753 = vmatpush2.msra.mxu0 0.0
    %754 = vmatprep.subr.mxu0 0.0
    %755 = vmatpush2.msra.mxu0 0.0
    %756 = vmatprep.subr.mxu0 0.0
    %757 = vmatpush2.msra.mxu0 0.0
    %758 = vmatprep.subr.mxu0 0.0
    %759 = vmatpush2.msra.mxu0 0.0
    %760 = vmatprep.subr.mxu0 0.0
    %761 = vmatpush2.msra.mxu0 0.0
    %762 = vmatprep.mubr.f32.mxu0 0.0
    %763 = vmatmul.mubr.f32.gmra.mxu0 %v696
    %v764 = vpop.f32.mrf.mxu0
    %v765 = vadd.f32 0.0, %v764
    %v766 = vpop.f32.mrf.mxu0
    %767 = vdwg.mxu0
    %768 = vrot.lane.b32.xlu0 %v230, 64
    %v769 = vpop.permute.xlu0 %768
    %v772 = vsel %vm571, %v614, 0
    %774 = vmatprep.subr.mxu0 0.0
    %775 = vmatpush1.msra.mxu0 0.0
    %776 = vmatprep.subr.mxu0 0.0
    %777 = vmatpush1.msra.mxu0 0.0
    %778 = vmatprep.subr.mxu0 0.0
    %779 = vmatpush1.msra.mxu0 0.0
    %780 = vmatprep.subr.mxu0 0.0
    %781 = vmatpush1.msra.mxu0 0.0
    %782 = vmatprep.subr.mxu0 0.0
    %783 = vmatpush1.msra.mxu0 0.0
    %784 = vmatprep.subr.mxu0 0.0
    %785 = vmatpush1.msra.mxu0 0.0
    %786 = vmatprep.subr.mxu0 0.0
    %787 = vmatpush1.msra.mxu0 0.0
    %788 = vmatprep.subr.mxu0 0.0
    %789 = vmatpush1.msra.mxu0 0.0
    %790 = vmatprep.subr.mxu0 0.0
    %791 = vmatpush1.msra.mxu0 0.0
    %792 = vmatprep.subr.mxu0 0.0
    %793 = vmatpush1.msra.mxu0 0.0
    %794 = vmatprep.subr.mxu0 0.0
    %795 = vmatpush1.msra.mxu0 0.0
    %796 = vmatprep.subr.mxu0 0.0
    %797 = vmatpush1.msra.mxu0 0.0
    %798 = vmatprep.subr.mxu0 0.0
    %799 = vmatpush1.msra.mxu0 0.0
    %800 = vmatprep.subr.mxu0 0.0
    %801 = vmatpush1.msra.mxu0 0.0
    %802 = vmatprep.subr.mxu0 0.0
    %803 = vmatpush1.msra.mxu0 0.0
    %804 = vmatprep.subr.mxu0 0.0
    %805 = vmatpush1.msra.mxu0 %v769
    %806 = vmatprep.subr.mxu0 0.0
    %807 = vmatpush2.msra.mxu0 0.0
    %808 = vmatprep.subr.mxu0 0.0
    %809 = vmatpush2.msra.mxu0 0.0
    %810 = vmatprep.subr.mxu0 0.0
    %811 = vmatpush2.msra.mxu0 0.0
    %812 = vmatprep.subr.mxu0 0.0
    %813 = vmatpush2.msra.mxu0 0.0
    %814 = vmatprep.subr.mxu0 0.0
    %815 = vmatpush2.msra.mxu0 0.0
    %816 = vmatprep.subr.mxu0 0.0
    %817 = vmatpush2.msra.mxu0 0.0
    %818 = vmatprep.subr.mxu0 0.0
    %819 = vmatpush2.msra.mxu0 0.0
    %820 = vmatprep.subr.mxu0 0.0
    %821 = vmatpush2.msra.mxu0 0.0
    %822 = vmatprep.subr.mxu0 0.0
    %823 = vmatpush2.msra.mxu0 0.0
    %824 = vmatprep.subr.mxu0 0.0
    %825 = vmatpush2.msra.mxu0 0.0
    %826 = vmatprep.subr.mxu0 0.0
    %827 = vmatpush2.msra.mxu0 0.0
    %828 = vmatprep.subr.mxu0 0.0
    %829 = vmatpush2.msra.mxu0 0.0
    %830 = vmatprep.subr.mxu0 0.0
    %831 = vmatpush2.msra.mxu0 0.0
    %832 = vmatprep.subr.mxu0 0.0
    %833 = vmatpush2.msra.mxu0 0.0
    %834 = vmatprep.subr.mxu0 0.0
    %835 = vmatpush2.msra.mxu0 0.0
    %836 = vmatprep.subr.mxu0 0.0
    %837 = vmatpush2.msra.mxu0 0.0
    %838 = vmatprep.mubr.f32.mxu0 0.0
    %839 = vmatmul.mubr.f32.gmra.mxu0 %v772
    %v840 = vpop.f32.mrf.mxu0
    %v841 = vadd.f32 0.0, %v840
    %v842 = vpop.f32.mrf.mxu0
    %843 = vdwg.mxu0
    %844 = vrot.lane.b32.xlu0 %v233, 64
    %v845 = vpop.permute.xlu0 %844
    %v848 = vsel %vm571, %v615, 0
    %850 = vmatprep.subr.mxu0 0.0
    %851 = vmatpush1.msra.mxu0 0.0
    %852 = vmatprep.subr.mxu0 0.0
    %853 = vmatpush1.msra.mxu0 0.0
    %854 = vmatprep.subr.mxu0 0.0
    %855 = vmatpush1.msra.mxu0 0.0
    %856 = vmatprep.subr.mxu0 0.0
    %857 = vmatpush1.msra.mxu0 0.0
    %858 = vmatprep.subr.mxu0 0.0
    %859 = vmatpush1.msra.mxu0 0.0
    %860 = vmatprep.subr.mxu0 0.0
    %861 = vmatpush1.msra.mxu0 0.0
    %862 = vmatprep.subr.mxu0 0.0
    %863 = vmatpush1.msra.mxu0 0.0
    %864 = vmatprep.subr.mxu0 0.0
    %865 = vmatpush1.msra.mxu0 0.0
    %866 = vmatprep.subr.mxu0 0.0
    %867 = vmatpush1.msra.mxu0 0.0
    %868 = vmatprep.subr.mxu0 0.0
    %869 = vmatpush1.msra.mxu0 0.0
    %870 = vmatprep.subr.mxu0 0.0
    %871 = vmatpush1.msra.mxu0 0.0
    %872 = vmatprep.subr.mxu0 0.0
    %873 = vmatpush1.msra.mxu0 0.0
    %874 = vmatprep.subr.mxu0 0.0
    %875 = vmatpush1.msra.mxu0 0.0
    %876 = vmatprep.subr.mxu0 0.0
    %877 = vmatpush1.msra.mxu0 0.0
    %878 = vmatprep.subr.mxu0 0.0
    %879 = vmatpush1.msra.mxu0 0.0
    %880 = vmatprep.subr.mxu0 0.0
    %881 = vmatpush1.msra.mxu0 %v845
    %882 = vmatprep.subr.mxu0 0.0
    %883 = vmatpush2.msra.mxu0 0.0
    %884 = vmatprep.subr.mxu0 0.0
    %885 = vmatpush2.msra.mxu0 0.0
    %886 = vmatprep.subr.mxu0 0.0
    %887 = vmatpush2.msra.mxu0 0.0
    %888 = vmatprep.subr.mxu0 0.0
    %889 = vmatpush2.msra.mxu0 0.0
    %890 = vmatprep.subr.mxu0 0.0
    %891 = vmatpush2.msra.mxu0 0.0
    %892 = vmatprep.subr.mxu0 0.0
    %893 = vmatpush2.msra.mxu0 0.0
    %894 = vmatprep.subr.mxu0 0.0
    %895 = vmatpush2.msra.mxu0 0.0
    %896 = vmatprep.subr.mxu0 0.0
    %897 = vmatpush2.msra.mxu0 0.0
    %898 = vmatprep.subr.mxu0 0.0
    %899 = vmatpush2.msra.mxu0 0.0
    %900 = vmatprep.subr.mxu0 0.0
    %901 = vmatpush2.msra.mxu0 0.0
    %902 = vmatprep.subr.mxu0 0.0
    %903 = vmatpush2.msra.mxu0 0.0
    %904 = vmatprep.subr.mxu0 0.0
    %905 = vmatpush2.msra.mxu0 0.0
    %906 = vmatprep.subr.mxu0 0.0
    %907 = vmatpush2.msra.mxu0 0.0
    %908 = vmatprep.subr.mxu0 0.0
    %909 = vmatpush2.msra.mxu0 0.0
    %910 = vmatprep.subr.mxu0 0.0
    %911 = vmatpush2.msra.mxu0 0.0
    %912 = vmatprep.subr.mxu0 0.0
    %913 = vmatpush2.msra.mxu0 0.0
    %914 = vmatprep.mubr.f32.mxu0 0.0
    %915 = vmatmul.mubr.f32.gmra.mxu0 %v848
    %v916 = vpop.f32.mrf.mxu0
    %v917 = vadd.f32 0.0, %v916
    %v918 = vpop.f32.mrf.mxu0
    %919 = vdwg.mxu0
    %921 = vrot.lane.b32.xlu0 %v841, 16
    %v922 = vpop.permute.xlu0 %921
    %v924 = vsel %vm236, %v689, %v922
    %926 = vrot.lane.b32.xlu0 %v917, 16
    %v927 = vpop.permute.xlu0 %926
    %v929 = vsel %vm236, %v765, %v927
    %v930 = vld [vmem:[%s8] sm:$0xff]
    %v931 = vld [vmem:[%s8 + $0x8] sm:$0xff]
    %v932 = vld [vmem:[%s8 + $0x10] sm:$0xff]
    %v933 = vld [vmem:[%s8 + $0x18] sm:$0xff]
    %v934 = vld [vmem:[%s9] sm:$0x1]
    %v936 = vlaneseq
    %v937 = vshrl.u32 %v936, 7
    %v938 = vsub.s32 0, %v937
    %v939 = vrot.slane %v934, %v938
    %v942 = vsel %vm88, %v924, 0
    %v945 = vsel %vm88, %v929, 0
    %947 = vmatprep.subr.mxu0 0.0
    %948 = vmatpush1.msra.mxu0 0.0
    %949 = vmatprep.subr.mxu0 0.0
    %950 = vmatpush1.msra.mxu0 0.0
    %951 = vmatprep.subr.mxu0 0.0
    %952 = vmatpush1.msra.mxu0 0.0
    %953 = vmatprep.subr.mxu0 0.0
    %954 = vmatpush1.msra.mxu0 0.0
    %955 = vmatprep.subr.mxu0 0.0
    %956 = vmatpush1.msra.mxu0 0.0
    %957 = vmatprep.subr.mxu0 0.0
    %958 = vmatpush1.msra.mxu0 0.0
    %959 = vmatprep.subr.mxu0 0.0
    %960 = vmatpush1.msra.mxu0 0.0
    %961 = vmatprep.subr.mxu0 0.0
    %962 = vmatpush1.msra.mxu0 0.0
    %963 = vmatprep.subr.mxu0 0.0
    %964 = vmatpush1.msra.mxu0 0.0
    %965 = vmatprep.subr.mxu0 0.0
    %966 = vmatpush1.msra.mxu0 0.0
    %967 = vmatprep.subr.mxu0 0.0
    %968 = vmatpush1.msra.mxu0 0.0
    %969 = vmatprep.subr.mxu0 0.0
    %970 = vmatpush1.msra.mxu0 0.0
    %971 = vmatprep.subr.mxu0 0.0
    %972 = vmatpush1.msra.mxu0 %v933
    %973 = vmatprep.subr.mxu0 0.0
    %974 = vmatpush1.msra.mxu0 %v932
    %975 = vmatprep.subr.mxu0 0.0
    %976 = vmatpush1.msra.mxu0 %v931
    %977 = vmatprep.subr.mxu0 0.0
    %978 = vmatpush1.msra.mxu0 %v930
    %979 = vmatprep.subr.mxu0 0.0
    %980 = vmatpush2.msra.mxu0 0.0
    %981 = vmatprep.subr.mxu0 0.0
    %982 = vmatpush2.msra.mxu0 0.0
    %983 = vmatprep.subr.mxu0 0.0
    %984 = vmatpush2.msra.mxu0 0.0
    %985 = vmatprep.subr.mxu0 0.0
    %986 = vmatpush2.msra.mxu0 0.0
    %987 = vmatprep.subr.mxu0 0.0
    %988 = vmatpush2.msra.mxu0 0.0
    %989 = vmatprep.subr.mxu0 0.0
    %990 = vmatpush2.msra.mxu0 0.0
    %991 = vmatprep.subr.mxu0 0.0
    %992 = vmatpush2.msra.mxu0 0.0
    %993 = vmatprep.subr.mxu0 0.0
    %994 = vmatpush2.msra.mxu0 0.0
    %995 = vmatprep.subr.mxu0 0.0
    %996 = vmatpush2.msra.mxu0 0.0
    %997 = vmatprep.subr.mxu0 0.0
    %998 = vmatpush2.msra.mxu0 0.0
    %999 = vmatprep.subr.mxu0 0.0
    %1000 = vmatpush2.msra.mxu0 0.0
    %1001 = vmatprep.subr.mxu0 0.0
    %1002 = vmatpush2.msra.mxu0 0.0
    %1003 = vmatprep.subr.mxu0 0.0
    %1004 = vmatpush2.msra.mxu0 0.0
    %1005 = vmatprep.subr.mxu0 0.0
    %1006 = vmatpush2.msra.mxu0 0.0
    %1007 = vmatprep.subr.mxu0 0.0
    %1008 = vmatpush2.msra.mxu0 0.0
    %1009 = vmatprep.subr.mxu0 0.0
    %1010 = vmatpush2.msra.mxu0 0.0
    %1011 = vmatprep.mubr.f32.mxu0 0.0
    %1012 = vmatmul.mubr.f32.gmra.mxu0 %v942
    %v1013 = vpop.f32.mrf.mxu0
    %v1014 = vadd.f32 %v939, %v1013
    %v1015 = vpop.f32.mrf.mxu0
    %1016 = vmatprep.mubr.f32.mxu0 0.0
    %1017 = vmatmul.mubr.f32.gmra.mxu0 %v945
    %v1018 = vpop.f32.mrf.mxu0
    %v1019 = vadd.f32 %v939, %v1018
    %v1020 = vpop.f32.mrf.mxu0
    %1021 = vdwg.mxu0
    %v1022 = vadd.f32 %v130, %v1014
    %v1023 = vadd.f32 %v131, %v1019
    %v1024 = vld [vmem:[%s10] sm:$0x1]
    %v1025 = vld [vmem:[%s11] sm:$0x1]
    %v1026 = vsel %vm88, %v1022, 0.0
    %1027 = vadd.xlane.f32.xlu0 %v1026
    %v1028 = vpop.xlane.xlu0 %1027
    %v1029 = vsel %vm88, %v1023, 0.0
    %1030 = vadd.xlane.f32.xlu0 %v1029
    %v1031 = vpop.xlane.xlu0 %1030
    %v1032 = vmul.f32 %v1028, %v95
    %v1033 = vmul.f32 %v1031, %v95
    %v1034 = vsub.f32 %v1022, %v1032
    %v1035 = vsub.f32 %v1023, %v1033
    %v1036 = vmul.f32 %v1034, %v1034
    %v1037 = vmul.f32 %v1035, %v1035
    %v1038 = vsel %vm88, %v1036, 0.0
    %1039 = vadd.xlane.f32.xlu0 %v1038
    %v1040 = vpop.xlane.xlu0 %1039
    %v1041 = vsel %vm88, %v1037, 0.0
    %1042 = vadd.xlane.f32.xlu0 %v1041
    %v1043 = vpop.xlane.xlu0 %1042
    %v1044 = vmul.f32 %v1040, %v95
    %v1045 = vmul.f32 %v1043, %v95
    %v1046 = vadd.f32 %v1044, 1e-12
    %v1047 = vadd.f32 %v1045, 1e-12
    %v1048 = vrsqrt.pop %v1046
    %v1049 = vrsqrt.pop %v1047
    %v1050 = vmul.f32 %v1034, %v1048
    %v1051 = vmul.f32 %v1035, %v1049
    %v1053 = vlaneseq
    %v1054 = vshrl.u32 %v1053, 7
    %v1055 = vsub.s32 0, %v1054
    %v1056 = vrot.slane %v1024, %v1055
    %v1058 = vmul.f32 %v1050, %v1056
    %v1059 = vmul.f32 %v1051, %v1056
    %v1061 = vlaneseq
    %v1062 = vshrl.u32 %v1061, 7
    %v1063 = vsub.s32 0, %v1062
    %v1064 = vrot.slane %v1025, %v1063
    %v1066 = vadd.f32 %v1058, %v1064
    %v1067 = vadd.f32 %v1059, %v1064
    %v1068 = vld [vmem:[%s12] sm:$0xff]
    %v1069 = vld [vmem:[%s12 + $0x8] sm:$0xff]
    %v1070 = vld [vmem:[%s12 + $0x10] sm:$0xff]
    %v1071 = vld [vmem:[%s12 + $0x18] sm:$0xff]
    %v1072 = vld [vmem:[%s13] sm:$0x1]
    %v1074 = vlaneseq
    %v1075 = vshrl.u32 %v1074, 7
    %v1076 = vsub.s32 0, %v1075
    %v1077 = vrot.slane %v1072, %v1076
    %v1080 = vsel %vm88, %v1066, 0
    %v1083 = vsel %vm88, %v1067, 0
    %1085 = vmatprep.subr.mxu0 0.0
    %1086 = vmatpush1.msra.mxu0 0.0
    %1087 = vmatprep.subr.mxu0 0.0
    %1088 = vmatpush1.msra.mxu0 0.0
    %1089 = vmatprep.subr.mxu0 0.0
    %1090 = vmatpush1.msra.mxu0 0.0
    %1091 = vmatprep.subr.mxu0 0.0
    %1092 = vmatpush1.msra.mxu0 0.0
    %1093 = vmatprep.subr.mxu0 0.0
    %1094 = vmatpush1.msra.mxu0 0.0
    %1095 = vmatprep.subr.mxu0 0.0
    %1096 = vmatpush1.msra.mxu0 0.0
    %1097 = vmatprep.subr.mxu0 0.0
    %1098 = vmatpush1.msra.mxu0 0.0
    %1099 = vmatprep.subr.mxu0 0.0
    %1100 = vmatpush1.msra.mxu0 0.0
    %1101 = vmatprep.subr.mxu0 0.0
    %1102 = vmatpush1.msra.mxu0 0.0
    %1103 = vmatprep.subr.mxu0 0.0
    %1104 = vmatpush1.msra.mxu0 0.0
    %1105 = vmatprep.subr.mxu0 0.0
    %1106 = vmatpush1.msra.mxu0 0.0
    %1107 = vmatprep.subr.mxu0 0.0
    %1108 = vmatpush1.msra.mxu0 0.0
    %1109 = vmatprep.subr.mxu0 0.0
    %1110 = vmatpush1.msra.mxu0 %v1071
    %1111 = vmatprep.subr.mxu0 0.0
    %1112 = vmatpush1.msra.mxu0 %v1070
    %1113 = vmatprep.subr.mxu0 0.0
    %1114 = vmatpush1.msra.mxu0 %v1069
    %1115 = vmatprep.subr.mxu0 0.0
    %1116 = vmatpush1.msra.mxu0 %v1068
    %1117 = vmatprep.subr.mxu0 0.0
    %1118 = vmatpush2.msra.mxu0 0.0
    %1119 = vmatprep.subr.mxu0 0.0
    %1120 = vmatpush2.msra.mxu0 0.0
    %1121 = vmatprep.subr.mxu0 0.0
    %1122 = vmatpush2.msra.mxu0 0.0
    %1123 = vmatprep.subr.mxu0 0.0
    %1124 = vmatpush2.msra.mxu0 0.0
    %1125 = vmatprep.subr.mxu0 0.0
    %1126 = vmatpush2.msra.mxu0 0.0
    %1127 = vmatprep.subr.mxu0 0.0
    %1128 = vmatpush2.msra.mxu0 0.0
    %1129 = vmatprep.subr.mxu0 0.0
    %1130 = vmatpush2.msra.mxu0 0.0
    %1131 = vmatprep.subr.mxu0 0.0
    %1132 = vmatpush2.msra.mxu0 0.0
    %1133 = vmatprep.subr.mxu0 0.0
    %1134 = vmatpush2.msra.mxu0 0.0
    %1135 = vmatprep.subr.mxu0 0.0
    %1136 = vmatpush2.msra.mxu0 0.0
    %1137 = vmatprep.subr.mxu0 0.0
    %1138 = vmatpush2.msra.mxu0 0.0
    %1139 = vmatprep.subr.mxu0 0.0
    %1140 = vmatpush2.msra.mxu0 0.0
    %1141 = vmatprep.subr.mxu0 0.0
    %1142 = vmatpush2.msra.mxu0 0.0
    %1143 = vmatprep.subr.mxu0 0.0
    %1144 = vmatpush2.msra.mxu0 0.0
    %1145 = vmatprep.subr.mxu0 0.0
    %1146 = vmatpush2.msra.mxu0 0.0
    %1147 = vmatprep.subr.mxu0 0.0
    %1148 = vmatpush2.msra.mxu0 0.0
    %1149 = vmatprep.mubr.f32.mxu0 0.0
    %1150 = vmatmul.mubr.f32.gmra.mxu0 %v1080
    %v1151 = vpop.f32.mrf.mxu0
    %v1152 = vadd.f32 %v1077, %v1151
    %v1153 = vpop.f32.mrf.mxu0
    %1154 = vmatprep.mubr.f32.mxu0 0.0
    %1155 = vmatmul.mubr.f32.gmra.mxu0 %v1083
    %v1156 = vpop.f32.mrf.mxu0
    %v1157 = vadd.f32 %v1077, %v1156
    %v1158 = vpop.f32.mrf.mxu0
    %1159 = vdwg.mxu0
    %v1160 = vmul.f32 %v1152, 0.5
    %v1161 = vmul.f32 %v1157, 0.5
    %v1162 = vmul.f32 %v1152, 0.044715
    %v1163 = vmul.f32 %v1157, 0.044715
    %v1164 = vmul.f32 %v1162, %v1152
    %v1165 = vmul.f32 %v1163, %v1157
    %v1166 = vmul.f32 %v1164, %v1152
    %v1167 = vmul.f32 %v1165, %v1157
    %v1168 = vadd.f32 %v1152, %v1166
    %v1169 = vadd.f32 %v1157, %v1167
    %v1170 = vmul.f32 %v1168, 0.7978846
    %v1171 = vmul.f32 %v1169, 0.7978846
    %v1172 = vtanh.pop %v1170
    %v1173 = vtanh.pop %v1171
    %v1174 = vadd.f32 %v1172, 1.0
    %v1175 = vadd.f32 %v1173, 1.0
    %v1176 = vmul.f32 %v1160, %v1174
    %v1177 = vmul.f32 %v1161, %v1175
    %v1178 = vld [vmem:[%s14] sm:$0xff]
    %v1179 = vld [vmem:[%s14 + $0x8] sm:$0xff]
    %v1180 = vld [vmem:[%s14 + $0x10] sm:$0xff]
    %v1181 = vld [vmem:[%s14 + $0x18] sm:$0xff]
    %v1182 = vld [vmem:[%s14 + $0x20] sm:$0xff]
    %v1183 = vld [vmem:[%s14 + $0x28] sm:$0xff]
    %v1184 = vld [vmem:[%s14 + $0x30] sm:$0xff]
    %v1185 = vld [vmem:[%s14 + $0x38] sm:$0xff]
    %v1186 = vld [vmem:[%s15] sm:$0x1]
    %v1188 = vlaneseq
    %v1189 = vshrl.u32 %v1188, 7
    %v1190 = vsub.s32 0, %v1189
    %v1191 = vrot.slane %v1186, %v1190
    %vm1193 = vcmask 523264
    %v1195 = vsel %vm1193, %v1176, 0
    %v1198 = vsel %vm1193, %v1177, 0
    %1200 = vmatprep.subr.mxu0 0.0
    %1201 = vmatpush1.msra.mxu0 0.0
    %1202 = vmatprep.subr.mxu0 0.0
    %1203 = vmatpush1.msra.mxu0 0.0
    %1204 = vmatprep.subr.mxu0 0.0
    %1205 = vmatpush1.msra.mxu0 0.0
    %1206 = vmatprep.subr.mxu0 0.0
    %1207 = vmatpush1.msra.mxu0 0.0
    %1208 = vmatprep.subr.mxu0 0.0
    %1209 = vmatpush1.msra.mxu0 0.0
    %1210 = vmatprep.subr.mxu0 0.0
    %1211 = vmatpush1.msra.mxu0 0.0
    %1212 = vmatprep.subr.mxu0 0.0
    %1213 = vmatpush1.msra.mxu0 0.0
    %1214 = vmatprep.subr.mxu0 0.0
    %1215 = vmatpush1.msra.mxu0 0.0
    %1216 = vmatprep.subr.mxu0 0.0
    %1217 = vmatpush1.msra.mxu0 %v1185
    %1218 = vmatprep.subr.mxu0 0.0
    %1219 = vmatpush1.msra.mxu0 %v1184
    %1220 = vmatprep.subr.mxu0 0.0
    %1221 = vmatpush1.msra.mxu0 %v1183
    %1222 = vmatprep.subr.mxu0 0.0
    %1223 = vmatpush1.msra.mxu0 %v1182
    %1224 = vmatprep.subr.mxu0 0.0
    %1225 = vmatpush1.msra.mxu0 %v1181
    %1226 = vmatprep.subr.mxu0 0.0
    %1227 = vmatpush1.msra.mxu0 %v1180
    %1228 = vmatprep.subr.mxu0 0.0
    %1229 = vmatpush1.msra.mxu0 %v1179
    %1230 = vmatprep.subr.mxu0 0.0
    %1231 = vmatpush1.msra.mxu0 %v1178
    %1232 = vmatprep.subr.mxu0 0.0
    %1233 = vmatpush2.msra.mxu0 0.0
    %1234 = vmatprep.subr.mxu0 0.0
    %1235 = vmatpush2.msra.mxu0 0.0
    %1236 = vmatprep.subr.mxu0 0.0
    %1237 = vmatpush2.msra.mxu0 0.0
    %1238 = vmatprep.subr.mxu0 0.0
    %1239 = vmatpush2.msra.mxu0 0.0
    %1240 = vmatprep.subr.mxu0 0.0
    %1241 = vmatpush2.msra.mxu0 0.0
    %1242 = vmatprep.subr.mxu0 0.0
    %1243 = vmatpush2.msra.mxu0 0.0
    %1244 = vmatprep.subr.mxu0 0.0
    %1245 = vmatpush2.msra.mxu0 0.0
    %1246 = vmatprep.subr.mxu0 0.0
    %1247 = vmatpush2.msra.mxu0 0.0
    %1248 = vmatprep.subr.mxu0 0.0
    %1249 = vmatpush2.msra.mxu0 0.0
    %1250 = vmatprep.subr.mxu0 0.0
    %1251 = vmatpush2.msra.mxu0 0.0
    %1252 = vmatprep.subr.mxu0 0.0
    %1253 = vmatpush2.msra.mxu0 0.0
    %1254 = vmatprep.subr.mxu0 0.0
    %1255 = vmatpush2.msra.mxu0 0.0
    %1256 = vmatprep.subr.mxu0 0.0
    %1257 = vmatpush2.msra.mxu0 0.0
    %1258 = vmatprep.subr.mxu0 0.0
    %1259 = vmatpush2.msra.mxu0 0.0
    %1260 = vmatprep.subr.mxu0 0.0
    %1261 = vmatpush2.msra.mxu0 0.0
    %1262 = vmatprep.subr.mxu0 0.0
    %1263 = vmatpush2.msra.mxu0 0.0
    %1264 = vmatprep.mubr.f32.mxu0 0.0
    %1265 = vmatmul.mubr.f32.gmra.mxu0 %v1195
    %v1266 = vpop.f32.mrf.mxu0
    %v1267 = vadd.f32 %v1191, %v1266
    %v1268 = vpop.f32.mrf.mxu0
    %1269 = vmatprep.mubr.f32.mxu0 0.0
    %1270 = vmatmul.mubr.f32.gmra.mxu0 %v1198
    %v1271 = vpop.f32.mrf.mxu0
    %v1272 = vadd.f32 %v1191, %v1271
    %v1273 = vpop.f32.mrf.mxu0
    %1274 = vdwg.mxu0
    %v1275 = vadd.f32 %v1066, %v1267
    %v1276 = vadd.f32 %v1067, %v1272
    %v1277 = vld [vmem:[%s16] sm:$0x1]
    %v1278 = vld [vmem:[%s17] sm:$0x1]
    %v1279 = vsel %vm88, %v1275, 0.0
    %1280 = vadd.xlane.f32.xlu0 %v1279
    %v1281 = vpop.xlane.xlu0 %1280
    %v1282 = vsel %vm88, %v1276, 0.0
    %1283 = vadd.xlane.f32.xlu0 %v1282
    %v1284 = vpop.xlane.xlu0 %1283
    %v1285 = vmul.f32 %v1281, %v95
    %v1286 = vmul.f32 %v1284, %v95
    %v1287 = vsub.f32 %v1275, %v1285
    %v1288 = vsub.f32 %v1276, %v1286
    %v1289 = vmul.f32 %v1287, %v1287
    %v1290 = vmul.f32 %v1288, %v1288
    %v1291 = vsel %vm88, %v1289, 0.0
    %1292 = vadd.xlane.f32.xlu0 %v1291
    %v1293 = vpop.xlane.xlu0 %1292
    %v1294 = vsel %vm88, %v1290, 0.0
    %1295 = vadd.xlane.f32.xlu0 %v1294
    %v1296 = vpop.xlane.xlu0 %1295
    %v1297 = vmul.f32 %v1293, %v95
    %v1298 = vmul.f32 %v1296, %v95
    %v1299 = vadd.f32 %v1297, 1e-12
    %v1300 = vadd.f32 %v1298, 1e-12
    %v1301 = vrsqrt.pop %v1299
    %v1302 = vrsqrt.pop %v1300
    %v1303 = vmul.f32 %v1287, %v1301
    %v1304 = vmul.f32 %v1288, %v1302
    %v1306 = vlaneseq
    %v1307 = vshrl.u32 %v1306, 7
    %v1308 = vsub.s32 0, %v1307
    %v1309 = vrot.slane %v1277, %v1308
    %v1311 = vmul.f32 %v1303, %v1309
    %v1312 = vmul.f32 %v1304, %v1309
    %v1314 = vlaneseq
    %v1315 = vshrl.u32 %v1314, 7
    %v1316 = vsub.s32 0, %v1315
    %v1317 = vrot.slane %v1278, %v1316
    %v1319 = vadd.f32 %v1311, %v1317
    %v1320 = vadd.f32 %v1312, %v1317
    %s1321 = scalar_lea.vmem %s6, 32
    %v1322 = vld [vmem:[%s1321] sm:$0xff]
    %v1323 = vld [vmem:[%s1321 + $0x8] sm:$0xff]
    %v1324 = vld [vmem:[%s1321 + $0x10] sm:$0xff]
    %v1325 = vld [vmem:[%s1321 + $0x18] sm:$0xff]
    %s1326 = scalar_lea.vmem %s7, 1
    %v1327 = vld [vmem:[%s1326] sm:$0x1]
    %v1329 = vlaneseq
    %v1330 = vshrl.u32 %v1329, 7
    %v1331 = vsub.s32 0, %v1330
    %v1332 = vrot.slane %v1327, %v1331
    %v1335 = vsel %vm88, %v1319, 0
    %v1338 = vsel %vm88, %v1320, 0
    %1340 = vmatprep.subr.mxu0 0.0
    %1341 = vmatpush1.msra.mxu0 0.0
    %1342 = vmatprep.subr.mxu0 0.0
    %1343 = vmatpush1.msra.mxu0 0.0
    %1344 = vmatprep.subr.mxu0 0.0
    %1345 = vmatpush1.msra.mxu0 0.0
    %1346 = vmatprep.subr.mxu0 0.0
    %1347 = vmatpush1.msra.mxu0 0.0
    %1348 = vmatprep.subr.mxu0 0.0
    %1349 = vmatpush1.msra.mxu0 0.0
    %1350 = vmatprep.subr.mxu0 0.0
    %1351 = vmatpush1.msra.mxu0 0.0
    %1352 = vmatprep.subr.mxu0 0.0
    %1353 = vmatpush1.msra.mxu0 0.0
    %1354 = vmatprep.subr.mxu0 0.0
    %1355 = vmatpush1.msra.mxu0 0.0
    %1356 = vmatprep.subr.mxu0 0.0
    %1357 = vmatpush1.msra.mxu0 0.0
    %1358 = vmatprep.subr.mxu0 0.0
    %1359 = vmatpush1.msra.mxu0 0.0
    %1360 = vmatprep.subr.mxu0 0.0
    %1361 = vmatpush1.msra.mxu0 0.0
    %1362 = vmatprep.subr.mxu0 0.0
    %1363 = vmatpush1.msra.mxu0 0.0
    %1364 = vmatprep.subr.mxu0 0.0
    %1365 = vmatpush1.msra.mxu0 %v1325
    %1366 = vmatprep.subr.mxu0 0.0
    %1367 = vmatpush1.msra.mxu0 %v1324
    %1368 = vmatprep.subr.mxu0 0.0
    %1369 = vmatpush1.msra.mxu0 %v1323
    %1370 = vmatprep.subr.mxu0 0.0
    %1371 = vmatpush1.msra.mxu0 %v1322
    %1372 = vmatprep.subr.mxu0 0.0
    %1373 = vmatpush2.msra.mxu0 0.0
    %1374 = vmatprep.subr.mxu0 0.0
    %1375 = vmatpush2.msra.mxu0 0.0
    %1376 = vmatprep.subr.mxu0 0.0
    %1377 = vmatpush2.msra.mxu0 0.0
    %1378 = vmatprep.subr.mxu0 0.0
    %1379 = vmatpush2.msra.mxu0 0.0
    %1380 = vmatprep.subr.mxu0 0.0
    %1381 = vmatpush2.msra.mxu0 0.0
    %1382 = vmatprep.subr.mxu0 0.0
    %1383 = vmatpush2.msra.mxu0 0.0
    %1384 = vmatprep.subr.mxu0 0.0
    %1385 = vmatpush2.msra.mxu0 0.0
    %1386 = vmatprep.subr.mxu0 0.0
    %1387 = vmatpush2.msra.mxu0 0.0
    %1388 = vmatprep.subr.mxu0 0.0
    %1389 = vmatpush2.msra.mxu0 0.0
    %1390 = vmatprep.subr.mxu0 0.0
    %1391 = vmatpush2.msra.mxu0 0.0
    %1392 = vmatprep.subr.mxu0 0.0
    %1393 = vmatpush2.msra.mxu0 0.0
    %1394 = vmatprep.subr.mxu0 0.0
    %1395 = vmatpush2.msra.mxu0 0.0
    %1396 = vmatprep.subr.mxu0 0.0
    %1397 = vmatpush2.msra.mxu0 0.0
    %1398 = vmatprep.subr.mxu0 0.0
    %1399 = vmatpush2.msra.mxu0 0.0
    %1400 = vmatprep.subr.mxu0 0.0
    %1401 = vmatpush2.msra.mxu0 0.0
    %1402 = vmatprep.subr.mxu0 0.0
    %1403 = vmatpush2.msra.mxu0 0.0
    %1404 = vmatprep.mubr.f32.mxu0 0.0
    %1405 = vmatmul.mubr.f32.gmra.mxu0 %v1335
    %v1406 = vpop.f32.mrf.mxu0
    %v1407 = vadd.f32 %v1332, %v1406
    %v1408 = vpop.f32.mrf.mxu0
    %1409 = vmatprep.mubr.f32.mxu0 0.0
    %1410 = vmatmul.mubr.f32.gmra.mxu0 %v1338
    %v1411 = vpop.f32.mrf.mxu0
    %v1412 = vadd.f32 %v1332, %v1411
    %v1413 = vpop.f32.mrf.mxu0
    %1414 = vdwg.mxu0
    %1416 = vrot.lane.b32.xlu0 %v1407, 112
    %v1417 = vpop.permute.xlu0 %1416
    %1419 = vrot.lane.b32.xlu0 %v1412, 112
    %v1420 = vpop.permute.xlu0 %1419
    %1421 = vrot.lane.b32.xlu0 %v1407, 96
    %v1422 = vpop.permute.xlu0 %1421
    %v1423 = vsel %vm236, %v1407, 0
    %v1425 = vsel %vm236, %v1422, 0
    %1427 = vmatprep.subr.mxu0 0.0
    %1428 = vmatpush1.xpose.msra.mxu0 0.0
    %1429 = vmatprep.subr.mxu0 0.0
    %1430 = vmatpush1.xpose.msra.mxu0 0.0
    %1431 = vmatprep.subr.mxu0 0.0
    %1432 = vmatpush1.xpose.msra.mxu0 0.0
    %1433 = vmatprep.subr.mxu0 0.0
    %1434 = vmatpush1.xpose.msra.mxu0 0.0
    %1435 = vmatprep.subr.mxu0 0.0
    %1436 = vmatpush1.xpose.msra.mxu0 0.0
    %1437 = vmatprep.subr.mxu0 0.0
    %1438 = vmatpush1.xpose.msra.mxu0 0.0
    %1439 = vmatprep.subr.mxu0 0.0
    %1440 = vmatpush1.xpose.msra.mxu0 0.0
    %1441 = vmatprep.subr.mxu0 0.0
    %1442 = vmatpush1.xpose.msra.mxu0 0.0
    %1443 = vmatprep.subr.mxu0 0.0
    %1444 = vmatpush1.xpose.msra.mxu0 0.0
    %1445 = vmatprep.subr.mxu0 0.0
    %1446 = vmatpush1.xpose.msra.mxu0 0.0
    %1447 = vmatprep.subr.mxu0 0.0
    %1448 = vmatpush1.xpose.msra.mxu0 0.0
    %1449 = vmatprep.subr.mxu0 0.0
    %1450 = vmatpush1.xpose.msra.mxu0 0.0
    %1451 = vmatprep.subr.mxu0 0.0
    %1452 = vmatpush1.xpose.msra.mxu0 0.0
    %1453 = vmatprep.subr.mxu0 0.0
    %1454 = vmatpush1.xpose.msra.mxu0 0.0
    %1455 = vmatprep.subr.mxu0 0.0
    %1456 = vmatpush1.xpose.msra.mxu0 0.0
    %1457 = vmatprep.subr.mxu0 0.0
    %1458 = vmatpush1.xpose.msra.mxu0 %v1425
    %1459 = vmatprep.subr.mxu0 0.0
    %1460 = vmatpush2.xpose.msra.mxu0 0.0
    %1461 = vmatprep.subr.mxu0 0.0
    %1462 = vmatpush2.xpose.msra.mxu0 0.0
    %1463 = vmatprep.subr.mxu0 0.0
    %1464 = vmatpush2.xpose.msra.mxu0 0.0
    %1465 = vmatprep.subr.mxu0 0.0
    %1466 = vmatpush2.xpose.msra.mxu0 0.0
    %1467 = vmatprep.subr.mxu0 0.0
    %1468 = vmatpush2.xpose.msra.mxu0 0.0
    %1469 = vmatprep.subr.mxu0 0.0
    %1470 = vmatpush2.xpose.msra.mxu0 0.0
    %1471 = vmatprep.subr.mxu0 0.0
    %1472 = vmatpush2.xpose.msra.mxu0 0.0
    %1473 = vmatprep.subr.mxu0 0.0
    %1474 = vmatpush2.xpose.msra.mxu0 0.0
    %1475 = vmatprep.subr.mxu0 0.0
    %1476 = vmatpush2.xpose.msra.mxu0 0.0
    %1477 = vmatprep.subr.mxu0 0.0
    %1478 = vmatpush2.xpose.msra.mxu0 0.0
    %1479 = vmatprep.subr.mxu0 0.0
    %1480 = vmatpush2.xpose.msra.mxu0 0.0
    %1481 = vmatprep.subr.mxu0 0.0
    %1482 = vmatpush2.xpose.msra.mxu0 0.0
    %1483 = vmatprep.subr.mxu0 0.0
    %1484 = vmatpush2.xpose.msra.mxu0 0.0
    %1485 = vmatprep.subr.mxu0 0.0
    %1486 = vmatpush2.xpose.msra.mxu0 0.0
    %1487 = vmatprep.subr.mxu0 0.0
    %1488 = vmatpush2.xpose.msra.mxu0 0.0
    %1489 = vmatprep.subr.mxu0 0.0
    %1490 = vmatpush2.xpose.msra.mxu0 0.0
    %1491 = vmatprep.mubr.f32.mxu0 0.0
    %1492 = vmatmul.mubr.f32.gmra.mxu0 %v1423
    %v1493 = vpop.f32.mrf.mxu0
    %v1494 = vadd.f32 0.0, %v1493
    %v1495 = vpop.f32.mrf.mxu0
    %1496 = vdwg.mxu0
    %1497 = vrot.lane.b32.xlu0 %v1412, 96
    %v1498 = vpop.permute.xlu0 %1497
    %v1499 = vsel %vm236, %v1412, 0
    %v1501 = vsel %vm236, %v1498, 0
    %1503 = vmatprep.subr.mxu0 0.0
    %1504 = vmatpush1.xpose.msra.mxu0 0.0
    %1505 = vmatprep.subr.mxu0 0.0
    %1506 = vmatpush1.xpose.msra.mxu0 0.0
    %1507 = vmatprep.subr.mxu0 0.0
    %1508 = vmatpush1.xpose.msra.mxu0 0.0
    %1509 = vmatprep.subr.mxu0 0.0
    %1510 = vmatpush1.xpose.msra.mxu0 0.0
    %1511 = vmatprep.subr.mxu0 0.0
    %1512 = vmatpush1.xpose.msra.mxu0 0.0
    %1513 = vmatprep.subr.mxu0 0.0
    %1514 = vmatpush1.xpose.msra.mxu0 0.0
    %1515 = vmatprep.subr.mxu0 0.0
    %1516 = vmatpush1.xpose.msra.mxu0 0.0
    %1517 = vmatprep.subr.mxu0 0.0
    %1518 = vmatpush1.xpose.msra.mxu0 0.0
    %1519 = vmatprep.subr.mxu0 0.0
    %1520 = vmatpush1.xpose.msra.mxu0 0.0
    %1521 = vmatprep.subr.mxu0 0.0
    %1522 = vmatpush1.xpose.msra.mxu0 0.0
    %1523 = vmatprep.subr.mxu0 0.0
    %1524 = vmatpush1.xpose.msra.mxu0 0.0
    %1525 = vmatprep.subr.mxu0 0.0
    %1526 = vmatpush1.xpose.msra.mxu0 0.0
    %1527 = vmatprep.subr.mxu0 0.0
    %1528 = vmatpush1.xpose.msra.mxu0 0.0
    %1529 = vmatprep.subr.mxu0 0.0
    %1530 = vmatpush1.xpose.msra.mxu0 0.0
    %1531 = vmatprep.subr.mxu0 0.0
    %1532 = vmatpush1.xpose.msra.mxu0 0.0
    %1533 = vmatprep.subr.mxu0 0.0
    %1534 = vmatpush1.xpose.msra.mxu0 %v1501
    %1535 = vmatprep.subr.mxu0 0.0
    %1536 = vmatpush2.xpose.msra.mxu0 0.0
    %1537 = vmatprep.subr.mxu0 0.0
    %1538 = vmatpush2.xpose.msra.mxu0 0.0
    %1539 = vmatprep.subr.mxu0 0.0
    %1540 = vmatpush2.xpose.msra.mxu0 0.0
    %1541 = vmatprep.subr.mxu0 0.0
    %1542 = vmatpush2.xpose.msra.mxu0 0.0
    %1543 = vmatprep.subr.mxu0 0.0
    %1544 = vmatpush2.xpose.msra.mxu0 0.0
    %1545 = vmatprep.subr.mxu0 0.0
    %1546 = vmatpush2.xpose.msra.mxu0 0.0
    %1547 = vmatprep.subr.mxu0 0.0
    %1548 = vmatpush2.xpose.msra.mxu0 0.0
    %1549 = vmatprep.subr.mxu0 0.0
    %1550 = vmatpush2.xpose.msra.mxu0 0.0
    %1551 = vmatprep.subr.mxu0 0.0
    %1552 = vmatpush2.xpose.msra.mxu0 0.0
    %1553 = vmatprep.subr.mxu0 0.0
    %1554 = vmatpush2.xpose.msra.mxu0 0.0
    %1555 = vmatprep.subr.mxu0 0.0
    %1556 = vmatpush2.xpose.msra.mxu0 0.0
    %1557 = vmatprep.subr.mxu0 0.0
    %1558 = vmatpush2.xpose.msra.mxu0 0.0
    %1559 = vmatprep.subr.mxu0 0.0
    %1560 = vmatpush2.xpose.msra.mxu0 0.0
    %1561 = vmatprep.subr.mxu0 0.0
    %1562 = vmatpush2.xpose.msra.mxu0 0.0
    %1563 = vmatprep.subr.mxu0 0.0
    %1564 = vmatpush2.xpose.msra.mxu0 0.0
    %1565 = vmatprep.subr.mxu0 0.0
    %1566 = vmatpush2.xpose.msra.mxu0 0.0
    %1567 = vmatprep.mubr.f32.mxu0 0.0
    %1568 = vmatmul.mubr.f32.gmra.mxu0 %v1499
    %v1569 = vpop.f32.mrf.mxu0
    %v1570 = vadd.f32 0.0, %v1569
    %v1571 = vpop.f32.mrf.mxu0
    %1572 = vdwg.mxu0
    %1573 = vrot.lane.b32.xlu0 %v1417, 96
    %v1574 = vpop.permute.xlu0 %1573
    %v1575 = vsel %vm236, %v1417, 0
    %v1577 = vsel %vm236, %v1574, 0
    %1579 = vmatprep.subr.mxu0 0.0
    %1580 = vmatpush1.xpose.msra.mxu0 0.0
    %1581 = vmatprep.subr.mxu0 0.0
    %1582 = vmatpush1.xpose.msra.mxu0 0.0
    %1583 = vmatprep.subr.mxu0 0.0
    %1584 = vmatpush1.xpose.msra.mxu0 0.0
    %1585 = vmatprep.subr.mxu0 0.0
    %1586 = vmatpush1.xpose.msra.mxu0 0.0
    %1587 = vmatprep.subr.mxu0 0.0
    %1588 = vmatpush1.xpose.msra.mxu0 0.0
    %1589 = vmatprep.subr.mxu0 0.0
    %1590 = vmatpush1.xpose.msra.mxu0 0.0
    %1591 = vmatprep.subr.mxu0 0.0
    %1592 = vmatpush1.xpose.msra.mxu0 0.0
    %1593 = vmatprep.subr.mxu0 0.0
    %1594 = vmatpush1.xpose.msra.mxu0 0.0
    %1595 = vmatprep.subr.mxu0 0.0
    %1596 = vmatpush1.xpose.msra.mxu0 0.0
    %1597 = vmatprep.subr.mxu0 0.0
    %1598 = vmatpush1.xpose.msra.mxu0 0.0
    %1599 = vmatprep.subr.mxu0 0.0
    %1600 = vmatpush1.xpose.msra.mxu0 0.0
    %1601 = vmatprep.subr.mxu0 0.0
    %1602 = vmatpush1.xpose.msra.mxu0 0.0
    %1603 = vmatprep.subr.mxu0 0.0
    %1604 = vmatpush1.xpose.msra.mxu0 0.0
    %1605 = vmatprep.subr.mxu0 0.0
    %1606 = vmatpush1.xpose.msra.mxu0 0.0
    %1607 = vmatprep.subr.mxu0 0.0
    %1608 = vmatpush1.xpose.msra.mxu0 0.0
    %1609 = vmatprep.subr.mxu0 0.0
    %1610 = vmatpush1.xpose.msra.mxu0 %v1577
    %1611 = vmatprep.subr.mxu0 0.0
    %1612 = vmatpush2.xpose.msra.mxu0 0.0
    %1613 = vmatprep.subr.mxu0 0.0
    %1614 = vmatpush2.xpose.msra.mxu0 0.0
    %1615 = vmatprep.subr.mxu0 0.0
    %1616 = vmatpush2.xpose.msra.mxu0 0.0
    %1617 = vmatprep.subr.mxu0 0.0
    %1618 = vmatpush2.xpose.msra.mxu0 0.0
    %1619 = vmatprep.subr.mxu0 0.0
    %1620 = vmatpush2.xpose.msra.mxu0 0.0
    %1621 = vmatprep.subr.mxu0 0.0
    %1622 = vmatpush2.xpose.msra.mxu0 0.0
    %1623 = vmatprep.subr.mxu0 0.0
    %1624 = vmatpush2.xpose.msra.mxu0 0.0
    %1625 = vmatprep.subr.mxu0 0.0
    %1626 = vmatpush2.xpose.msra.mxu0 0.0
    %1627 = vmatprep.subr.mxu0 0.0
    %1628 = vmatpush2.xpose.msra.mxu0 0.0
    %1629 = vmatprep.subr.mxu0 0.0
    %1630 = vmatpush2.xpose.msra.mxu0 0.0
    %1631 = vmatprep.subr.mxu0 0.0
    %1632 = vmatpush2.xpose.msra.mxu0 0.0
    %1633 = vmatprep.subr.mxu0 0.0
    %1634 = vmatpush2.xpose.msra.mxu0 0.0
    %1635 = vmatprep.subr.mxu0 0.0
    %1636 = vmatpush2.xpose.msra.mxu0 0.0
    %1637 = vmatprep.subr.mxu0 0.0
    %1638 = vmatpush2.xpose.msra.mxu0 0.0
    %1639 = vmatprep.subr.mxu0 0.0
    %1640 = vmatpush2.xpose.msra.mxu0 0.0
    %1641 = vmatprep.subr.mxu0 0.0
    %1642 = vmatpush2.xpose.msra.mxu0 0.0
    %1643 = vmatprep.mubr.f32.mxu0 0.0
    %1644 = vmatmul.mubr.f32.gmra.mxu0 %v1575
    %v1645 = vpop.f32.mrf.mxu0
    %v1646 = vadd.f32 0.0, %v1645
    %v1647 = vpop.f32.mrf.mxu0
    %1648 = vdwg.mxu0
    %1649 = vrot.lane.b32.xlu0 %v1420, 96
    %v1650 = vpop.permute.xlu0 %1649
    %v1651 = vsel %vm236, %v1420, 0
    %v1653 = vsel %vm236, %v1650, 0
    %1655 = vmatprep.subr.mxu0 0.0
    %1656 = vmatpush1.xpose.msra.mxu0 0.0
    %1657 = vmatprep.subr.mxu0 0.0
    %1658 = vmatpush1.xpose.msra.mxu0 0.0
    %1659 = vmatprep.subr.mxu0 0.0
    %1660 = vmatpush1.xpose.msra.mxu0 0.0
    %1661 = vmatprep.subr.mxu0 0.0
    %1662 = vmatpush1.xpose.msra.mxu0 0.0
    %1663 = vmatprep.subr.mxu0 0.0
    %1664 = vmatpush1.xpose.msra.mxu0 0.0
    %1665 = vmatprep.subr.mxu0 0.0
    %1666 = vmatpush1.xpose.msra.mxu0 0.0
    %1667 = vmatprep.subr.mxu0 0.0
    %1668 = vmatpush1.xpose.msra.mxu0 0.0
    %1669 = vmatprep.subr.mxu0 0.0
    %1670 = vmatpush1.xpose.msra.mxu0 0.0
    %1671 = vmatprep.subr.mxu0 0.0
    %1672 = vmatpush1.xpose.msra.mxu0 0.0
    %1673 = vmatprep.subr.mxu0 0.0
    %1674 = vmatpush1.xpose.msra.mxu0 0.0
    %1675 = vmatprep.subr.mxu0 0.0
    %1676 = vmatpush1.xpose.msra.mxu0 0.0
    %1677 = vmatprep.subr.mxu0 0.0
    %1678 = vmatpush1.xpose.msra.mxu0 0.0
    %1679 = vmatprep.subr.mxu0 0.0
    %1680 = vmatpush1.xpose.msra.mxu0 0.0
    %1681 = vmatprep.subr.mxu0 0.0
    %1682 = vmatpush1.xpose.msra.mxu0 0.0
    %1683 = vmatprep.subr.mxu0 0.0
    %1684 = vmatpush1.xpose.msra.mxu0 0.0
    %1685 = vmatprep.subr.mxu0 0.0
    %1686 = vmatpush1.xpose.msra.mxu0 %v1653
    %1687 = vmatprep.subr.mxu0 0.0
    %1688 = vmatpush2.xpose.msra.mxu0 0.0
    %1689 = vmatprep.subr.mxu0 0.0
    %1690 = vmatpush2.xpose.msra.mxu0 0.0
    %1691 = vmatprep.subr.mxu0 0.0
    %1692 = vmatpush2.xpose.msra.mxu0 0.0
    %1693 = vmatprep.subr.mxu0 0.0
    %1694 = vmatpush2.xpose.msra.mxu0 0.0
    %1695 = vmatprep.subr.mxu0 0.0
    %1696 = vmatpush2.xpose.msra.mxu0 0.0
    %1697 = vmatprep.subr.mxu0 0.0
    %1698 = vmatpush2.xpose.msra.mxu0 0.0
    %1699 = vmatprep.subr.mxu0 0.0
    %1700 = vmatpush2.xpose.msra.mxu0 0.0
    %1701 = vmatprep.subr.mxu0 0.0
    %1702 = vmatpush2.xpose.msra.mxu0 0.0
    %1703 = vmatprep.subr.mxu0 0.0
    %1704 = vmatpush2.xpose.msra.mxu0 0.0
    %1705 = vmatprep.subr.mxu0 0.0
    %1706 = vmatpush2.xpose.msra.mxu0 0.0
    %1707 = vmatprep.subr.mxu0 0.0
    %1708 = vmatpush2.xpose.msra.mxu0 0.0
    %1709 = vmatprep.subr.mxu0 0.0
    %1710 = vmatpush2.xpose.msra.mxu0 0.0
    %1711 = vmatprep.subr.mxu0 0.0
    %1712 = vmatpush2.xpose.msra.mxu0 0.0
    %1713 = vmatprep.subr.mxu0 0.0
    %1714 = vmatpush2.xpose.msra.mxu0 0.0
    %1715 = vmatprep.subr.mxu0 0.0
    %1716 = vmatpush2.xpose.msra.mxu0 0.0
    %1717 = vmatprep.subr.mxu0 0.0
    %1718 = vmatpush2.xpose.msra.mxu0 0.0
    %1719 = vmatprep.mubr.f32.mxu0 0.0
    %1720 = vmatmul.mubr.f32.gmra.mxu0 %v1651
    %v1721 = vpop.f32.mrf.mxu0
    %v1722 = vadd.f32 0.0, %v1721
    %v1723 = vpop.f32.mrf.mxu0
    %1724 = vdwg.mxu0
    %v1725 = vmul.f32 %v1494, 0.25
    %v1726 = vmul.f32 %v1570, 0.25
    %v1727 = vmul.f32 %v1646, 0.25
    %v1728 = vmul.f32 %v1722, 0.25
    %v1729 = vadd.f32 %v1725, %v550
    %v1730 = vadd.f32 %v1726, %v554
    %v1731 = vadd.f32 %v1727, %v558
    %v1732 = vadd.f32 %v1728, %v562
    %v1733 = vsel %vm571, %v1729, -inf
    %1734 = vmax.xlane.f32.xlu0 %v1733
    %v1735 = vpop.xlane.xlu0 %1734
    %v1736 = vsel %vm571, %v1730, -inf
    %1737 = vmax.xlane.f32.xlu0 %v1736
    %v1738 = vpop.xlane.xlu0 %1737
    %v1739 = vsel %vm571, %v1731, -inf
    %1740 = vmax.xlane.f32.xlu0 %v1739
    %v1741 = vpop.xlane.xlu0 %1740
    %v1742 = vsel %vm571, %v1732, -inf
    %1743 = vmax.xlane.f32.xlu0 %v1742
    %v1744 = vpop.xlane.xlu0 %1743
    %v1745 = vsub.f32 %v1729, %v1735
    %v1746 = vsub.f32 %v1730, %v1738
    %v1747 = vsub.f32 %v1731, %v1741
    %v1748 = vsub.f32 %v1732, %v1744
    %v1749 = vmul.f32 %v1745, 1.442695
    %v1750 = vpow.pop %v1749
    %v1751 = vmul.f32 %v1746, 1.442695
    %v1752 = vpow.pop %v1751
    %v1753 = vmul.f32 %v1747, 1.442695
    %v1754 = vpow.pop %v1753
    %v1755 = vmul.f32 %v1748, 1.442695
    %v1756 = vpow.pop %v1755
    %v1757 = vsel %vm571, %v1750, 0.0
    %1758 = vadd.xlane.f32.xlu0 %v1757
    %v1759 = vpop.xlane.xlu0 %1758
    %v1760 = vsel %vm571, %v1752, 0.0
    %1761 = vadd.xlane.f32.xlu0 %v1760
    %v1762 = vpop.xlane.xlu0 %1761
    %v1763 = vsel %vm571, %v1754, 0.0
    %1764 = vadd.xlane.f32.xlu0 %v1763
    %v1765 = vpop.xlane.xlu0 %1764
    %v1766 = vsel %vm571, %v1756, 0.0
    %1767 = vadd.xlane.f32.xlu0 %v1766
    %v1768 = vpop.xlane.xlu0 %1767
    %v1769 = vrcp.pop %v1759
    %v1770 = vrcp.pop %v1762
    %v1771 = vrcp.pop %v1765
    %v1772 = vrcp.pop %v1768
    %v1773 = vmul.f32 %v1750, %v1769
    %v1774 = vmul.f32 %v1752, %v1770
    %v1775 = vmul.f32 %v1754, %v1771
    %v1776 = vmul.f32 %v1756, %v1772
    %1777 = vrot.lane.b32.xlu0 %v1407, 64
    %v1778 = vpop.permute.xlu0 %1777
    %v1781 = vsel %vm571, %v1773, 0
    %1783 = vmatprep.subr.mxu0 0.0
    %1784 = vmatpush1.msra.mxu0 0.0
    %1785 = vmatprep.subr.mxu0 0.0
    %1786 = vmatpush1.msra.mxu0 0.0
    %1787 = vmatprep.subr.mxu0 0.0
    %1788 = vmatpush1.msra.mxu0 0.0
    %1789 = vmatprep.subr.mxu0 0.0
    %1790 = vmatpush1.msra.mxu0 0.0
    %1791 = vmatprep.subr.mxu0 0.0
    %1792 = vmatpush1.msra.mxu0 0.0
    %1793 = vmatprep.subr.mxu0 0.0
    %1794 = vmatpush1.msra.mxu0 0.0
    %1795 = vmatprep.subr.mxu0 0.0
    %1796 = vmatpush1.msra.mxu0 0.0
    %1797 = vmatprep.subr.mxu0 0.0
    %1798 = vmatpush1.msra.mxu0 0.0
    %1799 = vmatprep.subr.mxu0 0.0
    %1800 = vmatpush1.msra.mxu0 0.0
    %1801 = vmatprep.subr.mxu0 0.0
    %1802 = vmatpush1.msra.mxu0 0.0
    %1803 = vmatprep.subr.mxu0 0.0
    %1804 = vmatpush1.msra.mxu0 0.0
    %1805 = vmatprep.subr.mxu0 0.0
    %1806 = vmatpush1.msra.mxu0 0.0
    %1807 = vmatprep.subr.mxu0 0.0
    %1808 = vmatpush1.msra.mxu0 0.0
    %1809 = vmatprep.subr.mxu0 0.0
    %1810 = vmatpush1.msra.mxu0 0.0
    %1811 = vmatprep.subr.mxu0 0.0
    %1812 = vmatpush1.msra.mxu0 0.0
    %1813 = vmatprep.subr.mxu0 0.0
    %1814 = vmatpush1.msra.mxu0 %v1778
    %1815 = vmatprep.subr.mxu0 0.0
    %1816 = vmatpush2.msra.mxu0 0.0
    %1817 = vmatprep.subr.mxu0 0.0
    %1818 = vmatpush2.msra.mxu0 0.0
    %1819 = vmatprep.subr.mxu0 0.0
    %1820 = vmatpush2.msra.mxu0 0.0
    %1821 = vmatprep.subr.mxu0 0.0
    %1822 = vmatpush2.msra.mxu0 0.0
    %1823 = vmatprep.subr.mxu0 0.0
    %1824 = vmatpush2.msra.mxu0 0.0
    %1825 = vmatprep.subr.mxu0 0.0
    %1826 = vmatpush2.msra.mxu0 0.0
    %1827 = vmatprep.subr.mxu0 0.0
    %1828 = vmatpush2.msra.mxu0 0.0
    %1829 = vmatprep.subr.mxu0 0.0
    %1830 = vmatpush2.msra.mxu0 0.0
    %1831 = vmatprep.subr.mxu0 0.0
    %1832 = vmatpush2.msra.mxu0 0.0
    %1833 = vmatprep.subr.mxu0 0.0
    %1834 = vmatpush2.msra.mxu0 0.0
    %1835 = vmatprep.subr.mxu0 0.0
    %1836 = vmatpush2.msra.mxu0 0.0
    %1837 = vmatprep.subr.mxu0 0.0
    %1838 = vmatpush2.msra.mxu0 0.0
    %1839 = vmatprep.subr.mxu0 0.0
    %1840 = vmatpush2.msra.mxu0 0.0
    %1841 = vmatprep.subr.mxu0 0.0
    %1842 = vmatpush2.msra.mxu0 0.0
    %1843 = vmatprep.subr.mxu0 0.0
    %1844 = vmatpush2.msra.mxu0 0.0
    %1845 = vmatprep.subr.mxu0 0.0
    %1846 = vmatpush2.msra.mxu0 0.0
    %1847 = vmatprep.mubr.f32.mxu0 0.0
    %1848 = vmatmul.mubr.f32.gmra.mxu0 %v1781
    %v1849 = vpop.f32.mrf.mxu0
    %v1850 = vadd.f32 0.0, %v1849
    %v1851 = vpop.f32.mrf.mxu0
    %1852 = vdwg.mxu0
    %1853 = vrot.lane.b32.xlu0 %v1412, 64
    %v1854 = vpop.permute.xlu0 %1853
    %v1857 = vsel %vm571, %v1774, 0
    %1859 = vmatprep.subr.mxu0 0.0
    %1860 = vmatpush1.msra.mxu0 0.0
    %1861 = vmatprep.subr.mxu0 0.0
    %1862 = vmatpush1.msra.mxu0 0.0
    %1863 = vmatprep.subr.mxu0 0.0
    %1864 = vmatpush1.msra.mxu0 0.0
    %1865 = vmatprep.subr.mxu0 0.0
    %1866 = vmatpush1.msra.mxu0 0.0
    %1867 = vmatprep.subr.mxu0 0.0
    %1868 = vmatpush1.msra.mxu0 0.0
    %1869 = vmatprep.subr.mxu0 0.0
    %1870 = vmatpush1.msra.mxu0 0.0
    %1871 = vmatprep.subr.mxu0 0.0
    %1872 = vmatpush1.msra.mxu0 0.0
    %1873 = vmatprep.subr.mxu0 0.0
    %1874 = vmatpush1.msra.mxu0 0.0
    %1875 = vmatprep.subr.mxu0 0.0
    %1876 = vmatpush1.msra.mxu0 0.0
    %1877 = vmatprep.subr.mxu0 0.0
    %1878 = vmatpush1.msra.mxu0 0.0
    %1879 = vmatprep.subr.mxu0 0.0
    %1880 = vmatpush1.msra.mxu0 0.0
    %1881 = vmatprep.subr.mxu0 0.0
    %1882 = vmatpush1.msra.mxu0 0.0
    %1883 = vmatprep.subr.mxu0 0.0
    %1884 = vmatpush1.msra.mxu0 0.0
    %1885 = vmatprep.subr.mxu0 0.0
    %1886 = vmatpush1.msra.mxu0 0.0
    %1887 = vmatprep.subr.mxu0 0.0
    %1888 = vmatpush1.msra.mxu0 0.0
    %1889 = vmatprep.subr.mxu0 0.0
    %1890 = vmatpush1.msra.mxu0 %v1854
    %1891 = vmatprep.subr.mxu0 0.0
    %1892 = vmatpush2.msra.mxu0 0.0
    %1893 = vmatprep.subr.mxu0 0.0
    %1894 = vmatpush2.msra.mxu0 0.0
    %1895 = vmatprep.subr.mxu0 0.0
    %1896 = vmatpush2.msra.mxu0 0.0
    %1897 = vmatprep.subr.mxu0 0.0
    %1898 = vmatpush2.msra.mxu0 0.0
    %1899 = vmatprep.subr.mxu0 0.0
    %1900 = vmatpush2.msra.mxu0 0.0
    %1901 = vmatprep.subr.mxu0 0.0
    %1902 = vmatpush2.msra.mxu0 0.0
    %1903 = vmatprep.subr.mxu0 0.0
    %1904 = vmatpush2.msra.mxu0 0.0
    %1905 = vmatprep.subr.mxu0 0.0
    %1906 = vmatpush2.msra.mxu0 0.0
    %1907 = vmatprep.subr.mxu0 0.0
    %1908 = vmatpush2.msra.mxu0 0.0
    %1909 = vmatprep.subr.mxu0 0.0
    %1910 = vmatpush2.msra.mxu0 0.0
    %1911 = vmatprep.subr.mxu0 0.0
    %1912 = vmatpush2.msra.mxu0 0.0
    %1913 = vmatprep.subr.mxu0 0.0
    %1914 = vmatpush2.msra.mxu0 0.0
    %1915 = vmatprep.subr.mxu0 0.0
    %1916 = vmatpush2.msra.mxu0 0.0
    %1917 = vmatprep.subr.mxu0 0.0
    %1918 = vmatpush2.msra.mxu0 0.0
    %1919 = vmatprep.subr.mxu0 0.0
    %1920 = vmatpush2.msra.mxu0 0.0
    %1921 = vmatprep.subr.mxu0 0.0
    %1922 = vmatpush2.msra.mxu0 0.0
    %1923 = vmatprep.mubr.f32.mxu0 0.0
    %1924 = vmatmul.mubr.f32.gmra.mxu0 %v1857
    %v1925 = vpop.f32.mrf.mxu0
    %v1926 = vadd.f32 0.0, %v1925
    %v1927 = vpop.f32.mrf.mxu0
    %1928 = vdwg.mxu0
    %1929 = vrot.lane.b32.xlu0 %v1417, 64
    %v1930 = vpop.permute.xlu0 %1929
    %v1933 = vsel %vm571, %v1775, 0
    %1935 = vmatprep.subr.mxu0 0.0
    %1936 = vmatpush1.msra.mxu0 0.0
    %1937 = vmatprep.subr.mxu0 0.0
    %1938 = vmatpush1.msra.mxu0 0.0
    %1939 = vmatprep.subr.mxu0 0.0
    %1940 = vmatpush1.msra.mxu0 0.0
    %1941 = vmatprep.subr.mxu0 0.0
    %1942 = vmatpush1.msra.mxu0 0.0
    %1943 = vmatprep.subr.mxu0 0.0
    %1944 = vmatpush1.msra.mxu0 0.0
    %1945 = vmatprep.subr.mxu0 0.0
    %1946 = vmatpush1.msra.mxu0 0.0
    %1947 = vmatprep.subr.mxu0 0.0
    %1948 = vmatpush1.msra.mxu0 0.0
    %1949 = vmatprep.subr.mxu0 0.0
    %1950 = vmatpush1.msra.mxu0 0.0
    %1951 = vmatprep.subr.mxu0 0.0
    %1952 = vmatpush1.msra.mxu0 0.0
    %1953 = vmatprep.subr.mxu0 0.0
    %1954 = vmatpush1.msra.mxu0 0.0
    %1955 = vmatprep.subr.mxu0 0.0
    %1956 = vmatpush1.msra.mxu0 0.0
    %1957 = vmatprep.subr.mxu0 0.0
    %1958 = vmatpush1.msra.mxu0 0.0
    %1959 = vmatprep.subr.mxu0 0.0
    %1960 = vmatpush1.msra.mxu0 0.0
    %1961 = vmatprep.subr.mxu0 0.0
    %1962 = vmatpush1.msra.mxu0 0.0
    %1963 = vmatprep.subr.mxu0 0.0
    %1964 = vmatpush1.msra.mxu0 0.0
    %1965 = vmatprep.subr.mxu0 0.0
    %1966 = vmatpush1.msra.mxu0 %v1930
    %1967 = vmatprep.subr.mxu0 0.0
    %1968 = vmatpush2.msra.mxu0 0.0
    %1969 = vmatprep.subr.mxu0 0.0
    %1970 = vmatpush2.msra.mxu0 0.0
    %1971 = vmatprep.subr.mxu0 0.0
    %1972 = vmatpush2.msra.mxu0 0.0
    %1973 = vmatprep.subr.mxu0 0.0
    %1974 = vmatpush2.msra.mxu0 0.0
    %1975 = vmatprep.subr.mxu0 0.0
    %1976 = vmatpush2.msra.mxu0 0.0
    %1977 = vmatprep.subr.mxu0 0.0
    %1978 = vmatpush2.msra.mxu0 0.0
    %1979 = vmatprep.subr.mxu0 0.0
    %1980 = vmatpush2.msra.mxu0 0.0
    %1981 = vmatprep.subr.mxu0 0.0
    %1982 = vmatpush2.msra.mxu0 0.0
    %1983 = vmatprep.subr.mxu0 0.0
    %1984 = vmatpush2.msra.mxu0 0.0
    %1985 = vmatprep.subr.mxu0 0.0
    %1986 = vmatpush2.msra.mxu0 0.0
    %1987 = vmatprep.subr.mxu0 0.0
    %1988 = vmatpush2.msra.mxu0 0.0
    %1989 = vmatprep.subr.mxu0 0.0
    %1990 = vmatpush2.msra.mxu0 0.0
    %1991 = vmatprep.subr.mxu0 0.0
    %1992 = vmatpush2.msra.mxu0 0.0
    %1993 = vmatprep.subr.mxu0 0.0
    %1994 = vmatpush2.msra.mxu0 0.0
    %1995 = vmatprep.subr.mxu0 0.0
    %1996 = vmatpush2.msra.mxu0 0.0
    %1997 = vmatprep.subr.mxu0 0.0
    %1998 = vmatpush2.msra.mxu0 0.0
    %1999 = vmatprep.mubr.f32.mxu0 0.0
    %2000 = vmatmul.mubr.f32.gmra.mxu0 %v1933
    %v2001 = vpop.f32.mrf.mxu0
    %v2002 = vadd.f32 0.0, %v2001
    %v2003 = vpop.f32.mrf.mxu0
    %2004 = vdwg.mxu0
    %2005 = vrot.lane.b32.xlu0 %v1420, 64
    %v2006 = vpop.permute.xlu0 %2005
    %v2009 = vsel %vm571, %v1776, 0
    %2011 = vmatprep.subr.mxu0 0.0
    %2012 = vmatpush1.msra.mxu0 0.0
    %2013 = vmatprep.subr.mxu0 0.0
    %2014 = vmatpush1.msra.mxu0 0.0
    %2015 = vmatprep.subr.mxu0 0.0
    %2016 = vmatpush1.msra.mxu0 0.0
    %2017 = vmatprep.subr.mxu0 0.0
    %2018 = vmatpush1.msra.mxu0 0.0
    %2019 = vmatprep.subr.mxu0 0.0
    %2020 = vmatpush1.msra.mxu0 0.0
    %2021 = vmatprep.subr.mxu0 0.0
    %2022 = vmatpush1.msra.mxu0 0.0
    %2023 = vmatprep.subr.mxu0 0.0
    %2024 = vmatpush1.msra.mxu0 0.0
    %2025 = vmatprep.subr.mxu0 0.0
    %2026 = vmatpush1.msra.mxu0 0.0
    %2027 = vmatprep.subr.mxu0 0.0
    %2028 = vmatpush1.msra.mxu0 0.0
    %2029 = vmatprep.subr.mxu0 0.0
    %2030 = vmatpush1.msra.mxu0 0.0
    %2031 = vmatprep.subr.mxu0 0.0
    %2032 = vmatpush1.msra.mxu0 0.0
    %2033 = vmatprep.subr.mxu0 0.0
    %2034 = vmatpush1.msra.mxu0 0.0
    %2035 = vmatprep.subr.mxu0 0.0
    %2036 = vmatpush1.msra.mxu0 0.0
    %2037 = vmatprep.subr.mxu0 0.0
    %2038 = vmatpush1.msra.mxu0 0.0
    %2039 = vmatprep.subr.mxu0 0.0
    %2040 = vmatpush1.msra.mxu0 0.0
    %2041 = vmatprep.subr.mxu0 0.0
    %2042 = vmatpush1.msra.mxu0 %v2006
    %2043 = vmatprep.subr.mxu0 0.0
    %2044 = vmatpush2.msra.mxu0 0.0
    %2045 = vmatprep.subr.mxu0 0.0
    %2046 = vmatpush2.msra.mxu0 0.0
    %2047 = vmatprep.subr.mxu0 0.0
    %2048 = vmatpush2.msra.mxu0 0.0
    %2049 = vmatprep.subr.mxu0 0.0
    %2050 = vmatpush2.msra.mxu0 0.0
    %2051 = vmatprep.subr.mxu0 0.0
    %2052 = vmatpush2.msra.mxu0 0.0
    %2053 = vmatprep.subr.mxu0 0.0
    %2054 = vmatpush2.msra.mxu0 0.0
    %2055 = vmatprep.subr.mxu0 0.0
    %2056 = vmatpush2.msra.mxu0 0.0
    %2057 = vmatprep.subr.mxu0 0.0
    %2058 = vmatpush2.msra.mxu0 0.0
    %2059 = vmatprep.subr.mxu0 0.0
    %2060 = vmatpush2.msra.mxu0 0.0
    %2061 = vmatprep.subr.mxu0 0.0
    %2062 = vmatpush2.msra.mxu0 0.0
    %2063 = vmatprep.subr.mxu0 0.0
    %2064 = vmatpush2.msra.mxu0 0.0
    %2065 = vmatprep.subr.mxu0 0.0
    %2066 = vmatpush2.msra.mxu0 0.0
    %2067 = vmatprep.subr.mxu0 0.0
    %2068 = vmatpush2.msra.mxu0 0.0
    %2069 = vmatprep.subr.mxu0 0.0
    %2070 = vmatpush2.msra.mxu0 0.0
    %2071 = vmatprep.subr.mxu0 0.0
    %2072 = vmatpush2.msra.mxu0 0.0
    %2073 = vmatprep.subr.mxu0 0.0
    %2074 = vmatpush2.msra.mxu0 0.0
    %2075 = vmatprep.mubr.f32.mxu0 0.0
    %2076 = vmatmul.mubr.f32.gmra.mxu0 %v2009
    %v2077 = vpop.f32.mrf.mxu0
    %v2078 = vadd.f32 0.0, %v2077
    %v2079 = vpop.f32.mrf.mxu0
    %2080 = vdwg.mxu0
    %2082 = vrot.lane.b32.xlu0 %v2002, 16
    %v2083 = vpop.permute.xlu0 %2082
    %v2085 = vsel %vm236, %v1850, %v2083
    %2087 = vrot.lane.b32.xlu0 %v2078, 16
    %v2088 = vpop.permute.xlu0 %2087
    %v2090 = vsel %vm236, %v1926, %v2088
    %s2091 = scalar_lea.vmem %s8, 32
    %v2092 = vld [vmem:[%s2091] sm:$0xff]
    %v2093 = vld [vmem:[%s2091 + $0x8] sm:$0xff]
    %v2094 = vld [vmem:[%s2091 + $0x10] sm:$0xff]
    %v2095 = vld [vmem:[%s2091 + $0x18] sm:$0xff]
    %s2096 = scalar_lea.vmem %s9, 1
    %v2097 = vld [vmem:[%s2096] sm:$0x1]
    %v2099 = vlaneseq
    %v2100 = vshrl.u32 %v2099, 7
    %v2101 = vsub.s32 0, %v2100
    %v2102 = vrot.slane %v2097, %v2101
    %v2105 = vsel %vm88, %v2085, 0
    %v2108 = vsel %vm88, %v2090, 0
    %2110 = vmatprep.subr.mxu0 0.0
    %2111 = vmatpush1.msra.mxu0 0.0
    %2112 = vmatprep.subr.mxu0 0.0
    %2113 = vmatpush1.msra.mxu0 0.0
    %2114 = vmatprep.subr.mxu0 0.0
    %2115 = vmatpush1.msra.mxu0 0.0
    %2116 = vmatprep.subr.mxu0 0.0
    %2117 = vmatpush1.msra.mxu0 0.0
    %2118 = vmatprep.subr.mxu0 0.0
    %2119 = vmatpush1.msra.mxu0 0.0
    %2120 = vmatprep.subr.mxu0 0.0
    %2121 = vmatpush1.msra.mxu0 0.0
    %2122 = vmatprep.subr.mxu0 0.0
    %2123 = vmatpush1.msra.mxu0 0.0
    %2124 = vmatprep.subr.mxu0 0.0
    %2125 = vmatpush1.msra.mxu0 0.0
    %2126 = vmatprep.subr.mxu0 0.0
    %2127 = vmatpush1.msra.mxu0 0.0
    %2128 = vmatprep.subr.mxu0 0.0
    %2129 = vmatpush1.msra.mxu0 0.0
    %2130 = vmatprep.subr.mxu0 0.0
    %2131 = vmatpush1.msra.mxu0 0.0
    %2132 = vmatprep.subr.mxu0 0.0
    %2133 = vmatpush1.msra.mxu0 0.0
    %2134 = vmatprep.subr.mxu0 0.0
    %2135 = vmatpush1.msra.mxu0 %v2095
    %2136 = vmatprep.subr.mxu0 0.0
    %2137 = vmatpush1.msra.mxu0 %v2094
    %2138 = vmatprep.subr.mxu0 0.0
    %2139 = vmatpush1.msra.mxu0 %v2093
    %2140 = vmatprep.subr.mxu0 0.0
    %2141 = vmatpush1.msra.mxu0 %v2092
    %2142 = vmatprep.subr.mxu0 0.0
    %2143 = vmatpush2.msra.mxu0 0.0
    %2144 = vmatprep.subr.mxu0 0.0
    %2145 = vmatpush2.msra.mxu0 0.0
    %2146 = vmatprep.subr.mxu0 0.0
    %2147 = vmatpush2.msra.mxu0 0.0
    %2148 = vmatprep.subr.mxu0 0.0
    %2149 = vmatpush2.msra.mxu0 0.0
    %2150 = vmatprep.subr.mxu0 0.0
    %2151 = vmatpush2.msra.mxu0 0.0
    %2152 = vmatprep.subr.mxu0 0.0
    %2153 = vmatpush2.msra.mxu0 0.0
    %2154 = vmatprep.subr.mxu0 0.0
    %2155 = vmatpush2.msra.mxu0 0.0
    %2156 = vmatprep.subr.mxu0 0.0
    %2157 = vmatpush2.msra.mxu0 0.0
    %2158 = vmatprep.subr.mxu0 0.0
    %2159 = vmatpush2.msra.mxu0 0.0
    %2160 = vmatprep.subr.mxu0 0.0
    %2161 = vmatpush2.msra.mxu0 0.0
    %2162 = vmatprep.subr.mxu0 0.0
    %2163 = vmatpush2.msra.mxu0 0.0
    %2164 = vmatprep.subr.mxu0 0.0
    %2165 = vmatpush2.msra.mxu0 0.0
    %2166 = vmatprep.subr.mxu0 0.0
    %2167 = vmatpush2.msra.mxu0 0.0
    %2168 = vmatprep.subr.mxu0 0.0
    %2169 = vmatpush2.msra.mxu0 0.0
    %2170 = vmatprep.subr.mxu0 0.0
    %2171 = vmatpush2.msra.mxu0 0.0
    %2172 = vmatprep.subr.mxu0 0.0
    %2173 = vmatpush2.msra.mxu0 0.0
    %2174 = vmatprep.mubr.f32.mxu0 0.0
    %2175 = vmatmul.mubr.f32.gmra.mxu0 %v2105
    %v2176 = vpop.f32.mrf.mxu0
    %v2177 = vadd.f32 %v2102, %v2176
    %v2178 = vpop.f32.mrf.mxu0
    %2179 = vmatprep.mubr.f32.mxu0 0.0
    %2180 = vmatmul.mubr.f32.gmra.mxu0 %v2108
    %v2181 = vpop.f32.mrf.mxu0
    %v2182 = vadd.f32 %v2102, %v2181
    %v2183 = vpop.f32.mrf.mxu0
    %2184 = vdwg.mxu0
    %v2185 = vadd.f32 %v1319, %v2177
    %v2186 = vadd.f32 %v1320, %v2182
    %s2187 = scalar_lea.vmem %s10, 1
    %v2188 = vld [vmem:[%s2187] sm:$0x1]
    %s2189 = scalar_lea.vmem %s11, 1
    %v2190 = vld [vmem:[%s2189] sm:$0x1]
    %v2191 = vsel %vm88, %v2185, 0.0
    %2192 = vadd.xlane.f32.xlu0 %v2191
    %v2193 = vpop.xlane.xlu0 %2192
    %v2194 = vsel %vm88, %v2186, 0.0
    %2195 = vadd.xlane.f32.xlu0 %v2194
    %v2196 = vpop.xlane.xlu0 %2195
    %v2197 = vmul.f32 %v2193, %v95
    %v2198 = vmul.f32 %v2196, %v95
    %v2199 = vsub.f32 %v2185, %v2197
    %v2200 = vsub.f32 %v2186, %v2198
    %v2201 = vmul.f32 %v2199, %v2199
    %v2202 = vmul.f32 %v2200, %v2200
    %v2203 = vsel %vm88, %v2201, 0.0
    %2204 = vadd.xlane.f32.xlu0 %v2203
    %v2205 = vpop.xlane.xlu0 %2204
    %v2206 = vsel %vm88, %v2202, 0.0
    %2207 = vadd.xlane.f32.xlu0 %v2206
    %v2208 = vpop.xlane.xlu0 %2207
    %v2209 = vmul.f32 %v2205, %v95
    %v2210 = vmul.f32 %v2208, %v95
    %v2211 = vadd.f32 %v2209, 1e-12
    %v2212 = vadd.f32 %v2210, 1e-12
    %v2213 = vrsqrt.pop %v2211
    %v2214 = vrsqrt.pop %v2212
    %v2215 = vmul.f32 %v2199, %v2213
    %v2216 = vmul.f32 %v2200, %v2214
    %v2218 = vlaneseq
    %v2219 = vshrl.u32 %v2218, 7
    %v2220 = vsub.s32 0, %v2219
    %v2221 = vrot.slane %v2188, %v2220
    %v2223 = vmul.f32 %v2215, %v2221
    %v2224 = vmul.f32 %v2216, %v2221
    %v2226 = vlaneseq
    %v2227 = vshrl.u32 %v2226, 7
    %v2228 = vsub.s32 0, %v2227
    %v2229 = vrot.slane %v2190, %v2228
    %v2231 = vadd.f32 %v2223, %v2229
    %v2232 = vadd.f32 %v2224, %v2229
    %s2233 = scalar_lea.vmem %s12, 32
    %v2234 = vld [vmem:[%s2233] sm:$0xff]
    %v2235 = vld [vmem:[%s2233 + $0x8] sm:$0xff]
    %v2236 = vld [vmem:[%s2233 + $0x10] sm:$0xff]
    %v2237 = vld [vmem:[%s2233 + $0x18] sm:$0xff]
    %s2238 = scalar_lea.vmem %s13, 1
    %v2239 = vld [vmem:[%s2238] sm:$0x1]
    %v2241 = vlaneseq
    %v2242 = vshrl.u32 %v2241, 7
    %v2243 = vsub.s32 0, %v2242
    %v2244 = vrot.slane %v2239, %v2243
    %v2247 = vsel %vm88, %v2231, 0
    %v2250 = vsel %vm88, %v2232, 0
    %2252 = vmatprep.subr.mxu0 0.0
    %2253 = vmatpush1.msra.mxu0 0.0
    %2254 = vmatprep.subr.mxu0 0.0
    %2255 = vmatpush1.msra.mxu0 0.0
    %2256 = vmatprep.subr.mxu0 0.0
    %2257 = vmatpush1.msra.mxu0 0.0
    %2258 = vmatprep.subr.mxu0 0.0
    %2259 = vmatpush1.msra.mxu0 0.0
    %2260 = vmatprep.subr.mxu0 0.0
    %2261 = vmatpush1.msra.mxu0 0.0
    %2262 = vmatprep.subr.mxu0 0.0
    %2263 = vmatpush1.msra.mxu0 0.0
    %2264 = vmatprep.subr.mxu0 0.0
    %2265 = vmatpush1.msra.mxu0 0.0
    %2266 = vmatprep.subr.mxu0 0.0
    %2267 = vmatpush1.msra.mxu0 0.0
    %2268 = vmatprep.subr.mxu0 0.0
    %2269 = vmatpush1.msra.mxu0 0.0
    %2270 = vmatprep.subr.mxu0 0.0
    %2271 = vmatpush1.msra.mxu0 0.0
    %2272 = vmatprep.subr.mxu0 0.0
    %2273 = vmatpush1.msra.mxu0 0.0
    %2274 = vmatprep.subr.mxu0 0.0
    %2275 = vmatpush1.msra.mxu0 0.0
    %2276 = vmatprep.subr.mxu0 0.0
    %2277 = vmatpush1.msra.mxu0 %v2237
    %2278 = vmatprep.subr.mxu0 0.0
    %2279 = vmatpush1.msra.mxu0 %v2236
    %2280 = vmatprep.subr.mxu0 0.0
    %2281 = vmatpush1.msra.mxu0 %v2235
    %2282 = vmatprep.subr.mxu0 0.0
    %2283 = vmatpush1.msra.mxu0 %v2234
    %2284 = vmatprep.subr.mxu0 0.0
    %2285 = vmatpush2.msra.mxu0 0.0
    %2286 = vmatprep.subr.mxu0 0.0
    %2287 = vmatpush2.msra.mxu0 0.0
    %2288 = vmatprep.subr.mxu0 0.0
    %2289 = vmatpush2.msra.mxu0 0.0
    %2290 = vmatprep.subr.mxu0 0.0
    %2291 = vmatpush2.msra.mxu0 0.0
    %2292 = vmatprep.subr.mxu0 0.0
    %2293 = vmatpush2.msra.mxu0 0.0
    %2294 = vmatprep.subr.mxu0 0.0
    %2295 = vmatpush2.msra.mxu0 0.0
    %2296 = vmatprep.subr.mxu0 0.0
    %2297 = vmatpush2.msra.mxu0 0.0
    %2298 = vmatprep.subr.mxu0 0.0
    %2299 = vmatpush2.msra.mxu0 0.0
    %2300 = vmatprep.subr.mxu0 0.0
    %2301 = vmatpush2.msra.mxu0 0.0
    %2302 = vmatprep.subr.mxu0 0.0
    %2303 = vmatpush2.msra.mxu0 0.0
    %2304 = vmatprep.subr.mxu0 0.0
    %2305 = vmatpush2.msra.mxu0 0.0
    %2306 = vmatprep.subr.mxu0 0.0
    %2307 = vmatpush2.msra.mxu0 0.0
    %2308 = vmatprep.subr.mxu0 0.0
    %2309 = vmatpush2.msra.mxu0 0.0
    %2310 = vmatprep.subr.mxu0 0.0
    %2311 = vmatpush2.msra.mxu0 0.0
    %2312 = vmatprep.subr.mxu0 0.0
    %2313 = vmatpush2.msra.mxu0 0.0
    %2314 = vmatprep.subr.mxu0 0.0
    %2315 = vmatpush2.msra.mxu0 0.0
    %2316 = vmatprep.mubr.f32.mxu0 0.0
    %2317 = vmatmul.mubr.f32.gmra.mxu0 %v2247
    %v2318 = vpop.f32.mrf.mxu0
    %v2319 = vadd.f32 %v2244, %v2318
    %v2320 = vpop.f32.mrf.mxu0
    %2321 = vmatprep.mubr.f32.mxu0 0.0
    %2322 = vmatmul.mubr.f32.gmra.mxu0 %v2250
    %v2323 = vpop.f32.mrf.mxu0
    %v2324 = vadd.f32 %v2244, %v2323
    %v2325 = vpop.f32.mrf.mxu0
    %2326 = vdwg.mxu0
    %v2327 = vmul.f32 %v2319, 0.5
    %v2328 = vmul.f32 %v2324, 0.5
    %v2329 = vmul.f32 %v2319, 0.044715
    %v2330 = vmul.f32 %v2324, 0.044715
    %v2331 = vmul.f32 %v2329, %v2319
    %v2332 = vmul.f32 %v2330, %v2324
    %v2333 = vmul.f32 %v2331, %v2319
    %v2334 = vmul.f32 %v2332, %v2324
    %v2335 = vadd.f32 %v2319, %v2333
    %v2336 = vadd.f32 %v2324, %v2334
    %v2337 = vmul.f32 %v2335, 0.7978846
    %v2338 = vmul.f32 %v2336, 0.7978846
    %v2339 = vtanh.pop %v2337
    %v2340 = vtanh.pop %v2338
    %v2341 = vadd.f32 %v2339, 1.0
    %v2342 = vadd.f32 %v2340, 1.0
    %v2343 = vmul.f32 %v2327, %v2341
    %v2344 = vmul.f32 %v2328, %v2342
    %s2345 = scalar_lea.vmem %s14, 64
    %v2346 = vld [vmem:[%s2345] sm:$0xff]
    %v2347 = vld [vmem:[%s2345 + $0x8] sm:$0xff]
    %v2348 = vld [vmem:[%s2345 + $0x10] sm:$0xff]
    %v2349 = vld [vmem:[%s2345 + $0x18] sm:$0xff]
    %v2350 = vld [vmem:[%s2345 + $0x20] sm:$0xff]
    %v2351 = vld [vmem:[%s2345 + $0x28] sm:$0xff]
    %v2352 = vld [vmem:[%s2345 + $0x30] sm:$0xff]
    %v2353 = vld [vmem:[%s2345 + $0x38] sm:$0xff]
    %s2354 = scalar_lea.vmem %s15, 1
    %v2355 = vld [vmem:[%s2354] sm:$0x1]
    %v2357 = vlaneseq
    %v2358 = vshrl.u32 %v2357, 7
    %v2359 = vsub.s32 0, %v2358
    %v2360 = vrot.slane %v2355, %v2359
    %v2363 = vsel %vm1193, %v2343, 0
    %v2366 = vsel %vm1193, %v2344, 0
    %2368 = vmatprep.subr.mxu0 0.0
    %2369 = vmatpush1.msra.mxu0 0.0
    %2370 = vmatprep.subr.mxu0 0.0
    %2371 = vmatpush1.msra.mxu0 0.0
    %2372 = vmatprep.subr.mxu0 0.0
    %2373 = vmatpush1.msra.mxu0 0.0
    %2374 = vmatprep.subr.mxu0 0.0
    %2375 = vmatpush1.msra.mxu0 0.0
    %2376 = vmatprep.subr.mxu0 0.0
    %2377 = vmatpush1.msra.mxu0 0.0
    %2378 = vmatprep.subr.mxu0 0.0
    %2379 = vmatpush1.msra.mxu0 0.0
    %2380 = vmatprep.subr.mxu0 0.0
    %2381 = vmatpush1.msra.mxu0 0.0
    %2382 = vmatprep.subr.mxu0 0.0
    %2383 = vmatpush1.msra.mxu0 0.0
    %2384 = vmatprep.subr.mxu0 0.0
    %2385 = vmatpush1.msra.mxu0 %v2353
    %2386 = vmatprep.subr.mxu0 0.0
    %2387 = vmatpush1.msra.mxu0 %v2352
    %2388 = vmatprep.subr.mxu0 0.0
    %2389 = vmatpush1.msra.mxu0 %v2351
    %2390 = vmatprep.subr.mxu0 0.0
    %2391 = vmatpush1.msra.mxu0 %v2350
    %2392 = vmatprep.subr.mxu0 0.0
    %2393 = vmatpush1.msra.mxu0 %v2349
    %2394 = vmatprep.subr.mxu0 0.0
    %2395 = vmatpush1.msra.mxu0 %v2348
    %2396 = vmatprep.subr.mxu0 0.0
    %2397 = vmatpush1.msra.mxu0 %v2347
    %2398 = vmatprep.subr.mxu0 0.0
    %2399 = vmatpush1.msra.mxu0 %v2346
    %2400 = vmatprep.subr.mxu0 0.0
    %2401 = vmatpush2.msra.mxu0 0.0
    %2402 = vmatprep.subr.mxu0 0.0
    %2403 = vmatpush2.msra.mxu0 0.0
    %2404 = vmatprep.subr.mxu0 0.0
    %2405 = vmatpush2.msra.mxu0 0.0
    %2406 = vmatprep.subr.mxu0 0.0
    %2407 = vmatpush2.msra.mxu0 0.0
    %2408 = vmatprep.subr.mxu0 0.0
    %2409 = vmatpush2.msra.mxu0 0.0
    %2410 = vmatprep.subr.mxu0 0.0
    %2411 = vmatpush2.msra.mxu0 0.0
    %2412 = vmatprep.subr.mxu0 0.0
    %2413 = vmatpush2.msra.mxu0 0.0
    %2414 = vmatprep.subr.mxu0 0.0
    %2415 = vmatpush2.msra.mxu0 0.0
    %2416 = vmatprep.subr.mxu0 0.0
    %2417 = vmatpush2.msra.mxu0 0.0
    %2418 = vmatprep.subr.mxu0 0.0
    %2419 = vmatpush2.msra.mxu0 0.0
    %2420 = vmatprep.subr.mxu0 0.0
    %2421 = vmatpush2.msra.mxu0 0.0
    %2422 = vmatprep.subr.mxu0 0.0
    %2423 = vmatpush2.msra.mxu0 0.0
    %2424 = vmatprep.subr.mxu0 0.0
    %2425 = vmatpush2.msra.mxu0 0.0
    %2426 = vmatprep.subr.mxu0 0.0
    %2427 = vmatpush2.msra.mxu0 0.0
    %2428 = vmatprep.subr.mxu0 0.0
    %2429 = vmatpush2.msra.mxu0 0.0
    %2430 = vmatprep.subr.mxu0 0.0
    %2431 = vmatpush2.msra.mxu0 0.0
    %2432 = vmatprep.mubr.f32.mxu0 0.0
    %2433 = vmatmul.mubr.f32.gmra.mxu0 %v2363
    %v2434 = vpop.f32.mrf.mxu0
    %v2435 = vadd.f32 %v2360, %v2434
    %v2436 = vpop.f32.mrf.mxu0
    %2437 = vmatprep.mubr.f32.mxu0 0.0
    %2438 = vmatmul.mubr.f32.gmra.mxu0 %v2366
    %v2439 = vpop.f32.mrf.mxu0
    %v2440 = vadd.f32 %v2360, %v2439
    %v2441 = vpop.f32.mrf.mxu0
    %2442 = vdwg.mxu0
    %v2443 = vadd.f32 %v2231, %v2435
    %v2444 = vadd.f32 %v2232, %v2440
    %s2445 = scalar_lea.vmem %s16, 1
    %v2446 = vld [vmem:[%s2445] sm:$0x1]
    %s2447 = scalar_lea.vmem %s17, 1
    %v2448 = vld [vmem:[%s2447] sm:$0x1]
    %v2449 = vsel %vm88, %v2443, 0.0
    %2450 = vadd.xlane.f32.xlu0 %v2449
    %v2451 = vpop.xlane.xlu0 %2450
    %v2452 = vsel %vm88, %v2444, 0.0
    %2453 = vadd.xlane.f32.xlu0 %v2452
    %v2454 = vpop.xlane.xlu0 %2453
    %v2455 = vmul.f32 %v2451, %v95
    %v2456 = vmul.f32 %v2454, %v95
    %v2457 = vsub.f32 %v2443, %v2455
    %v2458 = vsub.f32 %v2444, %v2456
    %v2459 = vmul.f32 %v2457, %v2457
    %v2460 = vmul.f32 %v2458, %v2458
    %v2461 = vsel %vm88, %v2459, 0.0
    %2462 = vadd.xlane.f32.xlu0 %v2461
    %v2463 = vpop.xlane.xlu0 %2462
    %v2464 = vsel %vm88, %v2460, 0.0
    %2465 = vadd.xlane.f32.xlu0 %v2464
    %v2466 = vpop.xlane.xlu0 %2465
    %v2467 = vmul.f32 %v2463, %v95
    %v2468 = vmul.f32 %v2466, %v95
    %v2469 = vadd.f32 %v2467, 1e-12
    %v2470 = vadd.f32 %v2468, 1e-12
    %v2471 = vrsqrt.pop %v2469
    %v2472 = vrsqrt.pop %v2470
    %v2473 = vmul.f32 %v2457, %v2471
    %v2474 = vmul.f32 %v2458, %v2472
    %v2476 = vlaneseq
    %v2477 = vshrl.u32 %v2476, 7
    %v2478 = vsub.s32 0, %v2477
    %v2479 = vrot.slane %v2446, %v2478
    %v2481 = vmul.f32 %v2473, %v2479
    %v2482 = vmul.f32 %v2474, %v2479
    %v2484 = vlaneseq
    %v2485 = vshrl.u32 %v2484, 7
    %v2486 = vsub.s32 0, %v2485
    %v2487 = vrot.slane %v2448, %v2486
    %v2489 = vadd.f32 %v2481, %v2487
    %v2490 = vadd.f32 %v2482, %v2487
    %v2492 = vrot.slane %v2490, 7
    %vm2494 = vcmask 1040384
    %v2495 = vsel %vm2494, %v2489, %v2492
    %v2496 = vld [vmem:[%s18] sm:$0xff]
    %v2497 = vld [vmem:[%s18 + $0x8] sm:$0xff]
    %v2498 = vld [vmem:[%s18 + $0x10] sm:$0xff]
    %v2499 = vld [vmem:[%s18 + $0x18] sm:$0xff]
    %v2500 = vld [vmem:[%s19] sm:$0x1]
    %v2502 = vlaneseq
    %v2503 = vshrl.u32 %v2502, 7
    %v2504 = vsub.s32 0, %v2503
    %v2505 = vrot.slane %v2500, %v2504
    %v2508 = vsel %vm88, %v2495, 0
    %2510 = vmatprep.subr.mxu0 0.0
    %2511 = vmatpush1.msra.mxu0 0.0
    %2512 = vmatprep.subr.mxu0 0.0
    %2513 = vmatpush1.msra.mxu0 0.0
    %2514 = vmatprep.subr.mxu0 0.0
    %2515 = vmatpush1.msra.mxu0 0.0
    %2516 = vmatprep.subr.mxu0 0.0
    %2517 = vmatpush1.msra.mxu0 0.0
    %2518 = vmatprep.subr.mxu0 0.0
    %2519 = vmatpush1.msra.mxu0 0.0
    %2520 = vmatprep.subr.mxu0 0.0
    %2521 = vmatpush1.msra.mxu0 0.0
    %2522 = vmatprep.subr.mxu0 0.0
    %2523 = vmatpush1.msra.mxu0 0.0
    %2524 = vmatprep.subr.mxu0 0.0
    %2525 = vmatpush1.msra.mxu0 0.0
    %2526 = vmatprep.subr.mxu0 0.0
    %2527 = vmatpush1.msra.mxu0 0.0
    %2528 = vmatprep.subr.mxu0 0.0
    %2529 = vmatpush1.msra.mxu0 0.0
    %2530 = vmatprep.subr.mxu0 0.0
    %2531 = vmatpush1.msra.mxu0 0.0
    %2532 = vmatprep.subr.mxu0 0.0
    %2533 = vmatpush1.msra.mxu0 0.0
    %2534 = vmatprep.subr.mxu0 0.0
    %2535 = vmatpush1.msra.mxu0 %v2499
    %2536 = vmatprep.subr.mxu0 0.0
    %2537 = vmatpush1.msra.mxu0 %v2498
    %2538 = vmatprep.subr.mxu0 0.0
    %2539 = vmatpush1.msra.mxu0 %v2497
    %2540 = vmatprep.subr.mxu0 0.0
    %2541 = vmatpush1.msra.mxu0 %v2496
    %2542 = vmatprep.subr.mxu0 0.0
    %2543 = vmatpush2.msra.mxu0 0.0
    %2544 = vmatprep.subr.mxu0 0.0
    %2545 = vmatpush2.msra.mxu0 0.0
    %2546 = vmatprep.subr.mxu0 0.0
    %2547 = vmatpush2.msra.mxu0 0.0
    %2548 = vmatprep.subr.mxu0 0.0
    %2549 = vmatpush2.msra.mxu0 0.0
    %2550 = vmatprep.subr.mxu0 0.0
    %2551 = vmatpush2.msra.mxu0 0.0
    %2552 = vmatprep.subr.mxu0 0.0
    %2553 = vmatpush2.msra.mxu0 0.0
    %2554 = vmatprep.subr.mxu0 0.0
    %2555 = vmatpush2.msra.mxu0 0.0
    %2556 = vmatprep.subr.mxu0 0.0
    %2557 = vmatpush2.msra.mxu0 0.0
    %2558 = vmatprep.subr.mxu0 0.0
    %2559 = vmatpush2.msra.mxu0 0.0
    %2560 = vmatprep.subr.mxu0 0.0
    %2561 = vmatpush2.msra.mxu0 0.0
    %2562 = vmatprep.subr.mxu0 0.0
    %2563 = vmatpush2.msra.mxu0 0.0
    %2564 = vmatprep.subr.mxu0 0.0
    %2565 = vmatpush2.msra.mxu0 0.0
    %2566 = vmatprep.subr.mxu0 0.0
    %2567 = vmatpush2.msra.mxu0 0.0
    %2568 = vmatprep.subr.mxu0 0.0
    %2569 = vmatpush2.msra.mxu0 0.0
    %2570 = vmatprep.subr.mxu0 0.0
    %2571 = vmatpush2.msra.mxu0 0.0
    %2572 = vmatprep.subr.mxu0 0.0
    %2573 = vmatpush2.msra.mxu0 0.0
    %2574 = vmatprep.mubr.f32.mxu0 0.0
    %2575 = vmatmul.mubr.f32.gmra.mxu0 %v2508
    %v2576 = vpop.f32.mrf.mxu0
    %v2577 = vadd.f32 %v2505, %v2576
    %v2578 = vpop.f32.mrf.mxu0
    %2579 = vdwg.mxu0
    %v2580 = vtanh.pop %v2577
    %v2581 = vld [vmem:[%s20] sm:$0xff]
    %v2582 = vld [vmem:[%s20 + $0x8] sm:$0xff]
    %v2583 = vld [vmem:[%s20 + $0x10] sm:$0xff]
    %v2584 = vld [vmem:[%s20 + $0x18] sm:$0xff]
    %v2585 = vld [vmem:[%s21] sm:$0x1]
    %v2587 = vlaneseq
    %v2588 = vshrl.u32 %v2587, 7
    %v2589 = vsub.s32 0, %v2588
    %v2590 = vrot.slane %v2585, %v2589
    %v2593 = vsel %vm88, %v2580, 0
    %2595 = vmatprep.subr.mxu0 0.0
    %2596 = vmatpush1.msra.mxu0 0.0
    %2597 = vmatprep.subr.mxu0 0.0
    %2598 = vmatpush1.msra.mxu0 0.0
    %2599 = vmatprep.subr.mxu0 0.0
    %2600 = vmatpush1.msra.mxu0 0.0
    %2601 = vmatprep.subr.mxu0 0.0
    %2602 = vmatpush1.msra.mxu0 0.0
    %2603 = vmatprep.subr.mxu0 0.0
    %2604 = vmatpush1.msra.mxu0 0.0
    %2605 = vmatprep.subr.mxu0 0.0
    %2606 = vmatpush1.msra.mxu0 0.0
    %2607 = vmatprep.subr.mxu0 0.0
    %2608 = vmatpush1.msra.mxu0 0.0
    %2609 = vmatprep.subr.mxu0 0.0
    %2610 = vmatpush1.msra.mxu0 0.0
    %2611 = vmatprep.subr.mxu0 0.0
    %2612 = vmatpush1.msra.mxu0 0.0
    %2613 = vmatprep.subr.mxu0 0.0
    %2614 = vmatpush1.msra.mxu0 0.0
    %2615 = vmatprep.subr.mxu0 0.0
    %2616 = vmatpush1.msra.mxu0 0.0
    %2617 = vmatprep.subr.mxu0 0.0
    %2618 = vmatpush1.msra.mxu0 0.0
    %2619 = vmatprep.subr.mxu0 0.0
    %2620 = vmatpush1.msra.mxu0 %v2584
    %2621 = vmatprep.subr.mxu0 0.0
    %2622 = vmatpush1.msra.mxu0 %v2583
    %2623 = vmatprep.subr.mxu0 0.0
    %2624 = vmatpush1.msra.mxu0 %v2582
    %2625 = vmatprep.subr.mxu0 0.0
    %2626 = vmatpush1.msra.mxu0 %v2581
    %2627 = vmatprep.subr.mxu0 0.0
    %2628 = vmatpush2.msra.mxu0 0.0
    %2629 = vmatprep.subr.mxu0 0.0
    %2630 = vmatpush2.msra.mxu0 0.0
    %2631 = vmatprep.subr.mxu0 0.0
    %2632 = vmatpush2.msra.mxu0 0.0
    %2633 = vmatprep.subr.mxu0 0.0
    %2634 = vmatpush2.msra.mxu0 0.0
    %2635 = vmatprep.subr.mxu0 0.0
    %2636 = vmatpush2.msra.mxu0 0.0
    %2637 = vmatprep.subr.mxu0 0.0
    %2638 = vmatpush2.msra.mxu0 0.0
    %2639 = vmatprep.subr.mxu0 0.0
    %2640 = vmatpush2.msra.mxu0 0.0
    %2641 = vmatprep.subr.mxu0 0.0
    %2642 = vmatpush2.msra.mxu0 0.0
    %2643 = vmatprep.subr.mxu0 0.0
    %2644 = vmatpush2.msra.mxu0 0.0
    %2645 = vmatprep.subr.mxu0 0.0
    %2646 = vmatpush2.msra.mxu0 0.0
    %2647 = vmatprep.subr.mxu0 0.0
    %2648 = vmatpush2.msra.mxu0 0.0
    %2649 = vmatprep.subr.mxu0 0.0
    %2650 = vmatpush2.msra.mxu0 0.0
    %2651 = vmatprep.subr.mxu0 0.0
    %2652 = vmatpush2.msra.mxu0 0.0
    %2653 = vmatprep.subr.mxu0 0.0
    %2654 = vmatpush2.msra.mxu0 0.0
    %2655 = vmatprep.subr.mxu0 0.0
    %2656 = vmatpush2.msra.mxu0 0.0
    %2657 = vmatprep.subr.mxu0 0.0
    %2658 = vmatpush2.msra.mxu0 0.0
    %2659 = vmatprep.mubr.f32.mxu0 0.0
    %2660 = vmatmul.mubr.f32.gmra.mxu0 %v2593
    %v2661 = vpop.f32.mrf.mxu0
    %v2662 = vadd.f32 %v2590, %v2661
    %v2663 = vpop.f32.mrf.mxu0
    %2664 = vdwg.mxu0
    %vm2665 = vcmask 25600
    %2666 = vst.msk [vmem:[#allocation2] sm:$0x3] %vm2665, %v2662
    // Predicated region
    $region90: #{emotion_classifier_forward.1} parent=1 // pred_check
      _
    $region91: #{emotion_classifier_forward.1} parent=1 // pred_check_branch
      %2668 = sbr.rel (0) target = $region93
    $region92: #{emotion_classifier_forward.1} parent=1 // pred_region
      %s2670 = ssub.s32 32, 32
      %2671 = vsyncadd [#allocation3], %s2670
      %s2673 = sshll.u32 [#allocation2], 4
      %s2674 = int_to_ptr.vmem [resolvable:$true] %s2673
      %2676 = dma.vmem_to_hbm [thread:$0]  %s2674, 32, %s22, [#allocation3]
    $region93: #{emotion_classifier_forward.1} parent=1 // pred_fallthru
      _
    // Predicated region
    $region94: #{emotion_classifier_forward.1} parent=1 // pred_check
      _
    $region95: #{emotion_classifier_forward.1} parent=1 // pred_check_branch
      %2678 = sbr.rel (0) target = $region97
    $region96: #{emotion_classifier_forward.1} parent=1 // pred_region
      %2679 = dma.done [#allocation3], 32
    $region97: #{emotion_classifier_forward.1} parent=1 // pred_fallthru
      _
    %2680 = vsyncpa [#allocation3], 1

</llo_original>
